<compile_context>
chip_gen: v6e
topology: v6e:2x2x1
jax: 0.10.0
libtpu: 0.0.40
codegen_flags: <defaults>
</compile_context>

<pallas_src>
import jax
import jax.numpy as jnp
from jax import lax
from jax.experimental import pallas as pl
from jax.experimental.pallas import tpu as pltpu


# ------------------------------ in-kernel helpers ---------------------------

def _leaky_relu(x):
    # slope < 1  =>  max(x, 0.01*x) == LeakyReLU(0.01)
    return jnp.maximum(x, 0.01 * x)


def _stride2_patches_cin1(xq, oh, ow):
    """xq: (Hp, Wq, 2) with xq[h, b, p] = x_pad[h, 2*b + p]  (single channel).

    Returns the 16 taps of the k=4/s=2/p=1 conv as (oh, ow, 1) patches,
    tap order t = i*4 + j, patch[oy, ox, 0] = x_pad[2*oy + i, 2*ox + j].
    Only leading-dim reshapes/indexing plus static sublane/lane slices.
    """
    hp, wq, _ = xq.shape
    x5 = xq.reshape(hp // 2, 2, wq, 2)            # leading-dim split (free)
    pats = []
    for i in range(4):
        qi, ri = divmod(i, 2)
        rows = x5[qi:qi + oh, ri]                 # (oh, wq, 2), leading ops only
        for j in range(4):
            qj, rj = divmod(j, 2)
            pats.append(rows[:, qj:qj + ow, rj:rj + 1])   # (oh, ow, 1)
    return pats


def _stride2_patches(v_even, v_odd, oh, ow):
    """v_even/v_odd: (Hp, Wq, C) holding the even / odd padded columns of the
    padded activation: v_even[h, b, c] = act_pad[h, 2b, c] (odd: 2b+1).

    Returns 16 patches (oh, ow, C), tap order t = i*4 + j,
    patch[oy, ox, c] = act_pad[2*oy + i, 2*ox + j, c].
    """
    hp, wq, c = v_even.shape
    s5 = [p.reshape(hp // 2, 2, wq, c) for p in (v_even, v_odd)]   # leading split
    pats = []
    for i in range(4):
        qi, ri = divmod(i, 2)
        rows = [s[qi:qi + oh, ri] for s in s5]    # 2 x (oh, wq, c), leading ops
        for j in range(4):
            qj, rj = divmod(j, 2)
            pats.append(rows[rj][:, qj:qj + ow, :])       # (oh, ow, c)
    return pats


def _make_kernel(cfg):
    """Build the fused per-image forward-pass kernel body (all shapes static)."""
    n_s2 = cfg["n_s2"]

    def kernel(*refs):
        it = iter(refs)
        x_ref = next(it)                                  # (1, Hp0, Wq0, 2) f32
        w1_ref = next(it)                                 # (16, C1) f32
        b1_ref = next(it)                                 # (1, C1)  f32
        wb = [(next(it), next(it)) for _ in range(n_s2 - 1)]   # (16*Cin, Cout) bf16, (1, Cout)
        wf_ref = next(it)                                 # (9, Cf) f32
        out_ref = next(it)                                # (1, ohf, owf) f32
        scr = [next(it) for _ in range(n_s2)]             # padded acts (Hp, Wp, C) f32

        # ---- zero ONLY the 1-pixel halo of each scratch (interior is rewritten) ----
        for s in scr:
            hp, wp, c = s.shape
            s[0:1, :, :] = jnp.zeros((1, wp, c), jnp.float32)
            s[hp - 1:hp, :, :] = jnp.zeros((1, wp, c), jnp.float32)
            s[:, 0:1, :] = jnp.zeros((hp, 1, c), jnp.float32)
            s[:, wp - 1:wp, :] = jnp.zeros((hp, 1, c), jnp.float32)

        # ---- layer 1: conv(1 -> C1, k=4, s=2, p=1) on the VPU (16 broadcast FMAs) ----
        oh1, ow1, c1 = cfg["l1_oh"], cfg["l1_ow"], cfg["l1_cout"]
        xq = x_ref[0]                                     # (Hp0, Wq0, 2)
        w1 = w1_ref[...]                                  # (16, C1), loaded once
        pats = _stride2_patches_cin1(xq, oh1, ow1)
        acc = jnp.zeros((oh1, ow1, c1), jnp.float32)
        for t in range(16):
            acc = acc + pats[t] * w1[t:t + 1, :].reshape(1, 1, c1)
        act1 = _leaky_relu(acc + b1_ref[...].reshape(1, 1, c1))
        scr[0][pl.ds(1, oh1), pl.ds(1, ow1), :] = act1

        # ---- layers 2..repeat_num: im2col (in-kernel) + bf16 MXU GEMM + LeakyReLU ----
        for l in range(1, n_s2):
            c = cfg["s2"][l]
            oh, ow, cin, cout = c["oh"], c["ow"], c["cin"], c["cout"]
            w_ref, b_ref = wb[l - 1]
            v = scr[l - 1][...]                           # (Hp, Wp, Cin) f32
            hp, wp, _ = v.shape
            # W-phase split (lane dim unchanged), then leading-only tap extraction.
            v4 = v.reshape(hp, wp // 2, 2, cin)
            v_even = v4[:, :, 0, :]                       # (Hp, Wp/2, Cin)
            v_odd = v4[:, :, 1, :]
            pats = _stride2_patches(v_even, v_odd, oh, ow)
            a = jnp.concatenate(pats, axis=-1)            # (oh, ow, 16*Cin)
            a = a.reshape(oh * ow, 16 * cin).astype(jnp.bfloat16)
            acc = jnp.dot(a, w_ref[...], preferred_element_type=jnp.float32)
            acc = _leaky_relu(acc + b_ref[...])           # (oh*ow, Cout) f32
            scr[l][pl.ds(1, oh), pl.ds(1, ow), :] = acc.reshape(oh, ow, cout)

        # ---- final conv(Cf -> 1, k=3, s=1, p=1, no bias): 9 VPU taps + lane reduce ----
        ohf, owf, cf = cfg["f_oh"], cfg["f_ow"], cfg["f_cin"]
        v = scr[n_s2 - 1][...]                            # (ohf+2, owf+2, Cf)
        wf9 = wf_ref[...]                                 # (9, Cf), loaded once
        acc = jnp.zeros((ohf, owf, cf), jnp.float32)
        for i in range(3):
            rows = v[i:i + ohf]                           # (ohf, owf+2, Cf)
            for j in range(3):
                w_t = wf9[3 * i + j:3 * i + j + 1, :].reshape(1, 1, cf)
                acc = acc + rows[:, j:j + owf, :] * w_t
        out_ref[...] = jnp.sum(acc, axis=-1)[None, :, :]  # (1, ohf, owf), lane-dense rows

    return kernel


# ------------------------------ module wrapper ------------------------------

def discriminator_forward(params, x):
    """x: (N, 1, H, W) float32 (NCHW, PyTorch convention)."""
    n, cin0, h, w = x.shape
    assert cin0 == 1
    s2_params = params["s2"]
    wf = params["final_w"]
    r = len(s2_params)
    assert h % (2 ** r) == 0 and w % (2 ** r) == 0

    # -------- host prep: zero-pad + free W-phase reshape (no data inflation) ------
    hp0, wp0 = h + 2, w + 2
    wq0 = wp0 // 2
    xq = jnp.pad(x[:, 0], ((0, 0), (1, 1), (1, 1))).reshape(n, hp0, wq0, 2)

    # -------- weight packing -------------------------------------------------------
    c1 = s2_params[0]["w"].shape[0]
    w1 = s2_params[0]["w"].transpose(2, 3, 1, 0).reshape(16, c1).astype(jnp.float32)
    b1 = s2_params[0]["b"].reshape(1, c1).astype(jnp.float32)

    s2_cfg = [dict(oh=h // 2, ow=w // 2, cin=1, cout=c1)]
    wb_inputs = []
    oh, ow, cin = h // 2, w // 2, c1
    for layer in s2_params[1:]:
        wl, bl = layer["w"], layer["b"]
        cout = wl.shape[0]
        oh, ow = oh // 2, ow // 2
        # (Cout, Cin, 4, 4) -> (4, 4, Cin, Cout) -> (16*Cin, Cout); bf16 for the MXU
        wb_inputs += [wl.transpose(2, 3, 1, 0).reshape(16 * cin, cout).astype(jnp.bfloat16),
                      bl.reshape(1, cout).astype(jnp.float32)]
        s2_cfg.append(dict(oh=oh, ow=ow, cin=cin, cout=cout))
        cin = cout
    cf = wf.shape[1]
    wf_mat = wf[0].transpose(1, 2, 0).reshape(9, cf).astype(jnp.float32)

    cfg = dict(n_s2=r, s2=s2_cfg,
               l1_oh=s2_cfg[0]["oh"], l1_ow=s2_cfg[0]["ow"], l1_cout=c1,
               f_oh=oh, f_ow=ow, f_cin=cf)

    # -------- BlockSpecs: per-image streaming, weights resident (constant index) ---
    def const_spec(shape):
        zeros = (0,) * len(shape)
        return pl.BlockSpec(shape, lambda b: zeros)

    in_specs = [pl.BlockSpec((1, hp0, wq0, 2), lambda b: (b, 0, 0, 0)),
                const_spec(w1.shape), const_spec(b1.shape)]
    for arr in wb_inputs:
        in_specs.append(const_spec(arr.shape))
    in_specs.append(const_spec(wf_mat.shape))

    out_specs = pl.BlockSpec((1, oh, ow), lambda b: (b, 0, 0))
    out_shape = jax.ShapeDtypeStruct((n, oh, ow), jnp.float32)

    scratch = [pltpu.VMEM((c["oh"] + 2, c["ow"] + 2, c["cout"]), jnp.float32)
               for c in s2_cfg]

    # -------- VMEM budget from the (tile-padded) scratch/IO plan, capped for v7x ----
    def padded_bytes(shape, itemsize):
        lead = 1
        for d in shape[:-2]:
            lead *= d
        sub = -(-shape[-2] // 8) * 8
        lane = -(-shape[-1] // 128) * 128
        return lead * sub * lane * itemsize

    est = sum(padded_bytes(s.shape, 4) for s in scratch)
    est += 2 * padded_bytes((1, hp0, wq0, 2), 4) + 2 * padded_bytes((1, oh, ow), 4)
    est += sum(padded_bytes(a.shape, a.dtype.itemsize)
               for a in [w1, b1, *wb_inputs, wf_mat])
    vmem_limit = int(min(60 * 2 ** 20, max(32 * 2 ** 20, 6 * est)))

    kernel = _make_kernel(cfg)
    out = pl.pallas_call(
        kernel,
        out_shape=out_shape,
        grid_spec=pltpu.PrefetchScalarGridSpec(
            num_scalar_prefetch=0,
            grid=(n,),
            in_specs=in_specs,
            out_specs=out_specs,
            scratch_shapes=scratch),
        compiler_params=pltpu.CompilerParams(
            dimension_semantics=("parallel",),
            vmem_limit_bytes=vmem_limit),
    )(xq, w1, b1, *wb_inputs, wf_mat)
    return out.reshape(n, 1, oh, ow)                     # NCHW, no transpose needed


# ------------------------------ parameters ----------------------------------

def init_discriminator_params(key, conv_dim=8, repeat_num=3):
    """Deterministic synthetic parameters (shapes follow the PyTorch module)."""
    s2 = []
    cin, cout = 1, conv_dim
    for _ in range(repeat_num):
        key, kw, kb = jax.random.split(key, 3)
        wl = 0.05 * jax.random.normal(kw, (cout, cin, 4, 4), jnp.float32)
        bl = 0.05 * jax.random.normal(kb, (cout,), jnp.float32)
        s2.append({"w": wl, "b": bl})
        cin, cout = cout, cout * 2
    key, kw = jax.random.split(key)
    wf = 0.05 * jax.random.normal(kw, (1, cin, 3, 3), jnp.float32)
    return {"s2": s2, "final_w": wf}


# -------------------------- pure-JAX reference ------------------------------

def _reference_forward(params, x):
    """Mirrors the kernel's numerics: layer 1 and the final conv in f32 (VPU path),
    deeper stride-2 convs with bf16-rounded inputs + f32 accumulation (MXU path)."""
    s2 = params["s2"]
    h = lax.conv_general_dilated(
        x, s2[0]["w"], (2, 2), [(1, 1), (1, 1)],
        dimension_numbers=("NCHW", "OIHW", "NCHW"),
        precision=lax.Precision.HIGHEST)
    h = h + s2[0]["b"][None, :, None, None]
    h = jnp.maximum(h, 0.01 * h)
    for layer in s2[1:]:
        lhs = h.astype(jnp.bfloat16).astype(jnp.float32)
        rhs = layer["w"].astype(jnp.bfloat16).astype(jnp.float32)
        h = lax.conv_general_dilated(
            lhs, rhs, (2, 2), [(1, 1), (1, 1)],
            dimension_numbers=("NCHW", "OIHW", "NCHW"),
            precision=lax.Precision.HIGHEST)
        h = h + layer["b"][None, :, None, None]
        h = jnp.maximum(h, 0.01 * h)
    h = lax.conv_general_dilated(
        h, params["final_w"], (1, 1), [(1, 1), (1, 1)],
        dimension_numbers=("NCHW", "OIHW", "NCHW"),
        precision=lax.Precision.HIGHEST)
    return h


if __name__ == "__main__":
    key = jax.random.PRNGKey(0)
    key, kx = jax.random.split(key)

    # batch=2, 1 input channel, 16x16 image, conv_dim=8, repeat_num=3
    x = jax.random.normal(kx, (2, 1, 16, 16), jnp.float32)
    params = init_discriminator_params(key, conv_dim=8, repeat_num=3)

    fwd = jax.jit(discriminator_forward)
    out = jax.block_until_ready(fwd(params, x))
    ref = jax.block_until_ready(_reference_forward(params, x))

    assert out.shape == ref.shape == (2, 1, 2, 2), out.shape
    max_err = float(jnp.max(jnp.abs(out - ref)))
    assert max_err < 2e-4, f"mismatch vs reference, max abs diff = {max_err}"

    print("KERNEL_OK")
</pallas_src>

<mosaic_0001>
module attributes {stable_mosaic.version = 11 : i64} {
  func.func @kernel(%arg0: i32, %arg1: memref<1x18x9x2xf32, #tpu.memory_space<vmem>>, %arg2: memref<16x8xf32, #tpu.memory_space<vmem>>, %arg3: memref<1x8xf32, #tpu.memory_space<vmem>>, %arg4: memref<128x16xbf16, #tpu.memory_space<vmem>>, %arg5: memref<1x16xf32, #tpu.memory_space<vmem>>, %arg6: memref<256x32xbf16, #tpu.memory_space<vmem>>, %arg7: memref<1x32xf32, #tpu.memory_space<vmem>>, %arg8: memref<9x32xf32, #tpu.memory_space<vmem>>, %arg9: memref<1x2x2xf32, #tpu.memory_space<vmem>>, %arg10: memref<10x10x8xf32, #tpu.memory_space<vmem>>, %arg11: memref<6x6x16xf32, #tpu.memory_space<vmem>>, %arg12: memref<4x4x32xf32, #tpu.memory_space<vmem>>) attributes {dimension_semantics = [#tpu.dimension_semantics<parallel>], iteration_bounds = array<i64: 2>, scalar_prefetch = 0 : i64, scratch_operands = 3 : i64, tpu.core_type = #tpu.core_type<tc>, window_params = [{transform_indices = @transform_0, window_bounds = array<i64: 1, 18, 9, 2>}, {pipeline_mode = #tpu.pipeline_mode<synchronous>, transform_indices = @transform_1, window_bounds = array<i64: 16, 8>}, {pipeline_mode = #tpu.pipeline_mode<synchronous>, transform_indices = @transform_2, window_bounds = array<i64: 1, 8>}, {pipeline_mode = #tpu.pipeline_mode<synchronous>, transform_indices = @transform_3, window_bounds = array<i64: 128, 16>}, {pipeline_mode = #tpu.pipeline_mode<synchronous>, transform_indices = @transform_4, window_bounds = array<i64: 1, 16>}, {pipeline_mode = #tpu.pipeline_mode<synchronous>, transform_indices = @transform_5, window_bounds = array<i64: 256, 32>}, {pipeline_mode = #tpu.pipeline_mode<synchronous>, transform_indices = @transform_6, window_bounds = array<i64: 1, 32>}, {pipeline_mode = #tpu.pipeline_mode<synchronous>, transform_indices = @transform_7, window_bounds = array<i64: 9, 32>}, {transform_indices = @transform_8, window_bounds = array<i64: 1, 2, 2>}]} {
    %cst = arith.constant 0.000000e+00 : f32
    %0 = vector.broadcast %cst : f32 to vector<1x10x8xf32>
    %c0 = arith.constant 0 : index
    %c0_0 = arith.constant 0 : index
    %c0_1 = arith.constant 0 : index
    %1 = vector.load %arg10[%c0, %c0_0, %c0_1] : memref<10x10x8xf32, #tpu.memory_space<vmem>>, vector<1x10x8xf32>
    tpu.vector_store %arg10[%c0, %c0_0, %c0_1], %0 {strides = array<i32>} : memref<10x10x8xf32, #tpu.memory_space<vmem>>, vector<1x10x8xf32>,
    %cst_2 = arith.constant 0.000000e+00 : f32
    %2 = vector.broadcast %cst_2 : f32 to vector<1x10x8xf32>
    %c9 = arith.constant 9 : index
    %c0_3 = arith.constant 0 : index
    %c0_4 = arith.constant 0 : index
    %3 = vector.load %arg10[%c9, %c0_3, %c0_4] : memref<10x10x8xf32, #tpu.memory_space<vmem>>, vector<1x10x8xf32>
    tpu.vector_store %arg10[%c9, %c0_3, %c0_4], %2 {strides = array<i32>} : memref<10x10x8xf32, #tpu.memory_space<vmem>>, vector<1x10x8xf32>,
    %cst_5 = arith.constant 0.000000e+00 : f32
    %4 = vector.broadcast %cst_5 : f32 to vector<10x1x8xf32>
    %c0_6 = arith.constant 0 : index
    %c0_7 = arith.constant 0 : index
    %c0_8 = arith.constant 0 : index
    %5 = vector.load %arg10[%c0_6, %c0_7, %c0_8] : memref<10x10x8xf32, #tpu.memory_space<vmem>>, vector<10x1x8xf32>
    tpu.vector_store %arg10[%c0_6, %c0_7, %c0_8], %4 {strides = array<i32>} : memref<10x10x8xf32, #tpu.memory_space<vmem>>, vector<10x1x8xf32>,
    %cst_9 = arith.constant 0.000000e+00 : f32
    %6 = vector.broadcast %cst_9 : f32 to vector<10x1x8xf32>
    %c0_10 = arith.constant 0 : index
    %c9_11 = arith.constant 9 : index
    %c0_12 = arith.constant 0 : index
    %7 = vector.load %arg10[%c0_10, %c9_11, %c0_12] : memref<10x10x8xf32, #tpu.memory_space<vmem>>, vector<10x1x8xf32>
    tpu.vector_store %arg10[%c0_10, %c9_11, %c0_12], %6 {strides = array<i32>} : memref<10x10x8xf32, #tpu.memory_space<vmem>>, vector<10x1x8xf32>,
    %cst_13 = arith.constant 0.000000e+00 : f32
    %8 = vector.broadcast %cst_13 : f32 to vector<1x6x16xf32>
    %c0_14 = arith.constant 0 : index
    %c0_15 = arith.constant 0 : index
    %c0_16 = arith.constant 0 : index
    %9 = vector.load %arg11[%c0_14, %c0_15, %c0_16] : memref<6x6x16xf32, #tpu.memory_space<vmem>>, vector<1x6x16xf32>
    tpu.vector_store %arg11[%c0_14, %c0_15, %c0_16], %8 {strides = array<i32>} : memref<6x6x16xf32, #tpu.memory_space<vmem>>, vector<1x6x16xf32>,
    %cst_17 = arith.constant 0.000000e+00 : f32
    %10 = vector.broadcast %cst_17 : f32 to vector<1x6x16xf32>
    %c5 = arith.constant 5 : index
    %c0_18 = arith.constant 0 : index
    %c0_19 = arith.constant 0 : index
    %11 = vector.load %arg11[%c5, %c0_18, %c0_19] : memref<6x6x16xf32, #tpu.memory_space<vmem>>, vector<1x6x16xf32>
    tpu.vector_store %arg11[%c5, %c0_18, %c0_19], %10 {strides = array<i32>} : memref<6x6x16xf32, #tpu.memory_space<vmem>>, vector<1x6x16xf32>,
    %cst_20 = arith.constant 0.000000e+00 : f32
    %12 = vector.broadcast %cst_20 : f32 to vector<6x1x16xf32>
    %c0_21 = arith.constant 0 : index
    %c0_22 = arith.constant 0 : index
    %c0_23 = arith.constant 0 : index
    %13 = vector.load %arg11[%c0_21, %c0_22, %c0_23] : memref<6x6x16xf32, #tpu.memory_space<vmem>>, vector<6x1x16xf32>
    tpu.vector_store %arg11[%c0_21, %c0_22, %c0_23], %12 {strides = array<i32>} : memref<6x6x16xf32, #tpu.memory_space<vmem>>, vector<6x1x16xf32>,
    %cst_24 = arith.constant 0.000000e+00 : f32
    %14 = vector.broadcast %cst_24 : f32 to vector<6x1x16xf32>
    %c0_25 = arith.constant 0 : index
    %c5_26 = arith.constant 5 : index
    %c0_27 = arith.constant 0 : index
    %15 = vector.load %arg11[%c0_25, %c5_26, %c0_27] : memref<6x6x16xf32, #tpu.memory_space<vmem>>, vector<6x1x16xf32>
    tpu.vector_store %arg11[%c0_25, %c5_26, %c0_27], %14 {strides = array<i32>} : memref<6x6x16xf32, #tpu.memory_space<vmem>>, vector<6x1x16xf32>,
    %cst_28 = arith.constant 0.000000e+00 : f32
    %16 = vector.broadcast %cst_28 : f32 to vector<1x4x32xf32>
    %c0_29 = arith.constant 0 : index
    %c0_30 = arith.constant 0 : index
    %c0_31 = arith.constant 0 : index
    %17 = vector.load %arg12[%c0_29, %c0_30, %c0_31] : memref<4x4x32xf32, #tpu.memory_space<vmem>>, vector<1x4x32xf32>
    tpu.vector_store %arg12[%c0_29, %c0_30, %c0_31], %16 {strides = array<i32>} : memref<4x4x32xf32, #tpu.memory_space<vmem>>, vector<1x4x32xf32>,
    %cst_32 = arith.constant 0.000000e+00 : f32
    %18 = vector.broadcast %cst_32 : f32 to vector<1x4x32xf32>
    %c3 = arith.constant 3 : index
    %c0_33 = arith.constant 0 : index
    %c0_34 = arith.constant 0 : index
    %19 = vector.load %arg12[%c3, %c0_33, %c0_34] : memref<4x4x32xf32, #tpu.memory_space<vmem>>, vector<1x4x32xf32>
    tpu.vector_store %arg12[%c3, %c0_33, %c0_34], %18 {strides = array<i32>} : memref<4x4x32xf32, #tpu.memory_space<vmem>>, vector<1x4x32xf32>,
    %cst_35 = arith.constant 0.000000e+00 : f32
    %20 = vector.broadcast %cst_35 : f32 to vector<4x1x32xf32>
    %c0_36 = arith.constant 0 : index
    %c0_37 = arith.constant 0 : index
    %c0_38 = arith.constant 0 : index
    %21 = vector.load %arg12[%c0_36, %c0_37, %c0_38] : memref<4x4x32xf32, #tpu.memory_space<vmem>>, vector<4x1x32xf32>
    tpu.vector_store %arg12[%c0_36, %c0_37, %c0_38], %20 {strides = array<i32>} : memref<4x4x32xf32, #tpu.memory_space<vmem>>, vector<4x1x32xf32>,
    %cst_39 = arith.constant 0.000000e+00 : f32
    %22 = vector.broadcast %cst_39 : f32 to vector<4x1x32xf32>
    %c0_40 = arith.constant 0 : index
    %c3_41 = arith.constant 3 : index
    %c0_42 = arith.constant 0 : index
    %23 = vector.load %arg12[%c0_40, %c3_41, %c0_42] : memref<4x4x32xf32, #tpu.memory_space<vmem>>, vector<4x1x32xf32>
    tpu.vector_store %arg12[%c0_40, %c3_41, %c0_42], %22 {strides = array<i32>} : memref<4x4x32xf32, #tpu.memory_space<vmem>>, vector<4x1x32xf32>,
    %c0_43 = arith.constant 0 : index
    %c0_44 = arith.constant 0 : index
    %c0_45 = arith.constant 0 : index
    %c0_46 = arith.constant 0 : index
    %24 = vector.load %arg1[%c0_43, %c0_44, %c0_45, %c0_46] : memref<1x18x9x2xf32, #tpu.memory_space<vmem>>, vector<1x18x9x2xf32>
    %25 = vector.shape_cast %24 : vector<1x18x9x2xf32> to vector<18x9x2xf32>
    %c0_47 = arith.constant 0 : index
    %c0_48 = arith.constant 0 : index
    %26 = vector.load %arg2[%c0_47, %c0_48] : memref<16x8xf32, #tpu.memory_space<vmem>>, vector<16x8xf32>
    %27 = vector.shape_cast %25 : vector<18x9x2xf32> to vector<9x2x9x2xf32>
    %28 = vector.extract_strided_slice %27 {offsets = [0, 0, 0, 0], sizes = [8, 1, 9, 2], strides = [1, 1, 1, 1]} : vector<9x2x9x2xf32> to vector<8x1x9x2xf32>
    %29 = vector.shape_cast %28 : vector<8x1x9x2xf32> to vector<8x9x2xf32>
    %30 = vector.extract_strided_slice %29 {offsets = [0, 0, 0], sizes = [8, 8, 1], strides = [1, 1, 1]} : vector<8x9x2xf32> to vector<8x8x1xf32>
    %31 = vector.extract_strided_slice %29 {offsets = [0, 0, 1], sizes = [8, 8, 1], strides = [1, 1, 1]} : vector<8x9x2xf32> to vector<8x8x1xf32>
    %32 = vector.extract_strided_slice %29 {offsets = [0, 1, 0], sizes = [8, 8, 1], strides = [1, 1, 1]} : vector<8x9x2xf32> to vector<8x8x1xf32>
    %33 = vector.extract_strided_slice %29 {offsets = [0, 1, 1], sizes = [8, 8, 1], strides = [1, 1, 1]} : vector<8x9x2xf32> to vector<8x8x1xf32>
    %34 = vector.extract_strided_slice %27 {offsets = [0, 1, 0, 0], sizes = [8, 1, 9, 2], strides = [1, 1, 1, 1]} : vector<9x2x9x2xf32> to vector<8x1x9x2xf32>
    %35 = vector.shape_cast %34 : vector<8x1x9x2xf32> to vector<8x9x2xf32>
    %36 = vector.extract_strided_slice %35 {offsets = [0, 0, 0], sizes = [8, 8, 1], strides = [1, 1, 1]} : vector<8x9x2xf32> to vector<8x8x1xf32>
    %37 = vector.extract_strided_slice %35 {offsets = [0, 0, 1], sizes = [8, 8, 1], strides = [1, 1, 1]} : vector<8x9x2xf32> to vector<8x8x1xf32>
    %38 = vector.extract_strided_slice %35 {offsets = [0, 1, 0], sizes = [8, 8, 1], strides = [1, 1, 1]} : vector<8x9x2xf32> to vector<8x8x1xf32>
    %39 = vector.extract_strided_slice %35 {offsets = [0, 1, 1], sizes = [8, 8, 1], strides = [1, 1, 1]} : vector<8x9x2xf32> to vector<8x8x1xf32>
    %40 = vector.extract_strided_slice %27 {offsets = [1, 0, 0, 0], sizes = [8, 1, 9, 2], strides = [1, 1, 1, 1]} : vector<9x2x9x2xf32> to vector<8x1x9x2xf32>
    %41 = vector.shape_cast %40 : vector<8x1x9x2xf32> to vector<8x9x2xf32>
    %42 = vector.extract_strided_slice %41 {offsets = [0, 0, 0], sizes = [8, 8, 1], strides = [1, 1, 1]} : vector<8x9x2xf32> to vector<8x8x1xf32>
    %43 = vector.extract_strided_slice %41 {offsets = [0, 0, 1], sizes = [8, 8, 1], strides = [1, 1, 1]} : vector<8x9x2xf32> to vector<8x8x1xf32>
    %44 = vector.extract_strided_slice %41 {offsets = [0, 1, 0], sizes = [8, 8, 1], strides = [1, 1, 1]} : vector<8x9x2xf32> to vector<8x8x1xf32>
    %45 = vector.extract_strided_slice %41 {offsets = [0, 1, 1], sizes = [8, 8, 1], strides = [1, 1, 1]} : vector<8x9x2xf32> to vector<8x8x1xf32>
    %46 = vector.extract_strided_slice %27 {offsets = [1, 1, 0, 0], sizes = [8, 1, 9, 2], strides = [1, 1, 1, 1]} : vector<9x2x9x2xf32> to vector<8x1x9x2xf32>
    %47 = vector.shape_cast %46 : vector<8x1x9x2xf32> to vector<8x9x2xf32>
    %48 = vector.extract_strided_slice %47 {offsets = [0, 0, 0], sizes = [8, 8, 1], strides = [1, 1, 1]} : vector<8x9x2xf32> to vector<8x8x1xf32>
    %49 = vector.extract_strided_slice %47 {offsets = [0, 0, 1], sizes = [8, 8, 1], strides = [1, 1, 1]} : vector<8x9x2xf32> to vector<8x8x1xf32>
    %50 = vector.extract_strided_slice %47 {offsets = [0, 1, 0], sizes = [8, 8, 1], strides = [1, 1, 1]} : vector<8x9x2xf32> to vector<8x8x1xf32>
    %51 = vector.extract_strided_slice %47 {offsets = [0, 1, 1], sizes = [8, 8, 1], strides = [1, 1, 1]} : vector<8x9x2xf32> to vector<8x8x1xf32>
    %cst_49 = arith.constant 0.000000e+00 : f32
    %52 = vector.broadcast %cst_49 : f32 to vector<8x8x8xf32>
    %53 = vector.extract_strided_slice %26 {offsets = [0, 0], sizes = [1, 8], strides = [1, 1]} : vector<16x8xf32> to vector<1x8xf32>
    %54 = vector.shape_cast %53 : vector<1x8xf32> to vector<1x1x8xf32>
    %55 = vector.broadcast %30 : vector<8x8x1xf32> to vector<8x8x8xf32>
    %56 = vector.broadcast %54 : vector<1x1x8xf32> to vector<8x8x8xf32>
    %57 = arith.mulf %55, %56 : vector<8x8x8xf32>
    %58 = arith.addf %52, %57 : vector<8x8x8xf32>
    %59 = vector.extract_strided_slice %26 {offsets = [1, 0], sizes = [1, 8], strides = [1, 1]} : vector<16x8xf32> to vector<1x8xf32>
    %60 = vector.shape_cast %59 : vector<1x8xf32> to vector<1x1x8xf32>
    %61 = vector.broadcast %31 : vector<8x8x1xf32> to vector<8x8x8xf32>
    %62 = vector.broadcast %60 : vector<1x1x8xf32> to vector<8x8x8xf32>
    %63 = arith.mulf %61, %62 : vector<8x8x8xf32>
    %64 = arith.addf %58, %63 : vector<8x8x8xf32>
    %65 = vector.extract_strided_slice %26 {offsets = [2, 0], sizes = [1, 8], strides = [1, 1]} : vector<16x8xf32> to vector<1x8xf32>
    %66 = vector.shape_cast %65 : vector<1x8xf32> to vector<1x1x8xf32>
    %67 = vector.broadcast %32 : vector<8x8x1xf32> to vector<8x8x8xf32>
    %68 = vector.broadcast %66 : vector<1x1x8xf32> to vector<8x8x8xf32>
    %69 = arith.mulf %67, %68 : vector<8x8x8xf32>
    %70 = arith.addf %64, %69 : vector<8x8x8xf32>
    %71 = vector.extract_strided_slice %26 {offsets = [3, 0], sizes = [1, 8], strides = [1, 1]} : vector<16x8xf32> to vector<1x8xf32>
    %72 = vector.shape_cast %71 : vector<1x8xf32> to vector<1x1x8xf32>
    %73 = vector.broadcast %33 : vector<8x8x1xf32> to vector<8x8x8xf32>
    %74 = vector.broadcast %72 : vector<1x1x8xf32> to vector<8x8x8xf32>
    %75 = arith.mulf %73, %74 : vector<8x8x8xf32>
    %76 = arith.addf %70, %75 : vector<8x8x8xf32>
    %77 = vector.extract_strided_slice %26 {offsets = [4, 0], sizes = [1, 8], strides = [1, 1]} : vector<16x8xf32> to vector<1x8xf32>
    %78 = vector.shape_cast %77 : vector<1x8xf32> to vector<1x1x8xf32>
    %79 = vector.broadcast %36 : vector<8x8x1xf32> to vector<8x8x8xf32>
    %80 = vector.broadcast %78 : vector<1x1x8xf32> to vector<8x8x8xf32>
    %81 = arith.mulf %79, %80 : vector<8x8x8xf32>
    %82 = arith.addf %76, %81 : vector<8x8x8xf32>
    %83 = vector.extract_strided_slice %26 {offsets = [5, 0], sizes = [1, 8], strides = [1, 1]} : vector<16x8xf32> to vector<1x8xf32>
    %84 = vector.shape_cast %83 : vector<1x8xf32> to vector<1x1x8xf32>
    %85 = vector.broadcast %37 : vector<8x8x1xf32> to vector<8x8x8xf32>
    %86 = vector.broadcast %84 : vector<1x1x8xf32> to vector<8x8x8xf32>
    %87 = arith.mulf %85, %86 : vector<8x8x8xf32>
    %88 = arith.addf %82, %87 : vector<8x8x8xf32>
    %89 = vector.extract_strided_slice %26 {offsets = [6, 0], sizes = [1, 8], strides = [1, 1]} : vector<16x8xf32> to vector<1x8xf32>
    %90 = vector.shape_cast %89 : vector<1x8xf32> to vector<1x1x8xf32>
    %91 = vector.broadcast %38 : vector<8x8x1xf32> to vector<8x8x8xf32>
    %92 = vector.broadcast %90 : vector<1x1x8xf32> to vector<8x8x8xf32>
    %93 = arith.mulf %91, %92 : vector<8x8x8xf32>
    %94 = arith.addf %88, %93 : vector<8x8x8xf32>
    %95 = vector.extract_strided_slice %26 {offsets = [7, 0], sizes = [1, 8], strides = [1, 1]} : vector<16x8xf32> to vector<1x8xf32>
    %96 = vector.shape_cast %95 : vector<1x8xf32> to vector<1x1x8xf32>
    %97 = vector.broadcast %39 : vector<8x8x1xf32> to vector<8x8x8xf32>
    %98 = vector.broadcast %96 : vector<1x1x8xf32> to vector<8x8x8xf32>
    %99 = arith.mulf %97, %98 : vector<8x8x8xf32>
    %100 = arith.addf %94, %99 : vector<8x8x8xf32>
    %101 = vector.extract_strided_slice %26 {offsets = [8, 0], sizes = [1, 8], strides = [1, 1]} : vector<16x8xf32> to vector<1x8xf32>
    %102 = vector.shape_cast %101 : vector<1x8xf32> to vector<1x1x8xf32>
    %103 = vector.broadcast %42 : vector<8x8x1xf32> to vector<8x8x8xf32>
    %104 = vector.broadcast %102 : vector<1x1x8xf32> to vector<8x8x8xf32>
    %105 = arith.mulf %103, %104 : vector<8x8x8xf32>
    %106 = arith.addf %100, %105 : vector<8x8x8xf32>
    %107 = vector.extract_strided_slice %26 {offsets = [9, 0], sizes = [1, 8], strides = [1, 1]} : vector<16x8xf32> to vector<1x8xf32>
    %108 = vector.shape_cast %107 : vector<1x8xf32> to vector<1x1x8xf32>
    %109 = vector.broadcast %43 : vector<8x8x1xf32> to vector<8x8x8xf32>
    %110 = vector.broadcast %108 : vector<1x1x8xf32> to vector<8x8x8xf32>
    %111 = arith.mulf %109, %110 : vector<8x8x8xf32>
    %112 = arith.addf %106, %111 : vector<8x8x8xf32>
    %113 = vector.extract_strided_slice %26 {offsets = [10, 0], sizes = [1, 8], strides = [1, 1]} : vector<16x8xf32> to vector<1x8xf32>
    %114 = vector.shape_cast %113 : vector<1x8xf32> to vector<1x1x8xf32>
    %115 = vector.broadcast %44 : vector<8x8x1xf32> to vector<8x8x8xf32>
    %116 = vector.broadcast %114 : vector<1x1x8xf32> to vector<8x8x8xf32>
    %117 = arith.mulf %115, %116 : vector<8x8x8xf32>
    %118 = arith.addf %112, %117 : vector<8x8x8xf32>
    %119 = vector.extract_strided_slice %26 {offsets = [11, 0], sizes = [1, 8], strides = [1, 1]} : vector<16x8xf32> to vector<1x8xf32>
    %120 = vector.shape_cast %119 : vector<1x8xf32> to vector<1x1x8xf32>
    %121 = vector.broadcast %45 : vector<8x8x1xf32> to vector<8x8x8xf32>
    %122 = vector.broadcast %120 : vector<1x1x8xf32> to vector<8x8x8xf32>
    %123 = arith.mulf %121, %122 : vector<8x8x8xf32>
    %124 = arith.addf %118, %123 : vector<8x8x8xf32>
    %125 = vector.extract_strided_slice %26 {offsets = [12, 0], sizes = [1, 8], strides = [1, 1]} : vector<16x8xf32> to vector<1x8xf32>
    %126 = vector.shape_cast %125 : vector<1x8xf32> to vector<1x1x8xf32>
    %127 = vector.broadcast %48 : vector<8x8x1xf32> to vector<8x8x8xf32>
    %128 = vector.broadcast %126 : vector<1x1x8xf32> to vector<8x8x8xf32>
    %129 = arith.mulf %127, %128 : vector<8x8x8xf32>
    %130 = arith.addf %124, %129 : vector<8x8x8xf32>
    %131 = vector.extract_strided_slice %26 {offsets = [13, 0], sizes = [1, 8], strides = [1, 1]} : vector<16x8xf32> to vector<1x8xf32>
    %132 = vector.shape_cast %131 : vector<1x8xf32> to vector<1x1x8xf32>
    %133 = vector.broadcast %49 : vector<8x8x1xf32> to vector<8x8x8xf32>
    %134 = vector.broadcast %132 : vector<1x1x8xf32> to vector<8x8x8xf32>
    %135 = arith.mulf %133, %134 : vector<8x8x8xf32>
    %136 = arith.addf %130, %135 : vector<8x8x8xf32>
    %137 = vector.extract_strided_slice %26 {offsets = [14, 0], sizes = [1, 8], strides = [1, 1]} : vector<16x8xf32> to vector<1x8xf32>
    %138 = vector.shape_cast %137 : vector<1x8xf32> to vector<1x1x8xf32>
    %139 = vector.broadcast %50 : vector<8x8x1xf32> to vector<8x8x8xf32>
    %140 = vector.broadcast %138 : vector<1x1x8xf32> to vector<8x8x8xf32>
    %141 = arith.mulf %139, %140 : vector<8x8x8xf32>
    %142 = arith.addf %136, %141 : vector<8x8x8xf32>
    %143 = vector.extract_strided_slice %26 {offsets = [15, 0], sizes = [1, 8], strides = [1, 1]} : vector<16x8xf32> to vector<1x8xf32>
    %144 = vector.shape_cast %143 : vector<1x8xf32> to vector<1x1x8xf32>
    %145 = vector.broadcast %51 : vector<8x8x1xf32> to vector<8x8x8xf32>
    %146 = vector.broadcast %144 : vector<1x1x8xf32> to vector<8x8x8xf32>
    %147 = arith.mulf %145, %146 : vector<8x8x8xf32>
    %148 = arith.addf %142, %147 : vector<8x8x8xf32>
    %c0_50 = arith.constant 0 : index
    %c0_51 = arith.constant 0 : index
    %149 = vector.load %arg3[%c0_50, %c0_51] : memref<1x8xf32, #tpu.memory_space<vmem>>, vector<1x8xf32>
    %150 = vector.shape_cast %149 : vector<1x8xf32> to vector<1x1x8xf32>
    %151 = vector.broadcast %150 : vector<1x1x8xf32> to vector<8x8x8xf32>
    %152 = arith.addf %148, %151 : vector<8x8x8xf32>
    %cst_52 = arith.constant 0.00999999977 : f32
    %153 = vector.broadcast %cst_52 : f32 to vector<8x8x8xf32>
    %154 = arith.mulf %153, %152 : vector<8x8x8xf32>
    %155 = arith.maximumf %152, %154 : vector<8x8x8xf32>
    %c1 = arith.constant 1 : index
    %c1_53 = arith.constant 1 : index
    %c0_54 = arith.constant 0 : index
    %156 = vector.load %arg10[%c1, %c1_53, %c0_54] : memref<10x10x8xf32, #tpu.memory_space<vmem>>, vector<8x8x8xf32>
    tpu.vector_store %arg10[%c1, %c1_53, %c0_54], %155 {strides = array<i32>} : memref<10x10x8xf32, #tpu.memory_space<vmem>>, vector<8x8x8xf32>,
    %c0_55 = arith.constant 0 : index
    %c0_56 = arith.constant 0 : index
    %c0_57 = arith.constant 0 : index
    %157 = vector.load %arg10[%c0_55, %c0_56, %c0_57] : memref<10x10x8xf32, #tpu.memory_space<vmem>>, vector<10x10x8xf32>
    %158 = vector.shape_cast %157 : vector<10x10x8xf32> to vector<10x5x2x8xf32>
    %159 = vector.extract_strided_slice %158 {offsets = [0, 0, 0, 0], sizes = [10, 5, 1, 8], strides = [1, 1, 1, 1]} : vector<10x5x2x8xf32> to vector<10x5x1x8xf32>
    %160 = vector.shape_cast %159 : vector<10x5x1x8xf32> to vector<10x5x8xf32>
    %161 = vector.extract_strided_slice %158 {offsets = [0, 0, 1, 0], sizes = [10, 5, 1, 8], strides = [1, 1, 1, 1]} : vector<10x5x2x8xf32> to vector<10x5x1x8xf32>
    %162 = vector.shape_cast %161 : vector<10x5x1x8xf32> to vector<10x5x8xf32>
    %163 = vector.shape_cast %160 : vector<10x5x8xf32> to vector<5x2x5x8xf32>
    %164 = vector.shape_cast %162 : vector<10x5x8xf32> to vector<5x2x5x8xf32>
    %165 = vector.extract_strided_slice %163 {offsets = [0, 0, 0, 0], sizes = [4, 1, 5, 8], strides = [1, 1, 1, 1]} : vector<5x2x5x8xf32> to vector<4x1x5x8xf32>
    %166 = vector.shape_cast %165 : vector<4x1x5x8xf32> to vector<4x5x8xf32>
    %167 = vector.extract_strided_slice %164 {offsets = [0, 0, 0, 0], sizes = [4, 1, 5, 8], strides = [1, 1, 1, 1]} : vector<5x2x5x8xf32> to vector<4x1x5x8xf32>
    %168 = vector.shape_cast %167 : vector<4x1x5x8xf32> to vector<4x5x8xf32>
    %169 = vector.extract_strided_slice %166 {offsets = [0, 0, 0], sizes = [4, 4, 8], strides = [1, 1, 1]} : vector<4x5x8xf32> to vector<4x4x8xf32>
    %170 = vector.extract_strided_slice %168 {offsets = [0, 0, 0], sizes = [4, 4, 8], strides = [1, 1, 1]} : vector<4x5x8xf32> to vector<4x4x8xf32>
    %171 = vector.extract_strided_slice %166 {offsets = [0, 1, 0], sizes = [4, 4, 8], strides = [1, 1, 1]} : vector<4x5x8xf32> to vector<4x4x8xf32>
    %172 = vector.extract_strided_slice %168 {offsets = [0, 1, 0], sizes = [4, 4, 8], strides = [1, 1, 1]} : vector<4x5x8xf32> to vector<4x4x8xf32>
    %173 = vector.extract_strided_slice %163 {offsets = [0, 1, 0, 0], sizes = [4, 1, 5, 8], strides = [1, 1, 1, 1]} : vector<5x2x5x8xf32> to vector<4x1x5x8xf32>
    %174 = vector.shape_cast %173 : vector<4x1x5x8xf32> to vector<4x5x8xf32>
    %175 = vector.extract_strided_slice %164 {offsets = [0, 1, 0, 0], sizes = [4, 1, 5, 8], strides = [1, 1, 1, 1]} : vector<5x2x5x8xf32> to vector<4x1x5x8xf32>
    %176 = vector.shape_cast %175 : vector<4x1x5x8xf32> to vector<4x5x8xf32>
    %177 = vector.extract_strided_slice %174 {offsets = [0, 0, 0], sizes = [4, 4, 8], strides = [1, 1, 1]} : vector<4x5x8xf32> to vector<4x4x8xf32>
    %178 = vector.extract_strided_slice %176 {offsets = [0, 0, 0], sizes = [4, 4, 8], strides = [1, 1, 1]} : vector<4x5x8xf32> to vector<4x4x8xf32>
    %179 = vector.extract_strided_slice %174 {offsets = [0, 1, 0], sizes = [4, 4, 8], strides = [1, 1, 1]} : vector<4x5x8xf32> to vector<4x4x8xf32>
    %180 = vector.extract_strided_slice %176 {offsets = [0, 1, 0], sizes = [4, 4, 8], strides = [1, 1, 1]} : vector<4x5x8xf32> to vector<4x4x8xf32>
    %181 = vector.extract_strided_slice %163 {offsets = [1, 0, 0, 0], sizes = [4, 1, 5, 8], strides = [1, 1, 1, 1]} : vector<5x2x5x8xf32> to vector<4x1x5x8xf32>
    %182 = vector.shape_cast %181 : vector<4x1x5x8xf32> to vector<4x5x8xf32>
    %183 = vector.extract_strided_slice %164 {offsets = [1, 0, 0, 0], sizes = [4, 1, 5, 8], strides = [1, 1, 1, 1]} : vector<5x2x5x8xf32> to vector<4x1x5x8xf32>
    %184 = vector.shape_cast %183 : vector<4x1x5x8xf32> to vector<4x5x8xf32>
    %185 = vector.extract_strided_slice %182 {offsets = [0, 0, 0], sizes = [4, 4, 8], strides = [1, 1, 1]} : vector<4x5x8xf32> to vector<4x4x8xf32>
    %186 = vector.extract_strided_slice %184 {offsets = [0, 0, 0], sizes = [4, 4, 8], strides = [1, 1, 1]} : vector<4x5x8xf32> to vector<4x4x8xf32>
    %187 = vector.extract_strided_slice %182 {offsets = [0, 1, 0], sizes = [4, 4, 8], strides = [1, 1, 1]} : vector<4x5x8xf32> to vector<4x4x8xf32>
    %188 = vector.extract_strided_slice %184 {offsets = [0, 1, 0], sizes = [4, 4, 8], strides = [1, 1, 1]} : vector<4x5x8xf32> to vector<4x4x8xf32>
    %189 = vector.extract_strided_slice %163 {offsets = [1, 1, 0, 0], sizes = [4, 1, 5, 8], strides = [1, 1, 1, 1]} : vector<5x2x5x8xf32> to vector<4x1x5x8xf32>
    %190 = vector.shape_cast %189 : vector<4x1x5x8xf32> to vector<4x5x8xf32>
    %191 = vector.extract_strided_slice %164 {offsets = [1, 1, 0, 0], sizes = [4, 1, 5, 8], strides = [1, 1, 1, 1]} : vector<5x2x5x8xf32> to vector<4x1x5x8xf32>
    %192 = vector.shape_cast %191 : vector<4x1x5x8xf32> to vector<4x5x8xf32>
    %193 = vector.extract_strided_slice %190 {offsets = [0, 0, 0], sizes = [4, 4, 8], strides = [1, 1, 1]} : vector<4x5x8xf32> to vector<4x4x8xf32>
    %194 = vector.extract_strided_slice %192 {offsets = [0, 0, 0], sizes = [4, 4, 8], strides = [1, 1, 1]} : vector<4x5x8xf32> to vector<4x4x8xf32>
    %195 = vector.extract_strided_slice %190 {offsets = [0, 1, 0], sizes = [4, 4, 8], strides = [1, 1, 1]} : vector<4x5x8xf32> to vector<4x4x8xf32>
    %196 = vector.extract_strided_slice %192 {offsets = [0, 1, 0], sizes = [4, 4, 8], strides = [1, 1, 1]} : vector<4x5x8xf32> to vector<4x4x8xf32>
    %197 = tpu.concatenate %169, %170, %171, %172, %177, %178, %179, %180, %185, %186, %187, %188, %193, %194, %195, %196 in 2 : vector<4x4x8xf32>, vector<4x4x8xf32>, vector<4x4x8xf32>, vector<4x4x8xf32>, vector<4x4x8xf32>, vector<4x4x8xf32>, vector<4x4x8xf32>, vector<4x4x8xf32>, vector<4x4x8xf32>, vector<4x4x8xf32>, vector<4x4x8xf32>, vector<4x4x8xf32>, vector<4x4x8xf32>, vector<4x4x8xf32>, vector<4x4x8xf32>, vector<4x4x8xf32> -> vector<4x4x128xf32>
    %198 = vector.shape_cast %197 : vector<4x4x128xf32> to vector<16x128xf32>
    %199 = arith.truncf %198 : vector<16x128xf32> to vector<16x128xbf16>
    %c0_58 = arith.constant 0 : index
    %c0_59 = arith.constant 0 : index
    %200 = vector.load %arg4[%c0_58, %c0_59] : memref<128x16xbf16, #tpu.memory_space<vmem>>, vector<128x16xbf16>
    %cst_60 = arith.constant dense<0.000000e+00> : vector<16x16xf32>
    %201 = tpu.matmul %199, %200, %cst_60 {dimension_numbers = #tpu.dot_dimension_numbers<[1], [0], [0], [1], [0, 0, 1, 1], [], []>} : vector<16x128xbf16>, vector<128x16xbf16>, vector<16x16xf32> -> vector<16x16xf32>
    %c0_61 = arith.constant 0 : index
    %c0_62 = arith.constant 0 : index
    %202 = vector.load %arg5[%c0_61, %c0_62] : memref<1x16xf32, #tpu.memory_space<vmem>>, vector<1x16xf32>
    %203 = vector.broadcast %202 : vector<1x16xf32> to vector<16x16xf32>
    %204 = arith.addf %201, %203 : vector<16x16xf32>
    %cst_63 = arith.constant 0.00999999977 : f32
    %205 = vector.broadcast %cst_63 : f32 to vector<16x16xf32>
    %206 = arith.mulf %205, %204 : vector<16x16xf32>
    %207 = arith.maximumf %204, %206 : vector<16x16xf32>
    %208 = vector.shape_cast %207 : vector<16x16xf32> to vector<4x4x16xf32>
    %c1_64 = arith.constant 1 : index
    %c1_65 = arith.constant 1 : index
    %c0_66 = arith.constant 0 : index
    %209 = vector.load %arg11[%c1_64, %c1_65, %c0_66] : memref<6x6x16xf32, #tpu.memory_space<vmem>>, vector<4x4x16xf32>
    tpu.vector_store %arg11[%c1_64, %c1_65, %c0_66], %208 {strides = array<i32>} : memref<6x6x16xf32, #tpu.memory_space<vmem>>, vector<4x4x16xf32>,
    %c0_67 = arith.constant 0 : index
    %c0_68 = arith.constant 0 : index
    %c0_69 = arith.constant 0 : index
    %210 = vector.load %arg11[%c0_67, %c0_68, %c0_69] : memref<6x6x16xf32, #tpu.memory_space<vmem>>, vector<6x6x16xf32>
    %211 = vector.shape_cast %210 : vector<6x6x16xf32> to vector<6x3x2x16xf32>
    %212 = vector.extract_strided_slice %211 {offsets = [0, 0, 0, 0], sizes = [6, 3, 1, 16], strides = [1, 1, 1, 1]} : vector<6x3x2x16xf32> to vector<6x3x1x16xf32>
    %213 = vector.shape_cast %212 : vector<6x3x1x16xf32> to vector<6x3x16xf32>
    %214 = vector.extract_strided_slice %211 {offsets = [0, 0, 1, 0], sizes = [6, 3, 1, 16], strides = [1, 1, 1, 1]} : vector<6x3x2x16xf32> to vector<6x3x1x16xf32>
    %215 = vector.shape_cast %214 : vector<6x3x1x16xf32> to vector<6x3x16xf32>
    %216 = vector.shape_cast %213 : vector<6x3x16xf32> to vector<3x2x3x16xf32>
    %217 = vector.shape_cast %215 : vector<6x3x16xf32> to vector<3x2x3x16xf32>
    %218 = vector.extract_strided_slice %216 {offsets = [0, 0, 0, 0], sizes = [2, 1, 3, 16], strides = [1, 1, 1, 1]} : vector<3x2x3x16xf32> to vector<2x1x3x16xf32>
    %219 = vector.shape_cast %218 : vector<2x1x3x16xf32> to vector<2x3x16xf32>
    %220 = vector.extract_strided_slice %217 {offsets = [0, 0, 0, 0], sizes = [2, 1, 3, 16], strides = [1, 1, 1, 1]} : vector<3x2x3x16xf32> to vector<2x1x3x16xf32>
    %221 = vector.shape_cast %220 : vector<2x1x3x16xf32> to vector<2x3x16xf32>
    %222 = vector.extract_strided_slice %219 {offsets = [0, 0, 0], sizes = [2, 2, 16], strides = [1, 1, 1]} : vector<2x3x16xf32> to vector<2x2x16xf32>
    %223 = vector.extract_strided_slice %221 {offsets = [0, 0, 0], sizes = [2, 2, 16], strides = [1, 1, 1]} : vector<2x3x16xf32> to vector<2x2x16xf32>
    %224 = vector.extract_strided_slice %219 {offsets = [0, 1, 0], sizes = [2, 2, 16], strides = [1, 1, 1]} : vector<2x3x16xf32> to vector<2x2x16xf32>
    %225 = vector.extract_strided_slice %221 {offsets = [0, 1, 0], sizes = [2, 2, 16], strides = [1, 1, 1]} : vector<2x3x16xf32> to vector<2x2x16xf32>
    %226 = vector.extract_strided_slice %216 {offsets = [0, 1, 0, 0], sizes = [2, 1, 3, 16], strides = [1, 1, 1, 1]} : vector<3x2x3x16xf32> to vector<2x1x3x16xf32>
    %227 = vector.shape_cast %226 : vector<2x1x3x16xf32> to vector<2x3x16xf32>
    %228 = vector.extract_strided_slice %217 {offsets = [0, 1, 0, 0], sizes = [2, 1, 3, 16], strides = [1, 1, 1, 1]} : vector<3x2x3x16xf32> to vector<2x1x3x16xf32>
    %229 = vector.shape_cast %228 : vector<2x1x3x16xf32> to vector<2x3x16xf32>
    %230 = vector.extract_strided_slice %227 {offsets = [0, 0, 0], sizes = [2, 2, 16], strides = [1, 1, 1]} : vector<2x3x16xf32> to vector<2x2x16xf32>
    %231 = vector.extract_strided_slice %229 {offsets = [0, 0, 0], sizes = [2, 2, 16], strides = [1, 1, 1]} : vector<2x3x16xf32> to vector<2x2x16xf32>
    %232 = vector.extract_strided_slice %227 {offsets = [0, 1, 0], sizes = [2, 2, 16], strides = [1, 1, 1]} : vector<2x3x16xf32> to vector<2x2x16xf32>
    %233 = vector.extract_strided_slice %229 {offsets = [0, 1, 0], sizes = [2, 2, 16], strides = [1, 1, 1]} : vector<2x3x16xf32> to vector<2x2x16xf32>
    %234 = vector.extract_strided_slice %216 {offsets = [1, 0, 0, 0], sizes = [2, 1, 3, 16], strides = [1, 1, 1, 1]} : vector<3x2x3x16xf32> to vector<2x1x3x16xf32>
    %235 = vector.shape_cast %234 : vector<2x1x3x16xf32> to vector<2x3x16xf32>
    %236 = vector.extract_strided_slice %217 {offsets = [1, 0, 0, 0], sizes = [2, 1, 3, 16], strides = [1, 1, 1, 1]} : vector<3x2x3x16xf32> to vector<2x1x3x16xf32>
    %237 = vector.shape_cast %236 : vector<2x1x3x16xf32> to vector<2x3x16xf32>
    %238 = vector.extract_strided_slice %235 {offsets = [0, 0, 0], sizes = [2, 2, 16], strides = [1, 1, 1]} : vector<2x3x16xf32> to vector<2x2x16xf32>
    %239 = vector.extract_strided_slice %237 {offsets = [0, 0, 0], sizes = [2, 2, 16], strides = [1, 1, 1]} : vector<2x3x16xf32> to vector<2x2x16xf32>
    %240 = vector.extract_strided_slice %235 {offsets = [0, 1, 0], sizes = [2, 2, 16], strides = [1, 1, 1]} : vector<2x3x16xf32> to vector<2x2x16xf32>
    %241 = vector.extract_strided_slice %237 {offsets = [0, 1, 0], sizes = [2, 2, 16], strides = [1, 1, 1]} : vector<2x3x16xf32> to vector<2x2x16xf32>
    %242 = vector.extract_strided_slice %216 {offsets = [1, 1, 0, 0], sizes = [2, 1, 3, 16], strides = [1, 1, 1, 1]} : vector<3x2x3x16xf32> to vector<2x1x3x16xf32>
    %243 = vector.shape_cast %242 : vector<2x1x3x16xf32> to vector<2x3x16xf32>
    %244 = vector.extract_strided_slice %217 {offsets = [1, 1, 0, 0], sizes = [2, 1, 3, 16], strides = [1, 1, 1, 1]} : vector<3x2x3x16xf32> to vector<2x1x3x16xf32>
    %245 = vector.shape_cast %244 : vector<2x1x3x16xf32> to vector<2x3x16xf32>
    %246 = vector.extract_strided_slice %243 {offsets = [0, 0, 0], sizes = [2, 2, 16], strides = [1, 1, 1]} : vector<2x3x16xf32> to vector<2x2x16xf32>
    %247 = vector.extract_strided_slice %245 {offsets = [0, 0, 0], sizes = [2, 2, 16], strides = [1, 1, 1]} : vector<2x3x16xf32> to vector<2x2x16xf32>
    %248 = vector.extract_strided_slice %243 {offsets = [0, 1, 0], sizes = [2, 2, 16], strides = [1, 1, 1]} : vector<2x3x16xf32> to vector<2x2x16xf32>
    %249 = vector.extract_strided_slice %245 {offsets = [0, 1, 0], sizes = [2, 2, 16], strides = [1, 1, 1]} : vector<2x3x16xf32> to vector<2x2x16xf32>
    %250 = tpu.concatenate %222, %223, %224, %225, %230, %231, %232, %233, %238, %239, %240, %241, %246, %247, %248, %249 in 2 : vector<2x2x16xf32>, vector<2x2x16xf32>, vector<2x2x16xf32>, vector<2x2x16xf32>, vector<2x2x16xf32>, vector<2x2x16xf32>, vector<2x2x16xf32>, vector<2x2x16xf32>, vector<2x2x16xf32>, vector<2x2x16xf32>, vector<2x2x16xf32>, vector<2x2x16xf32>, vector<2x2x16xf32>, vector<2x2x16xf32>, vector<2x2x16xf32>, vector<2x2x16xf32> -> vector<2x2x256xf32>
    %251 = vector.shape_cast %250 : vector<2x2x256xf32> to vector<4x256xf32>
    %252 = arith.truncf %251 : vector<4x256xf32> to vector<4x256xbf16>
    %c0_70 = arith.constant 0 : index
    %c0_71 = arith.constant 0 : index
    %253 = vector.load %arg6[%c0_70, %c0_71] : memref<256x32xbf16, #tpu.memory_space<vmem>>, vector<256x32xbf16>
    %cst_72 = arith.constant dense<0.000000e+00> : vector<4x32xf32>
    %254 = tpu.matmul %252, %253, %cst_72 {dimension_numbers = #tpu.dot_dimension_numbers<[1], [0], [0], [1], [0, 0, 1, 1], [], []>} : vector<4x256xbf16>, vector<256x32xbf16>, vector<4x32xf32> -> vector<4x32xf32>
    %c0_73 = arith.constant 0 : index
    %c0_74 = arith.constant 0 : index
    %255 = vector.load %arg7[%c0_73, %c0_74] : memref<1x32xf32, #tpu.memory_space<vmem>>, vector<1x32xf32>
    %256 = vector.broadcast %255 : vector<1x32xf32> to vector<4x32xf32>
    %257 = arith.addf %254, %256 : vector<4x32xf32>
    %cst_75 = arith.constant 0.00999999977 : f32
    %258 = vector.broadcast %cst_75 : f32 to vector<4x32xf32>
    %259 = arith.mulf %258, %257 : vector<4x32xf32>
    %260 = arith.maximumf %257, %259 : vector<4x32xf32>
    %261 = vector.shape_cast %260 : vector<4x32xf32> to vector<2x2x32xf32>
    %c1_76 = arith.constant 1 : index
    %c1_77 = arith.constant 1 : index
    %c0_78 = arith.constant 0 : index
    %262 = vector.load %arg12[%c1_76, %c1_77, %c0_78] : memref<4x4x32xf32, #tpu.memory_space<vmem>>, vector<2x2x32xf32>
    tpu.vector_store %arg12[%c1_76, %c1_77, %c0_78], %261 {strides = array<i32>} : memref<4x4x32xf32, #tpu.memory_space<vmem>>, vector<2x2x32xf32>,
    %c0_79 = arith.constant 0 : index
    %c0_80 = arith.constant 0 : index
    %c0_81 = arith.constant 0 : index
    %263 = vector.load %arg12[%c0_79, %c0_80, %c0_81] : memref<4x4x32xf32, #tpu.memory_space<vmem>>, vector<4x4x32xf32>
    %c0_82 = arith.constant 0 : index
    %c0_83 = arith.constant 0 : index
    %264 = vector.load %arg8[%c0_82, %c0_83] : memref<9x32xf32, #tpu.memory_space<vmem>>, vector<9x32xf32>
    %cst_84 = arith.constant 0.000000e+00 : f32
    %265 = vector.broadcast %cst_84 : f32 to vector<2x2x32xf32>
    %266 = vector.extract_strided_slice %263 {offsets = [0, 0, 0], sizes = [2, 4, 32], strides = [1, 1, 1]} : vector<4x4x32xf32> to vector<2x4x32xf32>
    %267 = vector.extract_strided_slice %264 {offsets = [0, 0], sizes = [1, 32], strides = [1, 1]} : vector<9x32xf32> to vector<1x32xf32>
    %268 = vector.shape_cast %267 : vector<1x32xf32> to vector<1x1x32xf32>
    %269 = vector.extract_strided_slice %266 {offsets = [0, 0, 0], sizes = [2, 2, 32], strides = [1, 1, 1]} : vector<2x4x32xf32> to vector<2x2x32xf32>
    %270 = vector.broadcast %268 : vector<1x1x32xf32> to vector<2x2x32xf32>
    %271 = arith.mulf %269, %270 : vector<2x2x32xf32>
    %272 = arith.addf %265, %271 : vector<2x2x32xf32>
    %273 = vector.extract_strided_slice %264 {offsets = [1, 0], sizes = [1, 32], strides = [1, 1]} : vector<9x32xf32> to vector<1x32xf32>
    %274 = vector.shape_cast %273 : vector<1x32xf32> to vector<1x1x32xf32>
    %275 = vector.extract_strided_slice %266 {offsets = [0, 1, 0], sizes = [2, 2, 32], strides = [1, 1, 1]} : vector<2x4x32xf32> to vector<2x2x32xf32>
    %276 = vector.broadcast %274 : vector<1x1x32xf32> to vector<2x2x32xf32>
    %277 = arith.mulf %275, %276 : vector<2x2x32xf32>
    %278 = arith.addf %272, %277 : vector<2x2x32xf32>
    %279 = vector.extract_strided_slice %264 {offsets = [2, 0], sizes = [1, 32], strides = [1, 1]} : vector<9x32xf32> to vector<1x32xf32>
    %280 = vector.shape_cast %279 : vector<1x32xf32> to vector<1x1x32xf32>
    %281 = vector.extract_strided_slice %266 {offsets = [0, 2, 0], sizes = [2, 2, 32], strides = [1, 1, 1]} : vector<2x4x32xf32> to vector<2x2x32xf32>
    %282 = vector.broadcast %280 : vector<1x1x32xf32> to vector<2x2x32xf32>
    %283 = arith.mulf %281, %282 : vector<2x2x32xf32>
    %284 = arith.addf %278, %283 : vector<2x2x32xf32>
    %285 = vector.extract_strided_slice %263 {offsets = [1, 0, 0], sizes = [2, 4, 32], strides = [1, 1, 1]} : vector<4x4x32xf32> to vector<2x4x32xf32>
    %286 = vector.extract_strided_slice %264 {offsets = [3, 0], sizes = [1, 32], strides = [1, 1]} : vector<9x32xf32> to vector<1x32xf32>
    %287 = vector.shape_cast %286 : vector<1x32xf32> to vector<1x1x32xf32>
    %288 = vector.extract_strided_slice %285 {offsets = [0, 0, 0], sizes = [2, 2, 32], strides = [1, 1, 1]} : vector<2x4x32xf32> to vector<2x2x32xf32>
    %289 = vector.broadcast %287 : vector<1x1x32xf32> to vector<2x2x32xf32>
    %290 = arith.mulf %288, %289 : vector<2x2x32xf32>
    %291 = arith.addf %284, %290 : vector<2x2x32xf32>
    %292 = vector.extract_strided_slice %264 {offsets = [4, 0], sizes = [1, 32], strides = [1, 1]} : vector<9x32xf32> to vector<1x32xf32>
    %293 = vector.shape_cast %292 : vector<1x32xf32> to vector<1x1x32xf32>
    %294 = vector.extract_strided_slice %285 {offsets = [0, 1, 0], sizes = [2, 2, 32], strides = [1, 1, 1]} : vector<2x4x32xf32> to vector<2x2x32xf32>
    %295 = vector.broadcast %293 : vector<1x1x32xf32> to vector<2x2x32xf32>
    %296 = arith.mulf %294, %295 : vector<2x2x32xf32>
    %297 = arith.addf %291, %296 : vector<2x2x32xf32>
    %298 = vector.extract_strided_slice %264 {offsets = [5, 0], sizes = [1, 32], strides = [1, 1]} : vector<9x32xf32> to vector<1x32xf32>
    %299 = vector.shape_cast %298 : vector<1x32xf32> to vector<1x1x32xf32>
    %300 = vector.extract_strided_slice %285 {offsets = [0, 2, 0], sizes = [2, 2, 32], strides = [1, 1, 1]} : vector<2x4x32xf32> to vector<2x2x32xf32>
    %301 = vector.broadcast %299 : vector<1x1x32xf32> to vector<2x2x32xf32>
    %302 = arith.mulf %300, %301 : vector<2x2x32xf32>
    %303 = arith.addf %297, %302 : vector<2x2x32xf32>
    %304 = vector.extract_strided_slice %263 {offsets = [2, 0, 0], sizes = [2, 4, 32], strides = [1, 1, 1]} : vector<4x4x32xf32> to vector<2x4x32xf32>
    %305 = vector.extract_strided_slice %264 {offsets = [6, 0], sizes = [1, 32], strides = [1, 1]} : vector<9x32xf32> to vector<1x32xf32>
    %306 = vector.shape_cast %305 : vector<1x32xf32> to vector<1x1x32xf32>
    %307 = vector.extract_strided_slice %304 {offsets = [0, 0, 0], sizes = [2, 2, 32], strides = [1, 1, 1]} : vector<2x4x32xf32> to vector<2x2x32xf32>
    %308 = vector.broadcast %306 : vector<1x1x32xf32> to vector<2x2x32xf32>
    %309 = arith.mulf %307, %308 : vector<2x2x32xf32>
    %310 = arith.addf %303, %309 : vector<2x2x32xf32>
    %311 = vector.extract_strided_slice %264 {offsets = [7, 0], sizes = [1, 32], strides = [1, 1]} : vector<9x32xf32> to vector<1x32xf32>
    %312 = vector.shape_cast %311 : vector<1x32xf32> to vector<1x1x32xf32>
    %313 = vector.extract_strided_slice %304 {offsets = [0, 1, 0], sizes = [2, 2, 32], strides = [1, 1, 1]} : vector<2x4x32xf32> to vector<2x2x32xf32>
    %314 = vector.broadcast %312 : vector<1x1x32xf32> to vector<2x2x32xf32>
    %315 = arith.mulf %313, %314 : vector<2x2x32xf32>
    %316 = arith.addf %310, %315 : vector<2x2x32xf32>
    %317 = vector.extract_strided_slice %264 {offsets = [8, 0], sizes = [1, 32], strides = [1, 1]} : vector<9x32xf32> to vector<1x32xf32>
    %318 = vector.shape_cast %317 : vector<1x32xf32> to vector<1x1x32xf32>
    %319 = vector.extract_strided_slice %304 {offsets = [0, 2, 0], sizes = [2, 2, 32], strides = [1, 1, 1]} : vector<2x4x32xf32> to vector<2x2x32xf32>
    %320 = vector.broadcast %318 : vector<1x1x32xf32> to vector<2x2x32xf32>
    %321 = arith.mulf %319, %320 : vector<2x2x32xf32>
    %322 = arith.addf %316, %321 : vector<2x2x32xf32>
    %cst_85 = arith.constant dense<0.000000e+00> : vector<2x2xf32>
    %323 = vector.multi_reduction <add>, %322, %cst_85 [2] : vector<2x2x32xf32> to vector<2x2xf32>
    %324 = vector.shape_cast %323 : vector<2x2xf32> to vector<1x2x2xf32>
    %c0_86 = arith.constant 0 : index
    %c0_87 = arith.constant 0 : index
    %c0_88 = arith.constant 0 : index
    %325 = vector.load %arg9[%c0_86, %c0_87, %c0_88] : memref<1x2x2xf32, #tpu.memory_space<vmem>>, vector<1x2x2xf32>
    tpu.vector_store %arg9[%c0_86, %c0_87, %c0_88], %324 {strides = array<i32>} : memref<1x2x2xf32, #tpu.memory_space<vmem>>, vector<1x2x2xf32>,
    return
  }
  func.func @transform_0(%arg0: i32) -> (i32, i32, i32, i32) {
    %c0_i32 = arith.constant 0 : i32
    %c0_i32_0 = arith.constant 0 : i32
    %c0_i32_1 = arith.constant 0 : i32
    %c0_i32_2 = arith.constant 0 : i32
    return %arg0, %c0_i32, %c0_i32_0, %c0_i32_1 : i32, i32, i32, i32
  }
  func.func @transform_1(%arg0: i32) -> (i32, i32) {
    %c0_i32 = arith.constant 0 : i32
    %c0_i32_0 = arith.constant 0 : i32
    %c0_i32_1 = arith.constant 0 : i32
    return %c0_i32, %c0_i32_0 : i32, i32
  }
  func.func @transform_2(%arg0: i32) -> (i32, i32) {
    %c0_i32 = arith.constant 0 : i32
    %c0_i32_0 = arith.constant 0 : i32
    %c0_i32_1 = arith.constant 0 : i32
    return %c0_i32, %c0_i32_0 : i32, i32
  }
  func.func @transform_3(%arg0: i32) -> (i32, i32) {
    %c0_i32 = arith.constant 0 : i32
    %c0_i32_0 = arith.constant 0 : i32
    %c0_i32_1 = arith.constant 0 : i32
    return %c0_i32, %c0_i32_0 : i32, i32
  }
  func.func @transform_4(%arg0: i32) -> (i32, i32) {
    %c0_i32 = arith.constant 0 : i32
    %c0_i32_0 = arith.constant 0 : i32
    %c0_i32_1 = arith.constant 0 : i32
    return %c0_i32, %c0_i32_0 : i32, i32
  }
  func.func @transform_5(%arg0: i32) -> (i32, i32) {
    %c0_i32 = arith.constant 0 : i32
    %c0_i32_0 = arith.constant 0 : i32
    %c0_i32_1 = arith.constant 0 : i32
    return %c0_i32, %c0_i32_0 : i32, i32
  }
  func.func @transform_6(%arg0: i32) -> (i32, i32) {
    %c0_i32 = arith.constant 0 : i32
    %c0_i32_0 = arith.constant 0 : i32
    %c0_i32_1 = arith.constant 0 : i32
    return %c0_i32, %c0_i32_0 : i32, i32
  }
  func.func @transform_7(%arg0: i32) -> (i32, i32) {
    %c0_i32 = arith.constant 0 : i32
    %c0_i32_0 = arith.constant 0 : i32
    %c0_i32_1 = arith.constant 0 : i32
    return %c0_i32, %c0_i32_0 : i32, i32
  }
  func.func @transform_8(%arg0: i32) -> (i32, i32, i32) {
    %c0_i32 = arith.constant 0 : i32
    %c0_i32_0 = arith.constant 0 : i32
    %c0_i32_1 = arith.constant 0 : i32
    return %arg0, %c0_i32, %c0_i32_0 : i32, i32, i32
  }
}

</mosaic_0001>

<llo_original>
// kernel: discriminator_forward.1
$region0: #{discriminator_forward.1}
  #allocation0 [shape = 'u32[]', space=smem, size = 0x4, offset = 0x4, fixed_abs, tag = 'smem constant byte address 0x4 - core index']
  #allocation1 [shape = 'u32[144,128]{1,0:T(1,128)}', space=vmem, size = 0x12000, scoped, tag = 'internal scratch']
  #allocation2 [shape = 'f32[10,10,8]{2,1,0:T(8,128)}', space=vmem, size = 0x14000, scoped, tag = 'scratch operand']
  #allocation3 [shape = 'f32[6,6,16]{2,1,0:T(8,128)}', space=vmem, size = 0x6000, scoped, tag = 'scratch operand']
  #allocation4 [shape = 'f32[4,4,32]{2,1,0:T(4,128)}', space=vmem, size = 0x2000, scoped, tag = 'scratch operand']
  %s0 = inlined_call_operand.vmem [shape: f32[2,18,9,2], index: 0, kind: input, shape index: {}]
  %s1 = inlined_call_operand.vmem [shape: f32[16,8], index: 1, kind: input, shape index: {}]
  %s2 = inlined_call_operand.vmem [shape: f32[1,8], index: 2, kind: input, shape index: {}]
  %s3 = inlined_call_operand.vmem [shape: bf16[128,16], index: 3, kind: input, shape index: {}]
  %s4 = inlined_call_operand.vmem [shape: f32[1,16], index: 4, kind: input, shape index: {}]
  %s5 = inlined_call_operand.vmem [shape: bf16[256,32], index: 5, kind: input, shape index: {}]
  %s6 = inlined_call_operand.vmem [shape: f32[1,32], index: 6, kind: input, shape index: {}]
  %s7 = inlined_call_operand.vmem [shape: f32[9,32], index: 7, kind: input, shape index: {}]
  %s8 = inlined_call_operand.hbm [shape: f32[2,2,2], index: 8, kind: output, shape index: {}]
  %s9 = sld [smem:[#allocation0]]
  $region65: #{discriminator_forward.1} parent=0
    _
  %s11 = ssub.s32 1, %s9
  %s12 = scalar_select 0, %s11, %s9
  $region1: #{discriminator_forward.1} parent=0
    #allocation5 [shape = 'u8[2048]{0}', space=vmem, size = 0x800, scoped, tag = 'output window, operand 0']
    #allocation6 [shape = 's32[2]{0}', space=sflag, size = 0x8, scoped, tag = 'scoped memory for discriminator_forward.1']
    %13 = vsyncpa [#allocation6], 0
    %s14 = scalar_lea.sflag [#allocation6], 1
    %15 = vsyncpa %s14, 0
    loop: start=0, step=1, limit=4
    $region2: #{discriminator_forward.1} parent=1 // loop_pre_header
      _
    $region3: #{discriminator_forward.1} parent=1 // loop_header
      %s17 = sphi 0, %s21
      %p18 = scmp.ge.s32.totalorder %s17, 4
      %s27 = sphi 0, %s29
      %s30 = sphi 0, %s27
      %s31 = sphi 0, %s30
      %s47 = sphi 0, %s31
      %s51 = sphi 0, %s51
      %s53 = sphi 0, %s51
      %s54 = sphi 0, %s53
      %s68 = sphi 0, %s54
      %s72 = sphi 0, %s72
      %s74 = sphi 0, %s72
      %s75 = sphi 0, %s74
      %s89 = sphi 0, %s75
      %s93 = sphi 0, %s93
      %s95 = sphi 0, %s93
      %s96 = sphi 0, %s95
      %s110 = sphi 0, %s96
      %s114 = sphi 0, %s114
      %s116 = sphi 0, %s114
      %s117 = sphi 0, %s116
      %s131 = sphi 0, %s117
      %s135 = sphi 0, %s135
      %s137 = sphi 0, %s135
      %s138 = sphi 0, %s137
      %s152 = sphi 0, %s138
      %s156 = sphi 0, %s156
      %s158 = sphi 0, %s156
      %s159 = sphi 0, %s158
      %s173 = sphi 0, %s159
      %s177 = sphi 0, %s177
      %s179 = sphi 0, %s177
      %s180 = sphi 0, %s179
      %s194 = sphi 0, %s180
      %s200 = sphi 0, %s202
      %s203 = sphi 0, %s200
      %s204 = sphi 0, %s203
      %s220 = sphi 0, %s204
    $region4: #{discriminator_forward.1} parent=1 // loop_header_branch
      %20 = sbr.rel (%p18) target = $region8
    $region5: #{discriminator_forward.1} parent=1 // loop_body
      %s22 = ssub.s32 %s17, 1
      %s23 = ssub.s32 %s17, 2
      %s24 = sadd.s32 %s17, 1
      %s25 = ssub.s32 %s17, %s24
      %p26 = scmp.eq.s32.totalorder %s25, 0
      %s28 = sadd.s32 %s27, 1
      %s29 = scalar_select %p26, %s27, %s28
      %p32 = pneg %p26
      %p33 = scmp.eq.s32.totalorder %s17, 1
      %p34 = por %p32, %p33
      %p35 = scmp.ne.s32.totalorder %s27, %s30
      %p36 = scmp.eq.s32.totalorder %s17, 0
      %p37 = por %p35, %p36
      %p38 = scmp.ne.s32.totalorder %s27, %s30
      %p39 = scmp.eq.s32.totalorder %s22, 1
      %p40 = por %p38, %p39
      %p41 = scmp.ne.s32.totalorder %s30, %s31
      %p42 = scmp.eq.s32.totalorder %s22, 0
      %p43 = por %p41, %p42
      %p44 = scmp.ne.s32.totalorder %s30, %s31
      %p45 = scmp.eq.s32.totalorder %s23, 1
      %p46 = por %p44, %p45
      %p48 = scmp.ne.s32.totalorder %s31, %s47
      %p49 = scmp.eq.s32.totalorder %s23, 0
      %p50 = por %p48, %p49
      %s52 = sadd.s32 %s51, 1
      %p55 = scmp.eq.s32.totalorder %s17, 1
      %p56 = scmp.ne.s32.totalorder %s51, %s53
      %p57 = scmp.eq.s32.totalorder %s17, 0
      %p58 = por %p56, %p57
      %p59 = scmp.ne.s32.totalorder %s51, %s53
      %p60 = scmp.eq.s32.totalorder %s22, 1
      %p61 = por %p59, %p60
      %p62 = scmp.ne.s32.totalorder %s53, %s54
      %p63 = scmp.eq.s32.totalorder %s22, 0
      %p64 = por %p62, %p63
      %p65 = scmp.ne.s32.totalorder %s53, %s54
      %p66 = scmp.eq.s32.totalorder %s23, 1
      %p67 = por %p65, %p66
      %p69 = scmp.ne.s32.totalorder %s54, %s68
      %p70 = scmp.eq.s32.totalorder %s23, 0
      %p71 = por %p69, %p70
      %s73 = sadd.s32 %s72, 1
      %p76 = scmp.eq.s32.totalorder %s17, 1
      %p77 = scmp.ne.s32.totalorder %s72, %s74
      %p78 = scmp.eq.s32.totalorder %s17, 0
      %p79 = por %p77, %p78
      %p80 = scmp.ne.s32.totalorder %s72, %s74
      %p81 = scmp.eq.s32.totalorder %s22, 1
      %p82 = por %p80, %p81
      %p83 = scmp.ne.s32.totalorder %s74, %s75
      %p84 = scmp.eq.s32.totalorder %s22, 0
      %p85 = por %p83, %p84
      %p86 = scmp.ne.s32.totalorder %s74, %s75
      %p87 = scmp.eq.s32.totalorder %s23, 1
      %p88 = por %p86, %p87
      %p90 = scmp.ne.s32.totalorder %s75, %s89
      %p91 = scmp.eq.s32.totalorder %s23, 0
      %p92 = por %p90, %p91
      %s94 = sadd.s32 %s93, 1
      %p97 = scmp.eq.s32.totalorder %s17, 1
      %p98 = scmp.ne.s32.totalorder %s93, %s95
      %p99 = scmp.eq.s32.totalorder %s17, 0
      %p100 = por %p98, %p99
      %p101 = scmp.ne.s32.totalorder %s93, %s95
      %p102 = scmp.eq.s32.totalorder %s22, 1
      %p103 = por %p101, %p102
      %p104 = scmp.ne.s32.totalorder %s95, %s96
      %p105 = scmp.eq.s32.totalorder %s22, 0
      %p106 = por %p104, %p105
      %p107 = scmp.ne.s32.totalorder %s95, %s96
      %p108 = scmp.eq.s32.totalorder %s23, 1
      %p109 = por %p107, %p108
      %p111 = scmp.ne.s32.totalorder %s96, %s110
      %p112 = scmp.eq.s32.totalorder %s23, 0
      %p113 = por %p111, %p112
      %s115 = sadd.s32 %s114, 1
      %p118 = scmp.eq.s32.totalorder %s17, 1
      %p119 = scmp.ne.s32.totalorder %s114, %s116
      %p120 = scmp.eq.s32.totalorder %s17, 0
      %p121 = por %p119, %p120
      %p122 = scmp.ne.s32.totalorder %s114, %s116
      %p123 = scmp.eq.s32.totalorder %s22, 1
      %p124 = por %p122, %p123
      %p125 = scmp.ne.s32.totalorder %s116, %s117
      %p126 = scmp.eq.s32.totalorder %s22, 0
      %p127 = por %p125, %p126
      %p128 = scmp.ne.s32.totalorder %s116, %s117
      %p129 = scmp.eq.s32.totalorder %s23, 1
      %p130 = por %p128, %p129
      %p132 = scmp.ne.s32.totalorder %s117, %s131
      %p133 = scmp.eq.s32.totalorder %s23, 0
      %p134 = por %p132, %p133
      %s136 = sadd.s32 %s135, 1
      %p139 = scmp.eq.s32.totalorder %s17, 1
      %p140 = scmp.ne.s32.totalorder %s135, %s137
      %p141 = scmp.eq.s32.totalorder %s17, 0
      %p142 = por %p140, %p141
      %p143 = scmp.ne.s32.totalorder %s135, %s137
      %p144 = scmp.eq.s32.totalorder %s22, 1
      %p145 = por %p143, %p144
      %p146 = scmp.ne.s32.totalorder %s137, %s138
      %p147 = scmp.eq.s32.totalorder %s22, 0
      %p148 = por %p146, %p147
      %p149 = scmp.ne.s32.totalorder %s137, %s138
      %p150 = scmp.eq.s32.totalorder %s23, 1
      %p151 = por %p149, %p150
      %p153 = scmp.ne.s32.totalorder %s138, %s152
      %p154 = scmp.eq.s32.totalorder %s23, 0
      %p155 = por %p153, %p154
      %s157 = sadd.s32 %s156, 1
      %p160 = scmp.eq.s32.totalorder %s17, 1
      %p161 = scmp.ne.s32.totalorder %s156, %s158
      %p162 = scmp.eq.s32.totalorder %s17, 0
      %p163 = por %p161, %p162
      %p164 = scmp.ne.s32.totalorder %s156, %s158
      %p165 = scmp.eq.s32.totalorder %s22, 1
      %p166 = por %p164, %p165
      %p167 = scmp.ne.s32.totalorder %s158, %s159
      %p168 = scmp.eq.s32.totalorder %s22, 0
      %p169 = por %p167, %p168
      %p170 = scmp.ne.s32.totalorder %s158, %s159
      %p171 = scmp.eq.s32.totalorder %s23, 1
      %p172 = por %p170, %p171
      %p174 = scmp.ne.s32.totalorder %s159, %s173
      %p175 = scmp.eq.s32.totalorder %s23, 0
      %p176 = por %p174, %p175
      %s178 = sadd.s32 %s177, 1
      %p181 = scmp.eq.s32.totalorder %s17, 1
      %p182 = scmp.ne.s32.totalorder %s177, %s179
      %p183 = scmp.eq.s32.totalorder %s17, 0
      %p184 = por %p182, %p183
      %p185 = scmp.ne.s32.totalorder %s177, %s179
      %p186 = scmp.eq.s32.totalorder %s22, 1
      %p187 = por %p185, %p186
      %p188 = scmp.ne.s32.totalorder %s179, %s180
      %p189 = scmp.eq.s32.totalorder %s22, 0
      %p190 = por %p188, %p189
      %p191 = scmp.ne.s32.totalorder %s179, %s180
      %p192 = scmp.eq.s32.totalorder %s23, 1
      %p193 = por %p191, %p192
      %p195 = scmp.ne.s32.totalorder %s180, %s194
      %p196 = scmp.eq.s32.totalorder %s23, 0
      %p197 = por %p195, %p196
      %s198 = ssub.s32 %s17, %s24
      %p199 = scmp.eq.s32.totalorder %s198, 0
      %s201 = sadd.s32 %s200, 1
      %s202 = scalar_select %p199, %s200, %s201
      %p205 = pneg %p199
      %p206 = scmp.eq.s32.totalorder %s17, 1
      %p207 = por %p205, %p206
      %p208 = scmp.ne.s32.totalorder %s200, %s203
      %p209 = scmp.eq.s32.totalorder %s17, 0
      %p210 = por %p208, %p209
      %p211 = scmp.ne.s32.totalorder %s200, %s203
      %p212 = scmp.eq.s32.totalorder %s22, 1
      %p213 = por %p211, %p212
      %p214 = scmp.ne.s32.totalorder %s203, %s204
      %p215 = scmp.eq.s32.totalorder %s22, 0
      %p216 = por %p214, %p215
      %p217 = scmp.ne.s32.totalorder %s203, %s204
      %p218 = scmp.eq.s32.totalorder %s23, 1
      %p219 = por %p217, %p218
      %p221 = scmp.ne.s32.totalorder %s204, %s220
      %p222 = scmp.eq.s32.totalorder %s23, 0
      %p223 = por %p221, %p222
      %p224 = scmp.le.s32.totalorder 1, %s17
      %p225 = scmp.lt.s32.totalorder %s17, 3
      %p226 = pnand %p224, %p225
      %p227 = pneg %p226
      // Predicated region
      $region9: #{discriminator_forward.1} parent=5 // pred_check
        _
      $region10: #{discriminator_forward.1} parent=5 // pred_check_branch
        %229 = sbr.rel (%p226) target = $region12
      $region11: #{discriminator_forward.1} parent=5 // pred_region
        %s230 = ssub.s32 %s17, 1
        // Predicated region
        $region13: #{discriminator_forward.1} parent=11 // pred_check
          %p231 = pneg %p64
        $region14: #{discriminator_forward.1} parent=11 // pred_check_branch
          %233 = sbr.rel (%p231) target = $region16
        $region15: #{discriminator_forward.1} parent=11 // pred_region
          _
        $region16: #{discriminator_forward.1} parent=11 // pred_fallthru
          _
        // Predicated region
        $region17: #{discriminator_forward.1} parent=11 // pred_check
          %p234 = pneg %p85
        $region18: #{discriminator_forward.1} parent=11 // pred_check_branch
          %236 = sbr.rel (%p234) target = $region20
        $region19: #{discriminator_forward.1} parent=11 // pred_region
          _
        $region20: #{discriminator_forward.1} parent=11 // pred_fallthru
          _
        // Predicated region
        $region21: #{discriminator_forward.1} parent=11 // pred_check
          %p237 = pneg %p106
        $region22: #{discriminator_forward.1} parent=11 // pred_check_branch
          %239 = sbr.rel (%p237) target = $region24
        $region23: #{discriminator_forward.1} parent=11 // pred_region
          _
        $region24: #{discriminator_forward.1} parent=11 // pred_fallthru
          _
        // Predicated region
        $region25: #{discriminator_forward.1} parent=11 // pred_check
          %p240 = pneg %p127
        $region26: #{discriminator_forward.1} parent=11 // pred_check_branch
          %242 = sbr.rel (%p240) target = $region28
        $region27: #{discriminator_forward.1} parent=11 // pred_region
          _
        $region28: #{discriminator_forward.1} parent=11 // pred_fallthru
          _
        // Predicated region
        $region29: #{discriminator_forward.1} parent=11 // pred_check
          %p243 = pneg %p148
        $region30: #{discriminator_forward.1} parent=11 // pred_check_branch
          %245 = sbr.rel (%p243) target = $region32
        $region31: #{discriminator_forward.1} parent=11 // pred_region
          _
        $region32: #{discriminator_forward.1} parent=11 // pred_fallthru
          _
        // Predicated region
        $region33: #{discriminator_forward.1} parent=11 // pred_check
          %p246 = pneg %p169
        $region34: #{discriminator_forward.1} parent=11 // pred_check_branch
          %248 = sbr.rel (%p246) target = $region36
        $region35: #{discriminator_forward.1} parent=11 // pred_region
          _
        $region36: #{discriminator_forward.1} parent=11 // pred_fallthru
          _
        // Predicated region
        $region37: #{discriminator_forward.1} parent=11 // pred_check
          %p249 = pneg %p190
        $region38: #{discriminator_forward.1} parent=11 // pred_check_branch
          %251 = sbr.rel (%p249) target = $region40
        $region39: #{discriminator_forward.1} parent=11 // pred_region
          _
        $region40: #{discriminator_forward.1} parent=11 // pred_fallthru
          _
      $region12: #{discriminator_forward.1} parent=5 // pred_fallthru
        _
      %p252 = scmp.lt.s32.totalorder %s17, 2
      // Predicated region
      $region41: #{discriminator_forward.1} parent=5 // pred_check
        %p253 = pneg %p252
      $region42: #{discriminator_forward.1} parent=5 // pred_check_branch
        %255 = sbr.rel (%p253) target = $region44
      $region43: #{discriminator_forward.1} parent=5 // pred_region
        // Predicated region
        $region45: #{discriminator_forward.1} parent=43 // pred_check
          %p256 = pneg %p37
        $region46: #{discriminator_forward.1} parent=43 // pred_check_branch
          %258 = sbr.rel (%p256) target = $region48
        $region47: #{discriminator_forward.1} parent=43 // pred_region
          %p259 = scmp.lt.s32.totalorder %s17, 1
          %s260 = scalar_select %p259, %s17, 1
          %s261 = smul.addr %s260, 36
          %s262 = smul.addr %s261, 8
          %s263 = scalar_lea.vmem %s0, %s262
        $region48: #{discriminator_forward.1} parent=43 // pred_fallthru
          _
      $region44: #{discriminator_forward.1} parent=5 // pred_fallthru
        _
      %p264 = scmp.le.s32.totalorder 1, %s17
      %p265 = scmp.lt.s32.totalorder %s17, 3
      %p266 = pnand %p264, %p265
      %p267 = pneg %p266
      // Predicated region
      $region49: #{discriminator_forward.1} parent=5 // pred_check
        _
      $region50: #{discriminator_forward.1} parent=5 // pred_check_branch
        %269 = sbr.rel (%p266) target = $region52
      $region51: #{discriminator_forward.1} parent=5 // pred_region
        %s270 = ssub.s32 %s17, 1
        %p271 = scmp.lt.s32.totalorder %s22, 1
        %s272 = scalar_select %p271, %s22, 1
        %s273 = smul.addr %s272, 36
        %s274 = smul.addr %s273, 8
        %s275 = scalar_lea.vmem %s0, %s274
        %p276 = pneg %p43
        %p277 = pneg %p40
        %p278 = pneg %p64
        %p279 = pneg %p61
        %p280 = pneg %p85
        %p281 = pneg %p82
        %p282 = pneg %p106
        %p283 = pneg %p103
        %p284 = pneg %p127
        %p285 = pneg %p124
        %p286 = pneg %p148
        %p287 = pneg %p145
        %p288 = pneg %p169
        %p289 = pneg %p166
        %p290 = pneg %p190
        %p291 = pneg %p187
        %p292 = pneg %p216
        %p293 = pneg %p213
        %s294 = sand.u32 %s203, 1
        %s295 = scalar_lea.sflag [#allocation6], %s294
        %s296 = sand.u32 %s203, 1
        %s297 = smul.addr %s296, 2
        %s298 = scalar_lea.vmem [#allocation5], %s297
        %p299 = scmp.lt.s32.totalorder %s22, 1
        %s300 = scalar_select %p299, %s22, 1
        %s301 = smul.addr %s300, 36
        %s302 = smul.addr %s301, 8
        %s303 = scalar_lea.vmem %s0, %s302
        %vm305 = vcmask 64512
        %306 = vst.msk [vmem:[#allocation2] sm:$0xff] %vm305, 0.0
        %vm307 = vcmask 58368
        %308 = vst.msk [vmem:[#allocation2 + $0x8] sm:$0x3] %vm307, 0.0
        %s309 = scalar_lea.vmem [#allocation2], 144
        %310 = vst.msk [vmem:[%s309] sm:$0xff] %vm305, 0.0
        %311 = vst.msk [vmem:[%s309 + $0x8] sm:$0x3] %vm307, 0.0
        %vm312 = vcmask 57344
        %313 = vst.msk [vmem:[#allocation2] sm:$0x1] %vm312, 0.0
        %314 = vst.msk [vmem:[#allocation2 + $0x10] sm:$0x1] %vm312, 0.0
        %315 = vst.msk [vmem:[#allocation2 + $0x20] sm:$0x1] %vm312, 0.0
        %316 = vst.msk [vmem:[#allocation2 + $0x30] sm:$0x1] %vm312, 0.0
        %317 = vst.msk [vmem:[#allocation2 + $0x40] sm:$0x1] %vm312, 0.0
        %318 = vst.msk [vmem:[#allocation2 + $0x50] sm:$0x1] %vm312, 0.0
        %319 = vst.msk [vmem:[#allocation2 + $0x60] sm:$0x1] %vm312, 0.0
        %320 = vst.msk [vmem:[#allocation2 + $0x70] sm:$0x1] %vm312, 0.0
        %321 = vst.msk [vmem:[#allocation2 + $0x80] sm:$0x1] %vm312, 0.0
        %322 = vst.msk [vmem:[#allocation2 + $0x90] sm:$0x1] %vm312, 0.0
        %323 = vst.msk [vmem:[#allocation2 + $0x9] sm:$0x1] %vm312, 0.0
        %324 = vst.msk [vmem:[#allocation2 + $0x19] sm:$0x1] %vm312, 0.0
        %325 = vst.msk [vmem:[#allocation2 + $0x29] sm:$0x1] %vm312, 0.0
        %326 = vst.msk [vmem:[#allocation2 + $0x39] sm:$0x1] %vm312, 0.0
        %327 = vst.msk [vmem:[#allocation2 + $0x49] sm:$0x1] %vm312, 0.0
        %328 = vst.msk [vmem:[#allocation2 + $0x59] sm:$0x1] %vm312, 0.0
        %329 = vst.msk [vmem:[#allocation2 + $0x69] sm:$0x1] %vm312, 0.0
        %330 = vst.msk [vmem:[#allocation2 + $0x79] sm:$0x1] %vm312, 0.0
        %331 = vst.msk [vmem:[#allocation2 + $0x89] sm:$0x1] %vm312, 0.0
        %332 = vst.msk [vmem:[#allocation2 + $0x99] sm:$0x1] %vm312, 0.0
        %vm333 = vcmask 128000
        %334 = vst.msk [vmem:[#allocation3] sm:$0x3f] %vm333, 0.0
        %s335 = scalar_lea.vmem [#allocation3], 40
        %336 = vst.msk [vmem:[%s335] sm:$0x3f] %vm333, 0.0
        %vm337 = vcmask 122880
        %338 = vst.msk [vmem:[#allocation3] sm:$0x1] %vm337, 0.0
        %339 = vst.msk [vmem:[#allocation3 + $0x8] sm:$0x1] %vm337, 0.0
        %340 = vst.msk [vmem:[#allocation3 + $0x10] sm:$0x1] %vm337, 0.0
        %341 = vst.msk [vmem:[#allocation3 + $0x18] sm:$0x1] %vm337, 0.0
        %342 = vst.msk [vmem:[#allocation3 + $0x20] sm:$0x1] %vm337, 0.0
        %343 = vst.msk [vmem:[#allocation3 + $0x28] sm:$0x1] %vm337, 0.0
        %344 = vst.msk [vmem:[#allocation3 + $0x5] sm:$0x1] %vm337, 0.0
        %345 = vst.msk [vmem:[#allocation3 + $0xd] sm:$0x1] %vm337, 0.0
        %346 = vst.msk [vmem:[#allocation3 + $0x15] sm:$0x1] %vm337, 0.0
        %347 = vst.msk [vmem:[#allocation3 + $0x1d] sm:$0x1] %vm337, 0.0
        %348 = vst.msk [vmem:[#allocation3 + $0x25] sm:$0x1] %vm337, 0.0
        %349 = vst.msk [vmem:[#allocation3 + $0x2d] sm:$0x1] %vm337, 0.0
        %vm350 = vcmask 257024
        %351 = vst.msk [vmem:[#allocation4] sm:$0xf] %vm350, 0.0
        %s352 = scalar_lea.vmem [#allocation4], 12
        %353 = vst.msk [vmem:[%s352] sm:$0xf] %vm350, 0.0
        %vm354 = vcmask 253952
        %355 = vst.msk [vmem:[#allocation4] sm:$0x1] %vm354, 0.0
        %356 = vst.msk [vmem:[#allocation4 + $0x4] sm:$0x1] %vm354, 0.0
        %357 = vst.msk [vmem:[#allocation4 + $0x8] sm:$0x1] %vm354, 0.0
        %358 = vst.msk [vmem:[#allocation4 + $0xc] sm:$0x1] %vm354, 0.0
        %359 = vst.msk [vmem:[#allocation4 + $0x3] sm:$0x1] %vm354, 0.0
        %360 = vst.msk [vmem:[#allocation4 + $0x7] sm:$0x1] %vm354, 0.0
        %361 = vst.msk [vmem:[#allocation4 + $0xb] sm:$0x1] %vm354, 0.0
        %362 = vst.msk [vmem:[#allocation4 + $0xf] sm:$0x1] %vm354, 0.0
        %v363 = vld [vmem:[%s303] sm:$0xff]
        %v364 = vld [vmem:[%s303 + $0x8] sm:$0x1]
        %v365 = vld [vmem:[%s303 + $0x10] sm:$0xff]
        %v366 = vld [vmem:[%s303 + $0x18] sm:$0x1]
        %v367 = vld [vmem:[%s303 + $0x20] sm:$0xff]
        %v368 = vld [vmem:[%s303 + $0x28] sm:$0x1]
        %v369 = vld [vmem:[%s303 + $0x30] sm:$0xff]
        %v370 = vld [vmem:[%s303 + $0x38] sm:$0x1]
        %v371 = vld [vmem:[%s303 + $0x40] sm:$0xff]
        %v372 = vld [vmem:[%s303 + $0x48] sm:$0x1]
        %v373 = vld [vmem:[%s303 + $0x50] sm:$0xff]
        %v374 = vld [vmem:[%s303 + $0x58] sm:$0x1]
        %v375 = vld [vmem:[%s303 + $0x60] sm:$0xff]
        %v376 = vld [vmem:[%s303 + $0x68] sm:$0x1]
        %v377 = vld [vmem:[%s303 + $0x70] sm:$0xff]
        %v378 = vld [vmem:[%s303 + $0x78] sm:$0x1]
        %v379 = vld [vmem:[%s303 + $0x80] sm:$0xff]
        %v380 = vld [vmem:[%s303 + $0x88] sm:$0x1]
        %v381 = vld [vmem:[%s303 + $0x90] sm:$0xff]
        %v382 = vld [vmem:[%s303 + $0x98] sm:$0x1]
        %v383 = vld [vmem:[%s303 + $0xa0] sm:$0xff]
        %v384 = vld [vmem:[%s303 + $0xa8] sm:$0x1]
        %v385 = vld [vmem:[%s303 + $0xb0] sm:$0xff]
        %v386 = vld [vmem:[%s303 + $0xb8] sm:$0x1]
        %v387 = vld [vmem:[%s303 + $0xc0] sm:$0xff]
        %v388 = vld [vmem:[%s303 + $0xc8] sm:$0x1]
        %v389 = vld [vmem:[%s303 + $0xd0] sm:$0xff]
        %v390 = vld [vmem:[%s303 + $0xd8] sm:$0x1]
        %v391 = vld [vmem:[%s303 + $0xe0] sm:$0xff]
        %v392 = vld [vmem:[%s303 + $0xe8] sm:$0x1]
        %v393 = vld [vmem:[%s303 + $0xf0] sm:$0xff]
        %v394 = vld [vmem:[%s303 + $0xf8] sm:$0x1]
        %v395 = vld [vmem:[%s303 + $0x100] sm:$0xff]
        %v396 = vld [vmem:[%s303 + $0x108] sm:$0x1]
        %v397 = vld [vmem:[%s303 + $0x110] sm:$0xff]
        %v398 = vld [vmem:[%s303 + $0x118] sm:$0x1]
        %v399 = vld [vmem:[%s1] sm:$0xff]
        %v400 = vld [vmem:[%s1 + $0x8] sm:$0xff]
        %402 = vset.pattern.permute.xlu0 0
        %403 = vperm.xlu0 %402, %v363
        %v404 = vpop.permute.xlu0 %403
        %407 = vset.pattern.permute.xlu0 0
        %408 = vperm.xlu0 %407, %v367
        %v409 = vpop.permute.xlu0 %408
        %412 = vset.pattern.permute.xlu0 0
        %413 = vperm.xlu0 %412, %v371
        %v414 = vpop.permute.xlu0 %413
        %417 = vset.pattern.permute.xlu0 0
        %418 = vperm.xlu0 %417, %v375
        %v419 = vpop.permute.xlu0 %418
        %422 = vset.pattern.permute.xlu0 0
        %423 = vperm.xlu0 %422, %v379
        %v424 = vpop.permute.xlu0 %423
        %427 = vset.pattern.permute.xlu0 0
        %428 = vperm.xlu0 %427, %v383
        %v429 = vpop.permute.xlu0 %428
        %432 = vset.pattern.permute.xlu0 0
        %433 = vperm.xlu0 %432, %v387
        %v434 = vpop.permute.xlu0 %433
        %437 = vset.pattern.permute.xlu0 0
        %438 = vperm.xlu0 %437, %v391
        %v439 = vpop.permute.xlu0 %438
        %v441 = vlaneseq
        %v442 = vshrl.u32 %v441, 7
        %v443 = vsub.s32 0, %v442
        %v444 = vrot.slane %v399, %v443
        %v445 = vmul.f32 %v404, %v444
        %v446 = vmul.f32 %v409, %v444
        %v447 = vmul.f32 %v414, %v444
        %v448 = vmul.f32 %v419, %v444
        %v449 = vmul.f32 %v424, %v444
        %v450 = vmul.f32 %v429, %v444
        %v451 = vmul.f32 %v434, %v444
        %v452 = vmul.f32 %v439, %v444
        %v453 = vadd.f32 %v445, 0.0
        %v454 = vadd.f32 %v446, 0.0
        %v455 = vadd.f32 %v447, 0.0
        %v456 = vadd.f32 %v448, 0.0
        %v457 = vadd.f32 %v449, 0.0
        %v458 = vadd.f32 %v450, 0.0
        %v459 = vadd.f32 %v451, 0.0
        %v460 = vadd.f32 %v452, 0.0
        %461 = vset.pattern.permute.xlu0 1
        %462 = vperm.xlu0 %461, %v363
        %v463 = vpop.permute.xlu0 %462
        %465 = vset.pattern.permute.xlu0 1
        %466 = vperm.xlu0 %465, %v367
        %v467 = vpop.permute.xlu0 %466
        %469 = vset.pattern.permute.xlu0 1
        %470 = vperm.xlu0 %469, %v371
        %v471 = vpop.permute.xlu0 %470
        %473 = vset.pattern.permute.xlu0 1
        %474 = vperm.xlu0 %473, %v375
        %v475 = vpop.permute.xlu0 %474
        %477 = vset.pattern.permute.xlu0 1
        %478 = vperm.xlu0 %477, %v379
        %v479 = vpop.permute.xlu0 %478
        %481 = vset.pattern.permute.xlu0 1
        %482 = vperm.xlu0 %481, %v383
        %v483 = vpop.permute.xlu0 %482
        %485 = vset.pattern.permute.xlu0 1
        %486 = vperm.xlu0 %485, %v387
        %v487 = vpop.permute.xlu0 %486
        %489 = vset.pattern.permute.xlu0 1
        %490 = vperm.xlu0 %489, %v391
        %v491 = vpop.permute.xlu0 %490
        %v493 = vlaneseq
        %v494 = vshrl.u32 %v493, 7
        %v495 = vsub.s32 1, %v494
        %v496 = vrot.slane %v399, %v495
        %v497 = vmul.f32 %v463, %v496
        %v498 = vmul.f32 %v467, %v496
        %v499 = vmul.f32 %v471, %v496
        %v500 = vmul.f32 %v475, %v496
        %v501 = vmul.f32 %v479, %v496
        %v502 = vmul.f32 %v483, %v496
        %v503 = vmul.f32 %v487, %v496
        %v504 = vmul.f32 %v491, %v496
        %v505 = vadd.f32 %v453, %v497
        %v506 = vadd.f32 %v454, %v498
        %v507 = vadd.f32 %v455, %v499
        %v508 = vadd.f32 %v456, %v500
        %v509 = vadd.f32 %v457, %v501
        %v510 = vadd.f32 %v458, %v502
        %v511 = vadd.f32 %v459, %v503
        %v512 = vadd.f32 %v460, %v504
        %514 = vset.pattern.permute.xlu0 0
        %515 = vperm.xlu0 %514, %v364
        %v516 = vpop.permute.xlu0 %515
        %519 = vset.pattern.permute.xlu0 0
        %520 = vperm.xlu0 %519, %v368
        %v521 = vpop.permute.xlu0 %520
        %524 = vset.pattern.permute.xlu0 0
        %525 = vperm.xlu0 %524, %v372
        %v526 = vpop.permute.xlu0 %525
        %529 = vset.pattern.permute.xlu0 0
        %530 = vperm.xlu0 %529, %v376
        %v531 = vpop.permute.xlu0 %530
        %534 = vset.pattern.permute.xlu0 0
        %535 = vperm.xlu0 %534, %v380
        %v536 = vpop.permute.xlu0 %535
        %539 = vset.pattern.permute.xlu0 0
        %540 = vperm.xlu0 %539, %v384
        %v541 = vpop.permute.xlu0 %540
        %544 = vset.pattern.permute.xlu0 0
        %545 = vperm.xlu0 %544, %v388
        %v546 = vpop.permute.xlu0 %545
        %549 = vset.pattern.permute.xlu0 0
        %550 = vperm.xlu0 %549, %v392
        %v551 = vpop.permute.xlu0 %550
        %v553 = vlaneseq
        %v554 = vshrl.u32 %v553, 7
        %v555 = vsub.s32 2, %v554
        %v556 = vrot.slane %v399, %v555
        %v557 = vmul.f32 %v404, %v556
        %v558 = vmul.f32 %v516, %v556
        %v559 = vmul.f32 %v409, %v556
        %v560 = vmul.f32 %v521, %v556
        %v561 = vmul.f32 %v414, %v556
        %v562 = vmul.f32 %v526, %v556
        %v563 = vmul.f32 %v419, %v556
        %v564 = vmul.f32 %v531, %v556
        %v565 = vmul.f32 %v424, %v556
        %v566 = vmul.f32 %v536, %v556
        %v567 = vmul.f32 %v429, %v556
        %v568 = vmul.f32 %v541, %v556
        %v569 = vmul.f32 %v434, %v556
        %v570 = vmul.f32 %v546, %v556
        %v571 = vmul.f32 %v439, %v556
        %v572 = vmul.f32 %v551, %v556
        %vm589 = vcmask 1046528
        %v590 = vrot.slane %v557, 1
        %v591 = vrot.slane %v558, 1
        %v592 = vsel %vm589, %v590, %v591
        %v593 = vrot.slane %v559, 1
        %v594 = vrot.slane %v560, 1
        %v595 = vsel %vm589, %v593, %v594
        %v596 = vrot.slane %v561, 1
        %v597 = vrot.slane %v562, 1
        %v598 = vsel %vm589, %v596, %v597
        %v599 = vrot.slane %v563, 1
        %v600 = vrot.slane %v564, 1
        %v601 = vsel %vm589, %v599, %v600
        %v602 = vrot.slane %v565, 1
        %v603 = vrot.slane %v566, 1
        %v604 = vsel %vm589, %v602, %v603
        %v605 = vrot.slane %v567, 1
        %v606 = vrot.slane %v568, 1
        %v607 = vsel %vm589, %v605, %v606
        %v608 = vrot.slane %v569, 1
        %v609 = vrot.slane %v570, 1
        %v610 = vsel %vm589, %v608, %v609
        %v611 = vrot.slane %v571, 1
        %v612 = vrot.slane %v572, 1
        %v613 = vsel %vm589, %v611, %v612
        %v622 = vadd.f32 %v505, %v592
        %v623 = vadd.f32 %v506, %v595
        %v624 = vadd.f32 %v507, %v598
        %v625 = vadd.f32 %v508, %v601
        %v626 = vadd.f32 %v509, %v604
        %v627 = vadd.f32 %v510, %v607
        %v628 = vadd.f32 %v511, %v610
        %v629 = vadd.f32 %v512, %v613
        %630 = vset.pattern.permute.xlu0 1
        %631 = vperm.xlu0 %630, %v364
        %v632 = vpop.permute.xlu0 %631
        %634 = vset.pattern.permute.xlu0 1
        %635 = vperm.xlu0 %634, %v368
        %v636 = vpop.permute.xlu0 %635
        %638 = vset.pattern.permute.xlu0 1
        %639 = vperm.xlu0 %638, %v372
        %v640 = vpop.permute.xlu0 %639
        %642 = vset.pattern.permute.xlu0 1
        %643 = vperm.xlu0 %642, %v376
        %v644 = vpop.permute.xlu0 %643
        %646 = vset.pattern.permute.xlu0 1
        %647 = vperm.xlu0 %646, %v380
        %v648 = vpop.permute.xlu0 %647
        %650 = vset.pattern.permute.xlu0 1
        %651 = vperm.xlu0 %650, %v384
        %v652 = vpop.permute.xlu0 %651
        %654 = vset.pattern.permute.xlu0 1
        %655 = vperm.xlu0 %654, %v388
        %v656 = vpop.permute.xlu0 %655
        %658 = vset.pattern.permute.xlu0 1
        %659 = vperm.xlu0 %658, %v392
        %v660 = vpop.permute.xlu0 %659
        %v662 = vlaneseq
        %v663 = vshrl.u32 %v662, 7
        %v664 = vsub.s32 3, %v663
        %v665 = vrot.slane %v399, %v664
        %v666 = vmul.f32 %v463, %v665
        %v667 = vmul.f32 %v632, %v665
        %v668 = vmul.f32 %v467, %v665
        %v669 = vmul.f32 %v636, %v665
        %v670 = vmul.f32 %v471, %v665
        %v671 = vmul.f32 %v640, %v665
        %v672 = vmul.f32 %v475, %v665
        %v673 = vmul.f32 %v644, %v665
        %v674 = vmul.f32 %v479, %v665
        %v675 = vmul.f32 %v648, %v665
        %v676 = vmul.f32 %v483, %v665
        %v677 = vmul.f32 %v652, %v665
        %v678 = vmul.f32 %v487, %v665
        %v679 = vmul.f32 %v656, %v665
        %v680 = vmul.f32 %v491, %v665
        %v681 = vmul.f32 %v660, %v665
        %v698 = vrot.slane %v666, 1
        %v699 = vrot.slane %v667, 1
        %v700 = vsel %vm589, %v698, %v699
        %v701 = vrot.slane %v668, 1
        %v702 = vrot.slane %v669, 1
        %v703 = vsel %vm589, %v701, %v702
        %v704 = vrot.slane %v670, 1
        %v705 = vrot.slane %v671, 1
        %v706 = vsel %vm589, %v704, %v705
        %v707 = vrot.slane %v672, 1
        %v708 = vrot.slane %v673, 1
        %v709 = vsel %vm589, %v707, %v708
        %v710 = vrot.slane %v674, 1
        %v711 = vrot.slane %v675, 1
        %v712 = vsel %vm589, %v710, %v711
        %v713 = vrot.slane %v676, 1
        %v714 = vrot.slane %v677, 1
        %v715 = vsel %vm589, %v713, %v714
        %v716 = vrot.slane %v678, 1
        %v717 = vrot.slane %v679, 1
        %v718 = vsel %vm589, %v716, %v717
        %v719 = vrot.slane %v680, 1
        %v720 = vrot.slane %v681, 1
        %v721 = vsel %vm589, %v719, %v720
        %v730 = vadd.f32 %v622, %v700
        %v731 = vadd.f32 %v623, %v703
        %v732 = vadd.f32 %v624, %v706
        %v733 = vadd.f32 %v625, %v709
        %v734 = vadd.f32 %v626, %v712
        %v735 = vadd.f32 %v627, %v715
        %v736 = vadd.f32 %v628, %v718
        %v737 = vadd.f32 %v629, %v721
        %739 = vset.pattern.permute.xlu0 0
        %740 = vperm.xlu0 %739, %v365
        %v741 = vpop.permute.xlu0 %740
        %744 = vset.pattern.permute.xlu0 0
        %745 = vperm.xlu0 %744, %v369
        %v746 = vpop.permute.xlu0 %745
        %749 = vset.pattern.permute.xlu0 0
        %750 = vperm.xlu0 %749, %v373
        %v751 = vpop.permute.xlu0 %750
        %754 = vset.pattern.permute.xlu0 0
        %755 = vperm.xlu0 %754, %v377
        %v756 = vpop.permute.xlu0 %755
        %759 = vset.pattern.permute.xlu0 0
        %760 = vperm.xlu0 %759, %v381
        %v761 = vpop.permute.xlu0 %760
        %764 = vset.pattern.permute.xlu0 0
        %765 = vperm.xlu0 %764, %v385
        %v766 = vpop.permute.xlu0 %765
        %769 = vset.pattern.permute.xlu0 0
        %770 = vperm.xlu0 %769, %v389
        %v771 = vpop.permute.xlu0 %770
        %774 = vset.pattern.permute.xlu0 0
        %775 = vperm.xlu0 %774, %v393
        %v776 = vpop.permute.xlu0 %775
        %v778 = vlaneseq
        %v779 = vshrl.u32 %v778, 7
        %v780 = vsub.s32 4, %v779
        %v781 = vrot.slane %v399, %v780
        %v782 = vmul.f32 %v741, %v781
        %v783 = vmul.f32 %v746, %v781
        %v784 = vmul.f32 %v751, %v781
        %v785 = vmul.f32 %v756, %v781
        %v786 = vmul.f32 %v761, %v781
        %v787 = vmul.f32 %v766, %v781
        %v788 = vmul.f32 %v771, %v781
        %v789 = vmul.f32 %v776, %v781
        %v790 = vadd.f32 %v730, %v782
        %v791 = vadd.f32 %v731, %v783
        %v792 = vadd.f32 %v732, %v784
        %v793 = vadd.f32 %v733, %v785
        %v794 = vadd.f32 %v734, %v786
        %v795 = vadd.f32 %v735, %v787
        %v796 = vadd.f32 %v736, %v788
        %v797 = vadd.f32 %v737, %v789
        %798 = vset.pattern.permute.xlu0 1
        %799 = vperm.xlu0 %798, %v365
        %v800 = vpop.permute.xlu0 %799
        %802 = vset.pattern.permute.xlu0 1
        %803 = vperm.xlu0 %802, %v369
        %v804 = vpop.permute.xlu0 %803
        %806 = vset.pattern.permute.xlu0 1
        %807 = vperm.xlu0 %806, %v373
        %v808 = vpop.permute.xlu0 %807
        %810 = vset.pattern.permute.xlu0 1
        %811 = vperm.xlu0 %810, %v377
        %v812 = vpop.permute.xlu0 %811
        %814 = vset.pattern.permute.xlu0 1
        %815 = vperm.xlu0 %814, %v381
        %v816 = vpop.permute.xlu0 %815
        %818 = vset.pattern.permute.xlu0 1
        %819 = vperm.xlu0 %818, %v385
        %v820 = vpop.permute.xlu0 %819
        %822 = vset.pattern.permute.xlu0 1
        %823 = vperm.xlu0 %822, %v389
        %v824 = vpop.permute.xlu0 %823
        %826 = vset.pattern.permute.xlu0 1
        %827 = vperm.xlu0 %826, %v393
        %v828 = vpop.permute.xlu0 %827
        %v830 = vlaneseq
        %v831 = vshrl.u32 %v830, 7
        %v832 = vsub.s32 5, %v831
        %v833 = vrot.slane %v399, %v832
        %v834 = vmul.f32 %v800, %v833
        %v835 = vmul.f32 %v804, %v833
        %v836 = vmul.f32 %v808, %v833
        %v837 = vmul.f32 %v812, %v833
        %v838 = vmul.f32 %v816, %v833
        %v839 = vmul.f32 %v820, %v833
        %v840 = vmul.f32 %v824, %v833
        %v841 = vmul.f32 %v828, %v833
        %v842 = vadd.f32 %v790, %v834
        %v843 = vadd.f32 %v791, %v835
        %v844 = vadd.f32 %v792, %v836
        %v845 = vadd.f32 %v793, %v837
        %v846 = vadd.f32 %v794, %v838
        %v847 = vadd.f32 %v795, %v839
        %v848 = vadd.f32 %v796, %v840
        %v849 = vadd.f32 %v797, %v841
        %851 = vset.pattern.permute.xlu0 0
        %852 = vperm.xlu0 %851, %v366
        %v853 = vpop.permute.xlu0 %852
        %856 = vset.pattern.permute.xlu0 0
        %857 = vperm.xlu0 %856, %v370
        %v858 = vpop.permute.xlu0 %857
        %861 = vset.pattern.permute.xlu0 0
        %862 = vperm.xlu0 %861, %v374
        %v863 = vpop.permute.xlu0 %862
        %866 = vset.pattern.permute.xlu0 0
        %867 = vperm.xlu0 %866, %v378
        %v868 = vpop.permute.xlu0 %867
        %871 = vset.pattern.permute.xlu0 0
        %872 = vperm.xlu0 %871, %v382
        %v873 = vpop.permute.xlu0 %872
        %876 = vset.pattern.permute.xlu0 0
        %877 = vperm.xlu0 %876, %v386
        %v878 = vpop.permute.xlu0 %877
        %881 = vset.pattern.permute.xlu0 0
        %882 = vperm.xlu0 %881, %v390
        %v883 = vpop.permute.xlu0 %882
        %886 = vset.pattern.permute.xlu0 0
        %887 = vperm.xlu0 %886, %v394
        %v888 = vpop.permute.xlu0 %887
        %v890 = vlaneseq
        %v891 = vshrl.u32 %v890, 7
        %v892 = vsub.s32 6, %v891
        %v893 = vrot.slane %v399, %v892
        %v894 = vmul.f32 %v741, %v893
        %v895 = vmul.f32 %v853, %v893
        %v896 = vmul.f32 %v746, %v893
        %v897 = vmul.f32 %v858, %v893
        %v898 = vmul.f32 %v751, %v893
        %v899 = vmul.f32 %v863, %v893
        %v900 = vmul.f32 %v756, %v893
        %v901 = vmul.f32 %v868, %v893
        %v902 = vmul.f32 %v761, %v893
        %v903 = vmul.f32 %v873, %v893
        %v904 = vmul.f32 %v766, %v893
        %v905 = vmul.f32 %v878, %v893
        %v906 = vmul.f32 %v771, %v893
        %v907 = vmul.f32 %v883, %v893
        %v908 = vmul.f32 %v776, %v893
        %v909 = vmul.f32 %v888, %v893
        %v926 = vrot.slane %v894, 1
        %v927 = vrot.slane %v895, 1
        %v928 = vsel %vm589, %v926, %v927
        %v929 = vrot.slane %v896, 1
        %v930 = vrot.slane %v897, 1
        %v931 = vsel %vm589, %v929, %v930
        %v932 = vrot.slane %v898, 1
        %v933 = vrot.slane %v899, 1
        %v934 = vsel %vm589, %v932, %v933
        %v935 = vrot.slane %v900, 1
        %v936 = vrot.slane %v901, 1
        %v937 = vsel %vm589, %v935, %v936
        %v938 = vrot.slane %v902, 1
        %v939 = vrot.slane %v903, 1
        %v940 = vsel %vm589, %v938, %v939
        %v941 = vrot.slane %v904, 1
        %v942 = vrot.slane %v905, 1
        %v943 = vsel %vm589, %v941, %v942
        %v944 = vrot.slane %v906, 1
        %v945 = vrot.slane %v907, 1
        %v946 = vsel %vm589, %v944, %v945
        %v947 = vrot.slane %v908, 1
        %v948 = vrot.slane %v909, 1
        %v949 = vsel %vm589, %v947, %v948
        %v958 = vadd.f32 %v842, %v928
        %v959 = vadd.f32 %v843, %v931
        %v960 = vadd.f32 %v844, %v934
        %v961 = vadd.f32 %v845, %v937
        %v962 = vadd.f32 %v846, %v940
        %v963 = vadd.f32 %v847, %v943
        %v964 = vadd.f32 %v848, %v946
        %v965 = vadd.f32 %v849, %v949
        %966 = vset.pattern.permute.xlu0 1
        %967 = vperm.xlu0 %966, %v366
        %v968 = vpop.permute.xlu0 %967
        %970 = vset.pattern.permute.xlu0 1
        %971 = vperm.xlu0 %970, %v370
        %v972 = vpop.permute.xlu0 %971
        %974 = vset.pattern.permute.xlu0 1
        %975 = vperm.xlu0 %974, %v374
        %v976 = vpop.permute.xlu0 %975
        %978 = vset.pattern.permute.xlu0 1
        %979 = vperm.xlu0 %978, %v378
        %v980 = vpop.permute.xlu0 %979
        %982 = vset.pattern.permute.xlu0 1
        %983 = vperm.xlu0 %982, %v382
        %v984 = vpop.permute.xlu0 %983
        %986 = vset.pattern.permute.xlu0 1
        %987 = vperm.xlu0 %986, %v386
        %v988 = vpop.permute.xlu0 %987
        %990 = vset.pattern.permute.xlu0 1
        %991 = vperm.xlu0 %990, %v390
        %v992 = vpop.permute.xlu0 %991
        %994 = vset.pattern.permute.xlu0 1
        %995 = vperm.xlu0 %994, %v394
        %v996 = vpop.permute.xlu0 %995
        %v998 = vlaneseq
        %v999 = vshrl.u32 %v998, 7
        %v1000 = vsub.s32 7, %v999
        %v1001 = vrot.slane %v399, %v1000
        %v1002 = vmul.f32 %v800, %v1001
        %v1003 = vmul.f32 %v968, %v1001
        %v1004 = vmul.f32 %v804, %v1001
        %v1005 = vmul.f32 %v972, %v1001
        %v1006 = vmul.f32 %v808, %v1001
        %v1007 = vmul.f32 %v976, %v1001
        %v1008 = vmul.f32 %v812, %v1001
        %v1009 = vmul.f32 %v980, %v1001
        %v1010 = vmul.f32 %v816, %v1001
        %v1011 = vmul.f32 %v984, %v1001
        %v1012 = vmul.f32 %v820, %v1001
        %v1013 = vmul.f32 %v988, %v1001
        %v1014 = vmul.f32 %v824, %v1001
        %v1015 = vmul.f32 %v992, %v1001
        %v1016 = vmul.f32 %v828, %v1001
        %v1017 = vmul.f32 %v996, %v1001
        %v1034 = vrot.slane %v1002, 1
        %v1035 = vrot.slane %v1003, 1
        %v1036 = vsel %vm589, %v1034, %v1035
        %v1037 = vrot.slane %v1004, 1
        %v1038 = vrot.slane %v1005, 1
        %v1039 = vsel %vm589, %v1037, %v1038
        %v1040 = vrot.slane %v1006, 1
        %v1041 = vrot.slane %v1007, 1
        %v1042 = vsel %vm589, %v1040, %v1041
        %v1043 = vrot.slane %v1008, 1
        %v1044 = vrot.slane %v1009, 1
        %v1045 = vsel %vm589, %v1043, %v1044
        %v1046 = vrot.slane %v1010, 1
        %v1047 = vrot.slane %v1011, 1
        %v1048 = vsel %vm589, %v1046, %v1047
        %v1049 = vrot.slane %v1012, 1
        %v1050 = vrot.slane %v1013, 1
        %v1051 = vsel %vm589, %v1049, %v1050
        %v1052 = vrot.slane %v1014, 1
        %v1053 = vrot.slane %v1015, 1
        %v1054 = vsel %vm589, %v1052, %v1053
        %v1055 = vrot.slane %v1016, 1
        %v1056 = vrot.slane %v1017, 1
        %v1057 = vsel %vm589, %v1055, %v1056
        %v1066 = vadd.f32 %v958, %v1036
        %v1067 = vadd.f32 %v959, %v1039
        %v1068 = vadd.f32 %v960, %v1042
        %v1069 = vadd.f32 %v961, %v1045
        %v1070 = vadd.f32 %v962, %v1048
        %v1071 = vadd.f32 %v963, %v1051
        %v1072 = vadd.f32 %v964, %v1054
        %v1073 = vadd.f32 %v965, %v1057
        %1075 = vset.pattern.permute.xlu0 0
        %1076 = vperm.xlu0 %1075, %v395
        %v1077 = vpop.permute.xlu0 %1076
        %v1079 = vlaneseq
        %v1080 = vshrl.u32 %v1079, 7
        %v1081 = vsub.s32 0, %v1080
        %v1082 = vrot.slane %v400, %v1081
        %v1083 = vmul.f32 %v409, %v1082
        %v1084 = vmul.f32 %v414, %v1082
        %v1085 = vmul.f32 %v419, %v1082
        %v1086 = vmul.f32 %v424, %v1082
        %v1087 = vmul.f32 %v429, %v1082
        %v1088 = vmul.f32 %v434, %v1082
        %v1089 = vmul.f32 %v439, %v1082
        %v1090 = vmul.f32 %v1077, %v1082
        %v1091 = vadd.f32 %v1066, %v1083
        %v1092 = vadd.f32 %v1067, %v1084
        %v1093 = vadd.f32 %v1068, %v1085
        %v1094 = vadd.f32 %v1069, %v1086
        %v1095 = vadd.f32 %v1070, %v1087
        %v1096 = vadd.f32 %v1071, %v1088
        %v1097 = vadd.f32 %v1072, %v1089
        %v1098 = vadd.f32 %v1073, %v1090
        %1099 = vset.pattern.permute.xlu0 1
        %1100 = vperm.xlu0 %1099, %v395
        %v1101 = vpop.permute.xlu0 %1100
        %v1103 = vlaneseq
        %v1104 = vshrl.u32 %v1103, 7
        %v1105 = vsub.s32 1, %v1104
        %v1106 = vrot.slane %v400, %v1105
        %v1107 = vmul.f32 %v467, %v1106
        %v1108 = vmul.f32 %v471, %v1106
        %v1109 = vmul.f32 %v475, %v1106
        %v1110 = vmul.f32 %v479, %v1106
        %v1111 = vmul.f32 %v483, %v1106
        %v1112 = vmul.f32 %v487, %v1106
        %v1113 = vmul.f32 %v491, %v1106
        %v1114 = vmul.f32 %v1101, %v1106
        %v1115 = vadd.f32 %v1091, %v1107
        %v1116 = vadd.f32 %v1092, %v1108
        %v1117 = vadd.f32 %v1093, %v1109
        %v1118 = vadd.f32 %v1094, %v1110
        %v1119 = vadd.f32 %v1095, %v1111
        %v1120 = vadd.f32 %v1096, %v1112
        %v1121 = vadd.f32 %v1097, %v1113
        %v1122 = vadd.f32 %v1098, %v1114
        %1124 = vset.pattern.permute.xlu0 0
        %1125 = vperm.xlu0 %1124, %v396
        %v1126 = vpop.permute.xlu0 %1125
        %v1128 = vlaneseq
        %v1129 = vshrl.u32 %v1128, 7
        %v1130 = vsub.s32 2, %v1129
        %v1131 = vrot.slane %v400, %v1130
        %v1132 = vmul.f32 %v409, %v1131
        %v1133 = vmul.f32 %v521, %v1131
        %v1134 = vmul.f32 %v414, %v1131
        %v1135 = vmul.f32 %v526, %v1131
        %v1136 = vmul.f32 %v419, %v1131
        %v1137 = vmul.f32 %v531, %v1131
        %v1138 = vmul.f32 %v424, %v1131
        %v1139 = vmul.f32 %v536, %v1131
        %v1140 = vmul.f32 %v429, %v1131
        %v1141 = vmul.f32 %v541, %v1131
        %v1142 = vmul.f32 %v434, %v1131
        %v1143 = vmul.f32 %v546, %v1131
        %v1144 = vmul.f32 %v439, %v1131
        %v1145 = vmul.f32 %v551, %v1131
        %v1146 = vmul.f32 %v1077, %v1131
        %v1147 = vmul.f32 %v1126, %v1131
        %v1164 = vrot.slane %v1132, 1
        %v1165 = vrot.slane %v1133, 1
        %v1166 = vsel %vm589, %v1164, %v1165
        %v1167 = vrot.slane %v1134, 1
        %v1168 = vrot.slane %v1135, 1
        %v1169 = vsel %vm589, %v1167, %v1168
        %v1170 = vrot.slane %v1136, 1
        %v1171 = vrot.slane %v1137, 1
        %v1172 = vsel %vm589, %v1170, %v1171
        %v1173 = vrot.slane %v1138, 1
        %v1174 = vrot.slane %v1139, 1
        %v1175 = vsel %vm589, %v1173, %v1174
        %v1176 = vrot.slane %v1140, 1
        %v1177 = vrot.slane %v1141, 1
        %v1178 = vsel %vm589, %v1176, %v1177
        %v1179 = vrot.slane %v1142, 1
        %v1180 = vrot.slane %v1143, 1
        %v1181 = vsel %vm589, %v1179, %v1180
        %v1182 = vrot.slane %v1144, 1
        %v1183 = vrot.slane %v1145, 1
        %v1184 = vsel %vm589, %v1182, %v1183
        %v1185 = vrot.slane %v1146, 1
        %v1186 = vrot.slane %v1147, 1
        %v1187 = vsel %vm589, %v1185, %v1186
        %v1196 = vadd.f32 %v1115, %v1166
        %v1197 = vadd.f32 %v1116, %v1169
        %v1198 = vadd.f32 %v1117, %v1172
        %v1199 = vadd.f32 %v1118, %v1175
        %v1200 = vadd.f32 %v1119, %v1178
        %v1201 = vadd.f32 %v1120, %v1181
        %v1202 = vadd.f32 %v1121, %v1184
        %v1203 = vadd.f32 %v1122, %v1187
        %1204 = vset.pattern.permute.xlu0 1
        %1205 = vperm.xlu0 %1204, %v396
        %v1206 = vpop.permute.xlu0 %1205
        %v1208 = vlaneseq
        %v1209 = vshrl.u32 %v1208, 7
        %v1210 = vsub.s32 3, %v1209
        %v1211 = vrot.slane %v400, %v1210
        %v1212 = vmul.f32 %v467, %v1211
        %v1213 = vmul.f32 %v636, %v1211
        %v1214 = vmul.f32 %v471, %v1211
        %v1215 = vmul.f32 %v640, %v1211
        %v1216 = vmul.f32 %v475, %v1211
        %v1217 = vmul.f32 %v644, %v1211
        %v1218 = vmul.f32 %v479, %v1211
        %v1219 = vmul.f32 %v648, %v1211
        %v1220 = vmul.f32 %v483, %v1211
        %v1221 = vmul.f32 %v652, %v1211
        %v1222 = vmul.f32 %v487, %v1211
        %v1223 = vmul.f32 %v656, %v1211
        %v1224 = vmul.f32 %v491, %v1211
        %v1225 = vmul.f32 %v660, %v1211
        %v1226 = vmul.f32 %v1101, %v1211
        %v1227 = vmul.f32 %v1206, %v1211
        %v1244 = vrot.slane %v1212, 1
        %v1245 = vrot.slane %v1213, 1
        %v1246 = vsel %vm589, %v1244, %v1245
        %v1247 = vrot.slane %v1214, 1
        %v1248 = vrot.slane %v1215, 1
        %v1249 = vsel %vm589, %v1247, %v1248
        %v1250 = vrot.slane %v1216, 1
        %v1251 = vrot.slane %v1217, 1
        %v1252 = vsel %vm589, %v1250, %v1251
        %v1253 = vrot.slane %v1218, 1
        %v1254 = vrot.slane %v1219, 1
        %v1255 = vsel %vm589, %v1253, %v1254
        %v1256 = vrot.slane %v1220, 1
        %v1257 = vrot.slane %v1221, 1
        %v1258 = vsel %vm589, %v1256, %v1257
        %v1259 = vrot.slane %v1222, 1
        %v1260 = vrot.slane %v1223, 1
        %v1261 = vsel %vm589, %v1259, %v1260
        %v1262 = vrot.slane %v1224, 1
        %v1263 = vrot.slane %v1225, 1
        %v1264 = vsel %vm589, %v1262, %v1263
        %v1265 = vrot.slane %v1226, 1
        %v1266 = vrot.slane %v1227, 1
        %v1267 = vsel %vm589, %v1265, %v1266
        %v1276 = vadd.f32 %v1196, %v1246
        %v1277 = vadd.f32 %v1197, %v1249
        %v1278 = vadd.f32 %v1198, %v1252
        %v1279 = vadd.f32 %v1199, %v1255
        %v1280 = vadd.f32 %v1200, %v1258
        %v1281 = vadd.f32 %v1201, %v1261
        %v1282 = vadd.f32 %v1202, %v1264
        %v1283 = vadd.f32 %v1203, %v1267
        %1285 = vset.pattern.permute.xlu0 0
        %1286 = vperm.xlu0 %1285, %v397
        %v1287 = vpop.permute.xlu0 %1286
        %v1289 = vlaneseq
        %v1290 = vshrl.u32 %v1289, 7
        %v1291 = vsub.s32 4, %v1290
        %v1292 = vrot.slane %v400, %v1291
        %v1293 = vmul.f32 %v746, %v1292
        %v1294 = vmul.f32 %v751, %v1292
        %v1295 = vmul.f32 %v756, %v1292
        %v1296 = vmul.f32 %v761, %v1292
        %v1297 = vmul.f32 %v766, %v1292
        %v1298 = vmul.f32 %v771, %v1292
        %v1299 = vmul.f32 %v776, %v1292
        %v1300 = vmul.f32 %v1287, %v1292
        %v1301 = vadd.f32 %v1276, %v1293
        %v1302 = vadd.f32 %v1277, %v1294
        %v1303 = vadd.f32 %v1278, %v1295
        %v1304 = vadd.f32 %v1279, %v1296
        %v1305 = vadd.f32 %v1280, %v1297
        %v1306 = vadd.f32 %v1281, %v1298
        %v1307 = vadd.f32 %v1282, %v1299
        %v1308 = vadd.f32 %v1283, %v1300
        %1309 = vset.pattern.permute.xlu0 1
        %1310 = vperm.xlu0 %1309, %v397
        %v1311 = vpop.permute.xlu0 %1310
        %v1313 = vlaneseq
        %v1314 = vshrl.u32 %v1313, 7
        %v1315 = vsub.s32 5, %v1314
        %v1316 = vrot.slane %v400, %v1315
        %v1317 = vmul.f32 %v804, %v1316
        %v1318 = vmul.f32 %v808, %v1316
        %v1319 = vmul.f32 %v812, %v1316
        %v1320 = vmul.f32 %v816, %v1316
        %v1321 = vmul.f32 %v820, %v1316
        %v1322 = vmul.f32 %v824, %v1316
        %v1323 = vmul.f32 %v828, %v1316
        %v1324 = vmul.f32 %v1311, %v1316
        %v1325 = vadd.f32 %v1301, %v1317
        %v1326 = vadd.f32 %v1302, %v1318
        %v1327 = vadd.f32 %v1303, %v1319
        %v1328 = vadd.f32 %v1304, %v1320
        %v1329 = vadd.f32 %v1305, %v1321
        %v1330 = vadd.f32 %v1306, %v1322
        %v1331 = vadd.f32 %v1307, %v1323
        %v1332 = vadd.f32 %v1308, %v1324
        %1334 = vset.pattern.permute.xlu0 0
        %1335 = vperm.xlu0 %1334, %v398
        %v1336 = vpop.permute.xlu0 %1335
        %v1338 = vlaneseq
        %v1339 = vshrl.u32 %v1338, 7
        %v1340 = vsub.s32 6, %v1339
        %v1341 = vrot.slane %v400, %v1340
        %v1342 = vmul.f32 %v746, %v1341
        %v1343 = vmul.f32 %v858, %v1341
        %v1344 = vmul.f32 %v751, %v1341
        %v1345 = vmul.f32 %v863, %v1341
        %v1346 = vmul.f32 %v756, %v1341
        %v1347 = vmul.f32 %v868, %v1341
        %v1348 = vmul.f32 %v761, %v1341
        %v1349 = vmul.f32 %v873, %v1341
        %v1350 = vmul.f32 %v766, %v1341
        %v1351 = vmul.f32 %v878, %v1341
        %v1352 = vmul.f32 %v771, %v1341
        %v1353 = vmul.f32 %v883, %v1341
        %v1354 = vmul.f32 %v776, %v1341
        %v1355 = vmul.f32 %v888, %v1341
        %v1356 = vmul.f32 %v1287, %v1341
        %v1357 = vmul.f32 %v1336, %v1341
        %v1374 = vrot.slane %v1342, 1
        %v1375 = vrot.slane %v1343, 1
        %v1376 = vsel %vm589, %v1374, %v1375
        %v1377 = vrot.slane %v1344, 1
        %v1378 = vrot.slane %v1345, 1
        %v1379 = vsel %vm589, %v1377, %v1378
        %v1380 = vrot.slane %v1346, 1
        %v1381 = vrot.slane %v1347, 1
        %v1382 = vsel %vm589, %v1380, %v1381
        %v1383 = vrot.slane %v1348, 1
        %v1384 = vrot.slane %v1349, 1
        %v1385 = vsel %vm589, %v1383, %v1384
        %v1386 = vrot.slane %v1350, 1
        %v1387 = vrot.slane %v1351, 1
        %v1388 = vsel %vm589, %v1386, %v1387
        %v1389 = vrot.slane %v1352, 1
        %v1390 = vrot.slane %v1353, 1
        %v1391 = vsel %vm589, %v1389, %v1390
        %v1392 = vrot.slane %v1354, 1
        %v1393 = vrot.slane %v1355, 1
        %v1394 = vsel %vm589, %v1392, %v1393
        %v1395 = vrot.slane %v1356, 1
        %v1396 = vrot.slane %v1357, 1
        %v1397 = vsel %vm589, %v1395, %v1396
        %v1406 = vadd.f32 %v1325, %v1376
        %v1407 = vadd.f32 %v1326, %v1379
        %v1408 = vadd.f32 %v1327, %v1382
        %v1409 = vadd.f32 %v1328, %v1385
        %v1410 = vadd.f32 %v1329, %v1388
        %v1411 = vadd.f32 %v1330, %v1391
        %v1412 = vadd.f32 %v1331, %v1394
        %v1413 = vadd.f32 %v1332, %v1397
        %1414 = vset.pattern.permute.xlu0 1
        %1415 = vperm.xlu0 %1414, %v398
        %v1416 = vpop.permute.xlu0 %1415
        %v1418 = vlaneseq
        %v1419 = vshrl.u32 %v1418, 7
        %v1420 = vsub.s32 7, %v1419
        %v1421 = vrot.slane %v400, %v1420
        %v1422 = vmul.f32 %v804, %v1421
        %v1423 = vmul.f32 %v972, %v1421
        %v1424 = vmul.f32 %v808, %v1421
        %v1425 = vmul.f32 %v976, %v1421
        %v1426 = vmul.f32 %v812, %v1421
        %v1427 = vmul.f32 %v980, %v1421
        %v1428 = vmul.f32 %v816, %v1421
        %v1429 = vmul.f32 %v984, %v1421
        %v1430 = vmul.f32 %v820, %v1421
        %v1431 = vmul.f32 %v988, %v1421
        %v1432 = vmul.f32 %v824, %v1421
        %v1433 = vmul.f32 %v992, %v1421
        %v1434 = vmul.f32 %v828, %v1421
        %v1435 = vmul.f32 %v996, %v1421
        %v1436 = vmul.f32 %v1311, %v1421
        %v1437 = vmul.f32 %v1416, %v1421
        %v1454 = vrot.slane %v1422, 1
        %v1455 = vrot.slane %v1423, 1
        %v1456 = vsel %vm589, %v1454, %v1455
        %v1457 = vrot.slane %v1424, 1
        %v1458 = vrot.slane %v1425, 1
        %v1459 = vsel %vm589, %v1457, %v1458
        %v1460 = vrot.slane %v1426, 1
        %v1461 = vrot.slane %v1427, 1
        %v1462 = vsel %vm589, %v1460, %v1461
        %v1463 = vrot.slane %v1428, 1
        %v1464 = vrot.slane %v1429, 1
        %v1465 = vsel %vm589, %v1463, %v1464
        %v1466 = vrot.slane %v1430, 1
        %v1467 = vrot.slane %v1431, 1
        %v1468 = vsel %vm589, %v1466, %v1467
        %v1469 = vrot.slane %v1432, 1
        %v1470 = vrot.slane %v1433, 1
        %v1471 = vsel %vm589, %v1469, %v1470
        %v1472 = vrot.slane %v1434, 1
        %v1473 = vrot.slane %v1435, 1
        %v1474 = vsel %vm589, %v1472, %v1473
        %v1475 = vrot.slane %v1436, 1
        %v1476 = vrot.slane %v1437, 1
        %v1477 = vsel %vm589, %v1475, %v1476
        %v1486 = vadd.f32 %v1406, %v1456
        %v1487 = vadd.f32 %v1407, %v1459
        %v1488 = vadd.f32 %v1408, %v1462
        %v1489 = vadd.f32 %v1409, %v1465
        %v1490 = vadd.f32 %v1410, %v1468
        %v1491 = vadd.f32 %v1411, %v1471
        %v1492 = vadd.f32 %v1412, %v1474
        %v1493 = vadd.f32 %v1413, %v1477
        %v1494 = vld [vmem:[%s2] sm:$0x1]
        %v1496 = vlaneseq
        %v1497 = vshrl.u32 %v1496, 7
        %v1498 = vsub.s32 0, %v1497
        %v1499 = vrot.slane %v1494, %v1498
        %v1501 = vadd.f32 %v1486, %v1499
        %v1502 = vadd.f32 %v1487, %v1499
        %v1503 = vadd.f32 %v1488, %v1499
        %v1504 = vadd.f32 %v1489, %v1499
        %v1505 = vadd.f32 %v1490, %v1499
        %v1506 = vadd.f32 %v1491, %v1499
        %v1507 = vadd.f32 %v1492, %v1499
        %v1508 = vadd.f32 %v1493, %v1499
        %v1509 = vmul.f32 %v1501, 0.01
        %v1510 = vmul.f32 %v1502, 0.01
        %v1511 = vmul.f32 %v1503, 0.01
        %v1512 = vmul.f32 %v1504, 0.01
        %v1513 = vmul.f32 %v1505, 0.01
        %v1514 = vmul.f32 %v1506, 0.01
        %v1515 = vmul.f32 %v1507, 0.01
        %v1516 = vmul.f32 %v1508, 0.01
        %v1517 = vmax.f32 %v1501, %v1509
        %v1518 = vmax.f32 %v1502, %v1510
        %v1519 = vmax.f32 %v1503, %v1511
        %v1520 = vmax.f32 %v1504, %v1512
        %v1521 = vmax.f32 %v1505, %v1513
        %v1522 = vmax.f32 %v1506, %v1514
        %v1523 = vmax.f32 %v1507, %v1515
        %v1524 = vmax.f32 %v1508, %v1516
        %s1525 = scalar_lea.vmem [#allocation2], 16
        %1526 = vst.msk [vmem:[%s1525 + $0x1] sm:$0xff] %vm305, %v1517
        %1527 = vst.msk [vmem:[%s1525 + $0x11] sm:$0xff] %vm305, %v1518
        %1528 = vst.msk [vmem:[%s1525 + $0x21] sm:$0xff] %vm305, %v1519
        %1529 = vst.msk [vmem:[%s1525 + $0x31] sm:$0xff] %vm305, %v1520
        %1530 = vst.msk [vmem:[%s1525 + $0x41] sm:$0xff] %vm305, %v1521
        %1531 = vst.msk [vmem:[%s1525 + $0x51] sm:$0xff] %vm305, %v1522
        %1532 = vst.msk [vmem:[%s1525 + $0x61] sm:$0xff] %vm305, %v1523
        %1533 = vst.msk [vmem:[%s1525 + $0x71] sm:$0xff] %vm305, %v1524
        %v1534 = vld [vmem:[#allocation2] sm:$0xff]
        %v1535 = vld [vmem:[#allocation2 + $0x8] sm:$0x3]
        %v1536 = vld [vmem:[#allocation2 + $0x10] sm:$0xff]
        %v1537 = vld [vmem:[#allocation2 + $0x18] sm:$0x3]
        %v1538 = vld [vmem:[#allocation2 + $0x20] sm:$0xff]
        %v1539 = vld [vmem:[#allocation2 + $0x28] sm:$0x3]
        %v1540 = vld [vmem:[#allocation2 + $0x30] sm:$0xff]
        %v1541 = vld [vmem:[#allocation2 + $0x38] sm:$0x3]
        %v1542 = vld [vmem:[#allocation2 + $0x40] sm:$0xff]
        %v1543 = vld [vmem:[#allocation2 + $0x48] sm:$0x3]
        %v1544 = vld [vmem:[#allocation2 + $0x50] sm:$0xff]
        %v1545 = vld [vmem:[#allocation2 + $0x58] sm:$0x3]
        %v1546 = vld [vmem:[#allocation2 + $0x60] sm:$0xff]
        %v1547 = vld [vmem:[#allocation2 + $0x68] sm:$0x3]
        %v1548 = vld [vmem:[#allocation2 + $0x70] sm:$0xff]
        %v1549 = vld [vmem:[#allocation2 + $0x78] sm:$0x3]
        %v1550 = vld [vmem:[#allocation2 + $0x80] sm:$0xff]
        %v1551 = vld [vmem:[#allocation2 + $0x88] sm:$0x3]
        %v1552 = vld [vmem:[#allocation2 + $0x90] sm:$0xff]
        %v1553 = vld [vmem:[#allocation2 + $0x98] sm:$0x3]
        %v1574 = vcombine.high %v1534, %v1534
        %v1576 = vunpack.c.l.s4 1983009808
        %v1577 = vunpack.c.0.s8 %v1576
        %v1578 = vlaneseq
        %v1579 = vshrl.u32 %v1578, 7
        %v1580 = vsub.s32 %v1577, %v1579
        %v1581 = vrot.slane %v1534, %v1580
        %v1583 = vunpack.c.l.s4 1983009808
        %v1584 = vunpack.c.0.s8 %v1583
        %v1585 = vlaneseq
        %v1586 = vshrl.u32 %v1585, 7
        %v1587 = vsub.s32 %v1584, %v1586
        %v1588 = vrot.slane %v1574, %v1587
        %v1589 = vcombine.high %v1581, %v1581
        %v1590 = vcombine.high %v1588, %v1588
        %v1592 = vunpack.c.l.s4 1983009808
        %v1593 = vunpack.c.0.s8 %v1592
        %v1594 = vlaneseq
        %v1595 = vshrl.u32 %v1594, 7
        %v1596 = vsub.s32 %v1593, %v1595
        %v1597 = vrot.slane %v1535, %v1596
        %v1598 = vcombine.high %v1536, %v1536
        %v1600 = vunpack.c.l.s4 1983009808
        %v1601 = vunpack.c.0.s8 %v1600
        %v1602 = vlaneseq
        %v1603 = vshrl.u32 %v1602, 7
        %v1604 = vsub.s32 %v1601, %v1603
        %v1605 = vrot.slane %v1536, %v1604
        %v1607 = vunpack.c.l.s4 1983009808
        %v1608 = vunpack.c.0.s8 %v1607
        %v1609 = vlaneseq
        %v1610 = vshrl.u32 %v1609, 7
        %v1611 = vsub.s32 %v1608, %v1610
        %v1612 = vrot.slane %v1598, %v1611
        %v1613 = vcombine.high %v1605, %v1605
        %v1614 = vcombine.high %v1612, %v1612
        %v1616 = vunpack.c.l.s4 1983009808
        %v1617 = vunpack.c.0.s8 %v1616
        %v1618 = vlaneseq
        %v1619 = vshrl.u32 %v1618, 7
        %v1620 = vsub.s32 %v1617, %v1619
        %v1621 = vrot.slane %v1537, %v1620
        %v1622 = vcombine.high %v1538, %v1538
        %v1624 = vunpack.c.l.s4 1983009808
        %v1625 = vunpack.c.0.s8 %v1624
        %v1626 = vlaneseq
        %v1627 = vshrl.u32 %v1626, 7
        %v1628 = vsub.s32 %v1625, %v1627
        %v1629 = vrot.slane %v1538, %v1628
        %v1631 = vunpack.c.l.s4 1983009808
        %v1632 = vunpack.c.0.s8 %v1631
        %v1633 = vlaneseq
        %v1634 = vshrl.u32 %v1633, 7
        %v1635 = vsub.s32 %v1632, %v1634
        %v1636 = vrot.slane %v1622, %v1635
        %v1637 = vcombine.high %v1629, %v1629
        %v1638 = vcombine.high %v1636, %v1636
        %v1640 = vunpack.c.l.s4 1983009808
        %v1641 = vunpack.c.0.s8 %v1640
        %v1642 = vlaneseq
        %v1643 = vshrl.u32 %v1642, 7
        %v1644 = vsub.s32 %v1641, %v1643
        %v1645 = vrot.slane %v1539, %v1644
        %v1646 = vcombine.high %v1540, %v1540
        %v1648 = vunpack.c.l.s4 1983009808
        %v1649 = vunpack.c.0.s8 %v1648
        %v1650 = vlaneseq
        %v1651 = vshrl.u32 %v1650, 7
        %v1652 = vsub.s32 %v1649, %v1651
        %v1653 = vrot.slane %v1540, %v1652
        %v1655 = vunpack.c.l.s4 1983009808
        %v1656 = vunpack.c.0.s8 %v1655
        %v1657 = vlaneseq
        %v1658 = vshrl.u32 %v1657, 7
        %v1659 = vsub.s32 %v1656, %v1658
        %v1660 = vrot.slane %v1646, %v1659
        %v1661 = vcombine.high %v1653, %v1653
        %v1662 = vcombine.high %v1660, %v1660
        %v1664 = vunpack.c.l.s4 1983009808
        %v1665 = vunpack.c.0.s8 %v1664
        %v1666 = vlaneseq
        %v1667 = vshrl.u32 %v1666, 7
        %v1668 = vsub.s32 %v1665, %v1667
        %v1669 = vrot.slane %v1541, %v1668
        %v1670 = vcombine.high %v1542, %v1542
        %v1672 = vunpack.c.l.s4 1983009808
        %v1673 = vunpack.c.0.s8 %v1672
        %v1674 = vlaneseq
        %v1675 = vshrl.u32 %v1674, 7
        %v1676 = vsub.s32 %v1673, %v1675
        %v1677 = vrot.slane %v1542, %v1676
        %v1679 = vunpack.c.l.s4 1983009808
        %v1680 = vunpack.c.0.s8 %v1679
        %v1681 = vlaneseq
        %v1682 = vshrl.u32 %v1681, 7
        %v1683 = vsub.s32 %v1680, %v1682
        %v1684 = vrot.slane %v1670, %v1683
        %v1685 = vcombine.high %v1677, %v1677
        %v1686 = vcombine.high %v1684, %v1684
        %v1688 = vunpack.c.l.s4 1983009808
        %v1689 = vunpack.c.0.s8 %v1688
        %v1690 = vlaneseq
        %v1691 = vshrl.u32 %v1690, 7
        %v1692 = vsub.s32 %v1689, %v1691
        %v1693 = vrot.slane %v1543, %v1692
        %v1694 = vcombine.high %v1544, %v1544
        %v1696 = vunpack.c.l.s4 1983009808
        %v1697 = vunpack.c.0.s8 %v1696
        %v1698 = vlaneseq
        %v1699 = vshrl.u32 %v1698, 7
        %v1700 = vsub.s32 %v1697, %v1699
        %v1701 = vrot.slane %v1544, %v1700
        %v1703 = vunpack.c.l.s4 1983009808
        %v1704 = vunpack.c.0.s8 %v1703
        %v1705 = vlaneseq
        %v1706 = vshrl.u32 %v1705, 7
        %v1707 = vsub.s32 %v1704, %v1706
        %v1708 = vrot.slane %v1694, %v1707
        %v1709 = vcombine.high %v1701, %v1701
        %v1710 = vcombine.high %v1708, %v1708
        %v1712 = vunpack.c.l.s4 1983009808
        %v1713 = vunpack.c.0.s8 %v1712
        %v1714 = vlaneseq
        %v1715 = vshrl.u32 %v1714, 7
        %v1716 = vsub.s32 %v1713, %v1715
        %v1717 = vrot.slane %v1545, %v1716
        %v1718 = vcombine.high %v1546, %v1546
        %v1720 = vunpack.c.l.s4 1983009808
        %v1721 = vunpack.c.0.s8 %v1720
        %v1722 = vlaneseq
        %v1723 = vshrl.u32 %v1722, 7
        %v1724 = vsub.s32 %v1721, %v1723
        %v1725 = vrot.slane %v1546, %v1724
        %v1727 = vunpack.c.l.s4 1983009808
        %v1728 = vunpack.c.0.s8 %v1727
        %v1729 = vlaneseq
        %v1730 = vshrl.u32 %v1729, 7
        %v1731 = vsub.s32 %v1728, %v1730
        %v1732 = vrot.slane %v1718, %v1731
        %v1733 = vcombine.high %v1725, %v1725
        %v1734 = vcombine.high %v1732, %v1732
        %v1736 = vunpack.c.l.s4 1983009808
        %v1737 = vunpack.c.0.s8 %v1736
        %v1738 = vlaneseq
        %v1739 = vshrl.u32 %v1738, 7
        %v1740 = vsub.s32 %v1737, %v1739
        %v1741 = vrot.slane %v1547, %v1740
        %v1742 = vcombine.high %v1548, %v1548
        %v1744 = vunpack.c.l.s4 1983009808
        %v1745 = vunpack.c.0.s8 %v1744
        %v1746 = vlaneseq
        %v1747 = vshrl.u32 %v1746, 7
        %v1748 = vsub.s32 %v1745, %v1747
        %v1749 = vrot.slane %v1548, %v1748
        %v1751 = vunpack.c.l.s4 1983009808
        %v1752 = vunpack.c.0.s8 %v1751
        %v1753 = vlaneseq
        %v1754 = vshrl.u32 %v1753, 7
        %v1755 = vsub.s32 %v1752, %v1754
        %v1756 = vrot.slane %v1742, %v1755
        %v1757 = vcombine.high %v1749, %v1749
        %v1758 = vcombine.high %v1756, %v1756
        %v1760 = vunpack.c.l.s4 1983009808
        %v1761 = vunpack.c.0.s8 %v1760
        %v1762 = vlaneseq
        %v1763 = vshrl.u32 %v1762, 7
        %v1764 = vsub.s32 %v1761, %v1763
        %v1765 = vrot.slane %v1549, %v1764
        %v1766 = vcombine.high %v1550, %v1550
        %v1768 = vunpack.c.l.s4 1983009808
        %v1769 = vunpack.c.0.s8 %v1768
        %v1770 = vlaneseq
        %v1771 = vshrl.u32 %v1770, 7
        %v1772 = vsub.s32 %v1769, %v1771
        %v1773 = vrot.slane %v1550, %v1772
        %v1775 = vunpack.c.l.s4 1983009808
        %v1776 = vunpack.c.0.s8 %v1775
        %v1777 = vlaneseq
        %v1778 = vshrl.u32 %v1777, 7
        %v1779 = vsub.s32 %v1776, %v1778
        %v1780 = vrot.slane %v1766, %v1779
        %v1781 = vcombine.high %v1773, %v1773
        %v1782 = vcombine.high %v1780, %v1780
        %v1784 = vunpack.c.l.s4 1983009808
        %v1785 = vunpack.c.0.s8 %v1784
        %v1786 = vlaneseq
        %v1787 = vshrl.u32 %v1786, 7
        %v1788 = vsub.s32 %v1785, %v1787
        %v1789 = vrot.slane %v1551, %v1788
        %v1790 = vcombine.high %v1552, %v1552
        %v1792 = vunpack.c.l.s4 1983009808
        %v1793 = vunpack.c.0.s8 %v1792
        %v1794 = vlaneseq
        %v1795 = vshrl.u32 %v1794, 7
        %v1796 = vsub.s32 %v1793, %v1795
        %v1797 = vrot.slane %v1552, %v1796
        %v1799 = vunpack.c.l.s4 1983009808
        %v1800 = vunpack.c.0.s8 %v1799
        %v1801 = vlaneseq
        %v1802 = vshrl.u32 %v1801, 7
        %v1803 = vsub.s32 %v1800, %v1802
        %v1804 = vrot.slane %v1790, %v1803
        %v1805 = vcombine.high %v1797, %v1797
        %v1806 = vcombine.high %v1804, %v1804
        %v1808 = vunpack.c.l.s4 1983009808
        %v1809 = vunpack.c.0.s8 %v1808
        %v1810 = vlaneseq
        %v1811 = vshrl.u32 %v1810, 7
        %v1812 = vsub.s32 %v1809, %v1811
        %v1813 = vrot.slane %v1553, %v1812
        %v1814 = vlaneseq
        %v1815 = vshrl.u32 %v1814, 7
        %v1816 = vsub.s32 0, %v1815
        %v1817 = vrot.slane %v1581, %v1816
        %v1818 = vlaneseq
        %v1819 = vshrl.u32 %v1818, 7
        %v1820 = vsub.s32 0, %v1819
        %v1821 = vrot.slane %v1589, %v1820
        %v1822 = vlaneseq
        %v1823 = vshrl.u32 %v1822, 7
        %v1824 = vsub.s32 0, %v1823
        %v1825 = vrot.slane %v1588, %v1824
        %v1826 = vlaneseq
        %v1827 = vshrl.u32 %v1826, 7
        %v1828 = vsub.s32 0, %v1827
        %v1829 = vrot.slane %v1590, %v1828
        %v1830 = vlaneseq
        %v1831 = vshrl.u32 %v1830, 7
        %v1832 = vsub.s32 0, %v1831
        %v1833 = vrot.slane %v1629, %v1832
        %v1834 = vlaneseq
        %v1835 = vshrl.u32 %v1834, 7
        %v1836 = vsub.s32 0, %v1835
        %v1837 = vrot.slane %v1637, %v1836
        %v1838 = vlaneseq
        %v1839 = vshrl.u32 %v1838, 7
        %v1840 = vsub.s32 0, %v1839
        %v1841 = vrot.slane %v1636, %v1840
        %v1842 = vlaneseq
        %v1843 = vshrl.u32 %v1842, 7
        %v1844 = vsub.s32 0, %v1843
        %v1845 = vrot.slane %v1638, %v1844
        %v1846 = vlaneseq
        %v1847 = vshrl.u32 %v1846, 7
        %v1848 = vsub.s32 0, %v1847
        %v1849 = vrot.slane %v1677, %v1848
        %v1850 = vlaneseq
        %v1851 = vshrl.u32 %v1850, 7
        %v1852 = vsub.s32 0, %v1851
        %v1853 = vrot.slane %v1685, %v1852
        %v1854 = vlaneseq
        %v1855 = vshrl.u32 %v1854, 7
        %v1856 = vsub.s32 0, %v1855
        %v1857 = vrot.slane %v1684, %v1856
        %v1858 = vlaneseq
        %v1859 = vshrl.u32 %v1858, 7
        %v1860 = vsub.s32 0, %v1859
        %v1861 = vrot.slane %v1686, %v1860
        %v1862 = vlaneseq
        %v1863 = vshrl.u32 %v1862, 7
        %v1864 = vsub.s32 0, %v1863
        %v1865 = vrot.slane %v1725, %v1864
        %v1866 = vlaneseq
        %v1867 = vshrl.u32 %v1866, 7
        %v1868 = vsub.s32 0, %v1867
        %v1869 = vrot.slane %v1733, %v1868
        %v1870 = vlaneseq
        %v1871 = vshrl.u32 %v1870, 7
        %v1872 = vsub.s32 0, %v1871
        %v1873 = vrot.slane %v1732, %v1872
        %v1874 = vlaneseq
        %v1875 = vshrl.u32 %v1874, 7
        %v1876 = vsub.s32 0, %v1875
        %v1877 = vrot.slane %v1734, %v1876
        %vm1878 = vcmask 1041409
        %v1879 = vsel %vm1878, %v1821, %v1817
        %vm1880 = vcmask 1042434
        %v1881 = vsel %vm1880, %v1825, %v1879
        %vm1882 = vcmask 1043459
        %v1883 = vsel %vm1882, %v1829, %v1881
        %v1884 = vsel %vm1878, %v1837, %v1833
        %v1885 = vsel %vm1880, %v1841, %v1884
        %v1886 = vsel %vm1882, %v1845, %v1885
        %v1887 = vsel %vm1878, %v1853, %v1849
        %v1888 = vsel %vm1880, %v1857, %v1887
        %v1889 = vsel %vm1882, %v1861, %v1888
        %v1890 = vsel %vm1878, %v1869, %v1865
        %v1891 = vsel %vm1880, %v1873, %v1890
        %v1892 = vsel %vm1882, %v1877, %v1891
        %v1897 = vlaneseq
        %v1898 = vshrl.u32 %v1897, 7
        %v1899 = vsub.s32 1, %v1898
        %v1900 = vrot.slane %v1581, %v1899
        %v1901 = vlaneseq
        %v1902 = vshrl.u32 %v1901, 7
        %v1903 = vsub.s32 1, %v1902
        %v1904 = vrot.slane %v1589, %v1903
        %v1905 = vlaneseq
        %v1906 = vshrl.u32 %v1905, 7
        %v1907 = vsub.s32 1, %v1906
        %v1908 = vrot.slane %v1588, %v1907
        %v1909 = vlaneseq
        %v1910 = vshrl.u32 %v1909, 7
        %v1911 = vsub.s32 1, %v1910
        %v1912 = vrot.slane %v1590, %v1911
        %v1913 = vlaneseq
        %v1914 = vshrl.u32 %v1913, 7
        %v1915 = vsub.s32 1, %v1914
        %v1916 = vrot.slane %v1629, %v1915
        %v1917 = vlaneseq
        %v1918 = vshrl.u32 %v1917, 7
        %v1919 = vsub.s32 1, %v1918
        %v1920 = vrot.slane %v1637, %v1919
        %v1921 = vlaneseq
        %v1922 = vshrl.u32 %v1921, 7
        %v1923 = vsub.s32 1, %v1922
        %v1924 = vrot.slane %v1636, %v1923
        %v1925 = vlaneseq
        %v1926 = vshrl.u32 %v1925, 7
        %v1927 = vsub.s32 1, %v1926
        %v1928 = vrot.slane %v1638, %v1927
        %v1929 = vlaneseq
        %v1930 = vshrl.u32 %v1929, 7
        %v1931 = vsub.s32 1, %v1930
        %v1932 = vrot.slane %v1677, %v1931
        %v1933 = vlaneseq
        %v1934 = vshrl.u32 %v1933, 7
        %v1935 = vsub.s32 1, %v1934
        %v1936 = vrot.slane %v1685, %v1935
        %v1937 = vlaneseq
        %v1938 = vshrl.u32 %v1937, 7
        %v1939 = vsub.s32 1, %v1938
        %v1940 = vrot.slane %v1684, %v1939
        %v1941 = vlaneseq
        %v1942 = vshrl.u32 %v1941, 7
        %v1943 = vsub.s32 1, %v1942
        %v1944 = vrot.slane %v1686, %v1943
        %v1945 = vlaneseq
        %v1946 = vshrl.u32 %v1945, 7
        %v1947 = vsub.s32 1, %v1946
        %v1948 = vrot.slane %v1725, %v1947
        %v1949 = vlaneseq
        %v1950 = vshrl.u32 %v1949, 7
        %v1951 = vsub.s32 1, %v1950
        %v1952 = vrot.slane %v1733, %v1951
        %v1953 = vlaneseq
        %v1954 = vshrl.u32 %v1953, 7
        %v1955 = vsub.s32 1, %v1954
        %v1956 = vrot.slane %v1732, %v1955
        %v1957 = vlaneseq
        %v1958 = vshrl.u32 %v1957, 7
        %v1959 = vsub.s32 1, %v1958
        %v1960 = vrot.slane %v1734, %v1959
        %v1961 = vsel %vm1878, %v1904, %v1900
        %v1962 = vsel %vm1880, %v1908, %v1961
        %v1963 = vsel %vm1882, %v1912, %v1962
        %v1964 = vsel %vm1878, %v1920, %v1916
        %v1965 = vsel %vm1880, %v1924, %v1964
        %v1966 = vsel %vm1882, %v1928, %v1965
        %v1967 = vsel %vm1878, %v1936, %v1932
        %v1968 = vsel %vm1880, %v1940, %v1967
        %v1969 = vsel %vm1882, %v1944, %v1968
        %v1970 = vsel %vm1878, %v1952, %v1948
        %v1971 = vsel %vm1880, %v1956, %v1970
        %v1972 = vsel %vm1882, %v1960, %v1971
        %1973 = vrot.lane.b32.xlu0 %v1963, 8
        %v1974 = vpop.permute.xlu0 %1973
        %1975 = vrot.lane.b32.xlu0 %v1966, 8
        %v1976 = vpop.permute.xlu0 %1975
        %1977 = vrot.lane.b32.xlu0 %v1969, 8
        %v1978 = vpop.permute.xlu0 %1977
        %1979 = vrot.lane.b32.xlu0 %v1972, 8
        %v1980 = vpop.permute.xlu0 %1979
        %v1985 = vlaneseq
        %v1986 = vshrl.u32 %v1985, 7
        %v1987 = vsub.s32 0, %v1986
        %v1988 = vrot.slane %v1597, %v1987
        %v1989 = vlaneseq
        %v1990 = vshrl.u32 %v1989, 7
        %v1991 = vsub.s32 0, %v1990
        %v1992 = vrot.slane %v1645, %v1991
        %v1993 = vlaneseq
        %v1994 = vshrl.u32 %v1993, 7
        %v1995 = vsub.s32 0, %v1994
        %v1996 = vrot.slane %v1693, %v1995
        %v1997 = vlaneseq
        %v1998 = vshrl.u32 %v1997, 7
        %v1999 = vsub.s32 0, %v1998
        %v2000 = vrot.slane %v1741, %v1999
        %v2001 = vsel %vm1878, %v1825, %v1821
        %v2002 = vsel %vm1880, %v1829, %v2001
        %v2003 = vsel %vm1882, %v1988, %v2002
        %v2004 = vsel %vm1878, %v1841, %v1837
        %v2005 = vsel %vm1880, %v1845, %v2004
        %v2006 = vsel %vm1882, %v1992, %v2005
        %v2007 = vsel %vm1878, %v1857, %v1853
        %v2008 = vsel %vm1880, %v1861, %v2007
        %v2009 = vsel %vm1882, %v1996, %v2008
        %v2010 = vsel %vm1878, %v1873, %v1869
        %v2011 = vsel %vm1880, %v1877, %v2010
        %v2012 = vsel %vm1882, %v2000, %v2011
        %2013 = vrot.lane.b32.xlu0 %v2003, 16
        %v2014 = vpop.permute.xlu0 %2013
        %2015 = vrot.lane.b32.xlu0 %v2006, 16
        %v2016 = vpop.permute.xlu0 %2015
        %2017 = vrot.lane.b32.xlu0 %v2009, 16
        %v2018 = vpop.permute.xlu0 %2017
        %2019 = vrot.lane.b32.xlu0 %v2012, 16
        %v2020 = vpop.permute.xlu0 %2019
        %v2025 = vlaneseq
        %v2026 = vshrl.u32 %v2025, 7
        %v2027 = vsub.s32 1, %v2026
        %v2028 = vrot.slane %v1597, %v2027
        %v2029 = vlaneseq
        %v2030 = vshrl.u32 %v2029, 7
        %v2031 = vsub.s32 1, %v2030
        %v2032 = vrot.slane %v1645, %v2031
        %v2033 = vlaneseq
        %v2034 = vshrl.u32 %v2033, 7
        %v2035 = vsub.s32 1, %v2034
        %v2036 = vrot.slane %v1693, %v2035
        %v2037 = vlaneseq
        %v2038 = vshrl.u32 %v2037, 7
        %v2039 = vsub.s32 1, %v2038
        %v2040 = vrot.slane %v1741, %v2039
        %v2041 = vsel %vm1878, %v1908, %v1904
        %v2042 = vsel %vm1880, %v1912, %v2041
        %v2043 = vsel %vm1882, %v2028, %v2042
        %v2044 = vsel %vm1878, %v1924, %v1920
        %v2045 = vsel %vm1880, %v1928, %v2044
        %v2046 = vsel %vm1882, %v2032, %v2045
        %v2047 = vsel %vm1878, %v1940, %v1936
        %v2048 = vsel %vm1880, %v1944, %v2047
        %v2049 = vsel %vm1882, %v2036, %v2048
        %v2050 = vsel %vm1878, %v1956, %v1952
        %v2051 = vsel %vm1880, %v1960, %v2050
        %v2052 = vsel %vm1882, %v2040, %v2051
        %2053 = vrot.lane.b32.xlu0 %v2043, 24
        %v2054 = vpop.permute.xlu0 %2053
        %2055 = vrot.lane.b32.xlu0 %v2046, 24
        %v2056 = vpop.permute.xlu0 %2055
        %2057 = vrot.lane.b32.xlu0 %v2049, 24
        %v2058 = vpop.permute.xlu0 %2057
        %2059 = vrot.lane.b32.xlu0 %v2052, 24
        %v2060 = vpop.permute.xlu0 %2059
        %v2065 = vlaneseq
        %v2066 = vshrl.u32 %v2065, 7
        %v2067 = vsub.s32 0, %v2066
        %v2068 = vrot.slane %v1605, %v2067
        %v2069 = vlaneseq
        %v2070 = vshrl.u32 %v2069, 7
        %v2071 = vsub.s32 0, %v2070
        %v2072 = vrot.slane %v1613, %v2071
        %v2073 = vlaneseq
        %v2074 = vshrl.u32 %v2073, 7
        %v2075 = vsub.s32 0, %v2074
        %v2076 = vrot.slane %v1612, %v2075
        %v2077 = vlaneseq
        %v2078 = vshrl.u32 %v2077, 7
        %v2079 = vsub.s32 0, %v2078
        %v2080 = vrot.slane %v1614, %v2079
        %v2081 = vlaneseq
        %v2082 = vshrl.u32 %v2081, 7
        %v2083 = vsub.s32 0, %v2082
        %v2084 = vrot.slane %v1653, %v2083
        %v2085 = vlaneseq
        %v2086 = vshrl.u32 %v2085, 7
        %v2087 = vsub.s32 0, %v2086
        %v2088 = vrot.slane %v1661, %v2087
        %v2089 = vlaneseq
        %v2090 = vshrl.u32 %v2089, 7
        %v2091 = vsub.s32 0, %v2090
        %v2092 = vrot.slane %v1660, %v2091
        %v2093 = vlaneseq
        %v2094 = vshrl.u32 %v2093, 7
        %v2095 = vsub.s32 0, %v2094
        %v2096 = vrot.slane %v1662, %v2095
        %v2097 = vlaneseq
        %v2098 = vshrl.u32 %v2097, 7
        %v2099 = vsub.s32 0, %v2098
        %v2100 = vrot.slane %v1701, %v2099
        %v2101 = vlaneseq
        %v2102 = vshrl.u32 %v2101, 7
        %v2103 = vsub.s32 0, %v2102
        %v2104 = vrot.slane %v1709, %v2103
        %v2105 = vlaneseq
        %v2106 = vshrl.u32 %v2105, 7
        %v2107 = vsub.s32 0, %v2106
        %v2108 = vrot.slane %v1708, %v2107
        %v2109 = vlaneseq
        %v2110 = vshrl.u32 %v2109, 7
        %v2111 = vsub.s32 0, %v2110
        %v2112 = vrot.slane %v1710, %v2111
        %v2113 = vlaneseq
        %v2114 = vshrl.u32 %v2113, 7
        %v2115 = vsub.s32 0, %v2114
        %v2116 = vrot.slane %v1749, %v2115
        %v2117 = vlaneseq
        %v2118 = vshrl.u32 %v2117, 7
        %v2119 = vsub.s32 0, %v2118
        %v2120 = vrot.slane %v1757, %v2119
        %v2121 = vlaneseq
        %v2122 = vshrl.u32 %v2121, 7
        %v2123 = vsub.s32 0, %v2122
        %v2124 = vrot.slane %v1756, %v2123
        %v2125 = vlaneseq
        %v2126 = vshrl.u32 %v2125, 7
        %v2127 = vsub.s32 0, %v2126
        %v2128 = vrot.slane %v1758, %v2127
        %v2129 = vsel %vm1878, %v2072, %v2068
        %v2130 = vsel %vm1880, %v2076, %v2129
        %v2131 = vsel %vm1882, %v2080, %v2130
        %v2132 = vsel %vm1878, %v2088, %v2084
        %v2133 = vsel %vm1880, %v2092, %v2132
        %v2134 = vsel %vm1882, %v2096, %v2133
        %v2135 = vsel %vm1878, %v2104, %v2100
        %v2136 = vsel %vm1880, %v2108, %v2135
        %v2137 = vsel %vm1882, %v2112, %v2136
        %v2138 = vsel %vm1878, %v2120, %v2116
        %v2139 = vsel %vm1880, %v2124, %v2138
        %v2140 = vsel %vm1882, %v2128, %v2139
        %2141 = vrot.lane.b32.xlu0 %v2131, 32
        %v2142 = vpop.permute.xlu0 %2141
        %2143 = vrot.lane.b32.xlu0 %v2134, 32
        %v2144 = vpop.permute.xlu0 %2143
        %2145 = vrot.lane.b32.xlu0 %v2137, 32
        %v2146 = vpop.permute.xlu0 %2145
        %2147 = vrot.lane.b32.xlu0 %v2140, 32
        %v2148 = vpop.permute.xlu0 %2147
        %v2153 = vlaneseq
        %v2154 = vshrl.u32 %v2153, 7
        %v2155 = vsub.s32 1, %v2154
        %v2156 = vrot.slane %v1605, %v2155
        %v2157 = vlaneseq
        %v2158 = vshrl.u32 %v2157, 7
        %v2159 = vsub.s32 1, %v2158
        %v2160 = vrot.slane %v1613, %v2159
        %v2161 = vlaneseq
        %v2162 = vshrl.u32 %v2161, 7
        %v2163 = vsub.s32 1, %v2162
        %v2164 = vrot.slane %v1612, %v2163
        %v2165 = vlaneseq
        %v2166 = vshrl.u32 %v2165, 7
        %v2167 = vsub.s32 1, %v2166
        %v2168 = vrot.slane %v1614, %v2167
        %v2169 = vlaneseq
        %v2170 = vshrl.u32 %v2169, 7
        %v2171 = vsub.s32 1, %v2170
        %v2172 = vrot.slane %v1653, %v2171
        %v2173 = vlaneseq
        %v2174 = vshrl.u32 %v2173, 7
        %v2175 = vsub.s32 1, %v2174
        %v2176 = vrot.slane %v1661, %v2175
        %v2177 = vlaneseq
        %v2178 = vshrl.u32 %v2177, 7
        %v2179 = vsub.s32 1, %v2178
        %v2180 = vrot.slane %v1660, %v2179
        %v2181 = vlaneseq
        %v2182 = vshrl.u32 %v2181, 7
        %v2183 = vsub.s32 1, %v2182
        %v2184 = vrot.slane %v1662, %v2183
        %v2185 = vlaneseq
        %v2186 = vshrl.u32 %v2185, 7
        %v2187 = vsub.s32 1, %v2186
        %v2188 = vrot.slane %v1701, %v2187
        %v2189 = vlaneseq
        %v2190 = vshrl.u32 %v2189, 7
        %v2191 = vsub.s32 1, %v2190
        %v2192 = vrot.slane %v1709, %v2191
        %v2193 = vlaneseq
        %v2194 = vshrl.u32 %v2193, 7
        %v2195 = vsub.s32 1, %v2194
        %v2196 = vrot.slane %v1708, %v2195
        %v2197 = vlaneseq
        %v2198 = vshrl.u32 %v2197, 7
        %v2199 = vsub.s32 1, %v2198
        %v2200 = vrot.slane %v1710, %v2199
        %v2201 = vlaneseq
        %v2202 = vshrl.u32 %v2201, 7
        %v2203 = vsub.s32 1, %v2202
        %v2204 = vrot.slane %v1749, %v2203
        %v2205 = vlaneseq
        %v2206 = vshrl.u32 %v2205, 7
        %v2207 = vsub.s32 1, %v2206
        %v2208 = vrot.slane %v1757, %v2207
        %v2209 = vlaneseq
        %v2210 = vshrl.u32 %v2209, 7
        %v2211 = vsub.s32 1, %v2210
        %v2212 = vrot.slane %v1756, %v2211
        %v2213 = vlaneseq
        %v2214 = vshrl.u32 %v2213, 7
        %v2215 = vsub.s32 1, %v2214
        %v2216 = vrot.slane %v1758, %v2215
        %v2217 = vsel %vm1878, %v2160, %v2156
        %v2218 = vsel %vm1880, %v2164, %v2217
        %v2219 = vsel %vm1882, %v2168, %v2218
        %v2220 = vsel %vm1878, %v2176, %v2172
        %v2221 = vsel %vm1880, %v2180, %v2220
        %v2222 = vsel %vm1882, %v2184, %v2221
        %v2223 = vsel %vm1878, %v2192, %v2188
        %v2224 = vsel %vm1880, %v2196, %v2223
        %v2225 = vsel %vm1882, %v2200, %v2224
        %v2226 = vsel %vm1878, %v2208, %v2204
        %v2227 = vsel %vm1880, %v2212, %v2226
        %v2228 = vsel %vm1882, %v2216, %v2227
        %2229 = vrot.lane.b32.xlu0 %v2219, 40
        %v2230 = vpop.permute.xlu0 %2229
        %2231 = vrot.lane.b32.xlu0 %v2222, 40
        %v2232 = vpop.permute.xlu0 %2231
        %2233 = vrot.lane.b32.xlu0 %v2225, 40
        %v2234 = vpop.permute.xlu0 %2233
        %2235 = vrot.lane.b32.xlu0 %v2228, 40
        %v2236 = vpop.permute.xlu0 %2235
        %v2241 = vlaneseq
        %v2242 = vshrl.u32 %v2241, 7
        %v2243 = vsub.s32 0, %v2242
        %v2244 = vrot.slane %v1621, %v2243
        %v2245 = vlaneseq
        %v2246 = vshrl.u32 %v2245, 7
        %v2247 = vsub.s32 0, %v2246
        %v2248 = vrot.slane %v1669, %v2247
        %v2249 = vlaneseq
        %v2250 = vshrl.u32 %v2249, 7
        %v2251 = vsub.s32 0, %v2250
        %v2252 = vrot.slane %v1717, %v2251
        %v2253 = vlaneseq
        %v2254 = vshrl.u32 %v2253, 7
        %v2255 = vsub.s32 0, %v2254
        %v2256 = vrot.slane %v1765, %v2255
        %v2257 = vsel %vm1878, %v2076, %v2072
        %v2258 = vsel %vm1880, %v2080, %v2257
        %v2259 = vsel %vm1882, %v2244, %v2258
        %v2260 = vsel %vm1878, %v2092, %v2088
        %v2261 = vsel %vm1880, %v2096, %v2260
        %v2262 = vsel %vm1882, %v2248, %v2261
        %v2263 = vsel %vm1878, %v2108, %v2104
        %v2264 = vsel %vm1880, %v2112, %v2263
        %v2265 = vsel %vm1882, %v2252, %v2264
        %v2266 = vsel %vm1878, %v2124, %v2120
        %v2267 = vsel %vm1880, %v2128, %v2266
        %v2268 = vsel %vm1882, %v2256, %v2267
        %2269 = vrot.lane.b32.xlu0 %v2259, 48
        %v2270 = vpop.permute.xlu0 %2269
        %2271 = vrot.lane.b32.xlu0 %v2262, 48
        %v2272 = vpop.permute.xlu0 %2271
        %2273 = vrot.lane.b32.xlu0 %v2265, 48
        %v2274 = vpop.permute.xlu0 %2273
        %2275 = vrot.lane.b32.xlu0 %v2268, 48
        %v2276 = vpop.permute.xlu0 %2275
        %v2281 = vlaneseq
        %v2282 = vshrl.u32 %v2281, 7
        %v2283 = vsub.s32 1, %v2282
        %v2284 = vrot.slane %v1621, %v2283
        %v2285 = vlaneseq
        %v2286 = vshrl.u32 %v2285, 7
        %v2287 = vsub.s32 1, %v2286
        %v2288 = vrot.slane %v1669, %v2287
        %v2289 = vlaneseq
        %v2290 = vshrl.u32 %v2289, 7
        %v2291 = vsub.s32 1, %v2290
        %v2292 = vrot.slane %v1717, %v2291
        %v2293 = vlaneseq
        %v2294 = vshrl.u32 %v2293, 7
        %v2295 = vsub.s32 1, %v2294
        %v2296 = vrot.slane %v1765, %v2295
        %v2297 = vsel %vm1878, %v2164, %v2160
        %v2298 = vsel %vm1880, %v2168, %v2297
        %v2299 = vsel %vm1882, %v2284, %v2298
        %v2300 = vsel %vm1878, %v2180, %v2176
        %v2301 = vsel %vm1880, %v2184, %v2300
        %v2302 = vsel %vm1882, %v2288, %v2301
        %v2303 = vsel %vm1878, %v2196, %v2192
        %v2304 = vsel %vm1880, %v2200, %v2303
        %v2305 = vsel %vm1882, %v2292, %v2304
        %v2306 = vsel %vm1878, %v2212, %v2208
        %v2307 = vsel %vm1880, %v2216, %v2306
        %v2308 = vsel %vm1882, %v2296, %v2307
        %2309 = vrot.lane.b32.xlu0 %v2299, 56
        %v2310 = vpop.permute.xlu0 %2309
        %2311 = vrot.lane.b32.xlu0 %v2302, 56
        %v2312 = vpop.permute.xlu0 %2311
        %2313 = vrot.lane.b32.xlu0 %v2305, 56
        %v2314 = vpop.permute.xlu0 %2313
        %2315 = vrot.lane.b32.xlu0 %v2308, 56
        %v2316 = vpop.permute.xlu0 %2315
        %v2321 = vlaneseq
        %v2322 = vshrl.u32 %v2321, 7
        %v2323 = vsub.s32 0, %v2322
        %v2324 = vrot.slane %v1773, %v2323
        %v2325 = vlaneseq
        %v2326 = vshrl.u32 %v2325, 7
        %v2327 = vsub.s32 0, %v2326
        %v2328 = vrot.slane %v1781, %v2327
        %v2329 = vlaneseq
        %v2330 = vshrl.u32 %v2329, 7
        %v2331 = vsub.s32 0, %v2330
        %v2332 = vrot.slane %v1780, %v2331
        %v2333 = vlaneseq
        %v2334 = vshrl.u32 %v2333, 7
        %v2335 = vsub.s32 0, %v2334
        %v2336 = vrot.slane %v1782, %v2335
        %v2337 = vsel %vm1878, %v2328, %v2324
        %v2338 = vsel %vm1880, %v2332, %v2337
        %v2339 = vsel %vm1882, %v2336, %v2338
        %2340 = vrot.lane.b32.xlu0 %v1886, 64
        %v2341 = vpop.permute.xlu0 %2340
        %2342 = vrot.lane.b32.xlu0 %v1889, 64
        %v2343 = vpop.permute.xlu0 %2342
        %2344 = vrot.lane.b32.xlu0 %v1892, 64
        %v2345 = vpop.permute.xlu0 %2344
        %2346 = vrot.lane.b32.xlu0 %v2339, 64
        %v2347 = vpop.permute.xlu0 %2346
        %v2352 = vlaneseq
        %v2353 = vshrl.u32 %v2352, 7
        %v2354 = vsub.s32 1, %v2353
        %v2355 = vrot.slane %v1773, %v2354
        %v2356 = vlaneseq
        %v2357 = vshrl.u32 %v2356, 7
        %v2358 = vsub.s32 1, %v2357
        %v2359 = vrot.slane %v1781, %v2358
        %v2360 = vlaneseq
        %v2361 = vshrl.u32 %v2360, 7
        %v2362 = vsub.s32 1, %v2361
        %v2363 = vrot.slane %v1780, %v2362
        %v2364 = vlaneseq
        %v2365 = vshrl.u32 %v2364, 7
        %v2366 = vsub.s32 1, %v2365
        %v2367 = vrot.slane %v1782, %v2366
        %v2368 = vsel %vm1878, %v2359, %v2355
        %v2369 = vsel %vm1880, %v2363, %v2368
        %v2370 = vsel %vm1882, %v2367, %v2369
        %2371 = vrot.lane.b32.xlu0 %v1966, 72
        %v2372 = vpop.permute.xlu0 %2371
        %2373 = vrot.lane.b32.xlu0 %v1969, 72
        %v2374 = vpop.permute.xlu0 %2373
        %2375 = vrot.lane.b32.xlu0 %v1972, 72
        %v2376 = vpop.permute.xlu0 %2375
        %2377 = vrot.lane.b32.xlu0 %v2370, 72
        %v2378 = vpop.permute.xlu0 %2377
        %v2383 = vlaneseq
        %v2384 = vshrl.u32 %v2383, 7
        %v2385 = vsub.s32 0, %v2384
        %v2386 = vrot.slane %v1789, %v2385
        %v2387 = vsel %vm1878, %v2332, %v2328
        %v2388 = vsel %vm1880, %v2336, %v2387
        %v2389 = vsel %vm1882, %v2386, %v2388
        %2390 = vrot.lane.b32.xlu0 %v2006, 80
        %v2391 = vpop.permute.xlu0 %2390
        %2392 = vrot.lane.b32.xlu0 %v2009, 80
        %v2393 = vpop.permute.xlu0 %2392
        %2394 = vrot.lane.b32.xlu0 %v2012, 80
        %v2395 = vpop.permute.xlu0 %2394
        %2396 = vrot.lane.b32.xlu0 %v2389, 80
        %v2397 = vpop.permute.xlu0 %2396
        %v2402 = vlaneseq
        %v2403 = vshrl.u32 %v2402, 7
        %v2404 = vsub.s32 1, %v2403
        %v2405 = vrot.slane %v1789, %v2404
        %v2406 = vsel %vm1878, %v2363, %v2359
        %v2407 = vsel %vm1880, %v2367, %v2406
        %v2408 = vsel %vm1882, %v2405, %v2407
        %2409 = vrot.lane.b32.xlu0 %v2046, 88
        %v2410 = vpop.permute.xlu0 %2409
        %2411 = vrot.lane.b32.xlu0 %v2049, 88
        %v2412 = vpop.permute.xlu0 %2411
        %2413 = vrot.lane.b32.xlu0 %v2052, 88
        %v2414 = vpop.permute.xlu0 %2413
        %2415 = vrot.lane.b32.xlu0 %v2408, 88
        %v2416 = vpop.permute.xlu0 %2415
        %v2421 = vlaneseq
        %v2422 = vshrl.u32 %v2421, 7
        %v2423 = vsub.s32 0, %v2422
        %v2424 = vrot.slane %v1797, %v2423
        %v2425 = vlaneseq
        %v2426 = vshrl.u32 %v2425, 7
        %v2427 = vsub.s32 0, %v2426
        %v2428 = vrot.slane %v1805, %v2427
        %v2429 = vlaneseq
        %v2430 = vshrl.u32 %v2429, 7
        %v2431 = vsub.s32 0, %v2430
        %v2432 = vrot.slane %v1804, %v2431
        %v2433 = vlaneseq
        %v2434 = vshrl.u32 %v2433, 7
        %v2435 = vsub.s32 0, %v2434
        %v2436 = vrot.slane %v1806, %v2435
        %v2437 = vsel %vm1878, %v2428, %v2424
        %v2438 = vsel %vm1880, %v2432, %v2437
        %v2439 = vsel %vm1882, %v2436, %v2438
        %2440 = vrot.lane.b32.xlu0 %v2134, 96
        %v2441 = vpop.permute.xlu0 %2440
        %2442 = vrot.lane.b32.xlu0 %v2137, 96
        %v2443 = vpop.permute.xlu0 %2442
        %2444 = vrot.lane.b32.xlu0 %v2140, 96
        %v2445 = vpop.permute.xlu0 %2444
        %2446 = vrot.lane.b32.xlu0 %v2439, 96
        %v2447 = vpop.permute.xlu0 %2446
        %v2452 = vlaneseq
        %v2453 = vshrl.u32 %v2452, 7
        %v2454 = vsub.s32 1, %v2453
        %v2455 = vrot.slane %v1797, %v2454
        %v2456 = vlaneseq
        %v2457 = vshrl.u32 %v2456, 7
        %v2458 = vsub.s32 1, %v2457
        %v2459 = vrot.slane %v1805, %v2458
        %v2460 = vlaneseq
        %v2461 = vshrl.u32 %v2460, 7
        %v2462 = vsub.s32 1, %v2461
        %v2463 = vrot.slane %v1804, %v2462
        %v2464 = vlaneseq
        %v2465 = vshrl.u32 %v2464, 7
        %v2466 = vsub.s32 1, %v2465
        %v2467 = vrot.slane %v1806, %v2466
        %v2468 = vsel %vm1878, %v2459, %v2455
        %v2469 = vsel %vm1880, %v2463, %v2468
        %v2470 = vsel %vm1882, %v2467, %v2469
        %2471 = vrot.lane.b32.xlu0 %v2222, 104
        %v2472 = vpop.permute.xlu0 %2471
        %2473 = vrot.lane.b32.xlu0 %v2225, 104
        %v2474 = vpop.permute.xlu0 %2473
        %2475 = vrot.lane.b32.xlu0 %v2228, 104
        %v2476 = vpop.permute.xlu0 %2475
        %2477 = vrot.lane.b32.xlu0 %v2470, 104
        %v2478 = vpop.permute.xlu0 %2477
        %v2483 = vlaneseq
        %v2484 = vshrl.u32 %v2483, 7
        %v2485 = vsub.s32 0, %v2484
        %v2486 = vrot.slane %v1813, %v2485
        %v2487 = vsel %vm1878, %v2432, %v2428
        %v2488 = vsel %vm1880, %v2436, %v2487
        %v2489 = vsel %vm1882, %v2486, %v2488
        %2490 = vrot.lane.b32.xlu0 %v2262, 112
        %v2491 = vpop.permute.xlu0 %2490
        %2492 = vrot.lane.b32.xlu0 %v2265, 112
        %v2493 = vpop.permute.xlu0 %2492
        %2494 = vrot.lane.b32.xlu0 %v2268, 112
        %v2495 = vpop.permute.xlu0 %2494
        %2496 = vrot.lane.b32.xlu0 %v2489, 112
        %v2497 = vpop.permute.xlu0 %2496
        %v2502 = vlaneseq
        %v2503 = vshrl.u32 %v2502, 7
        %v2504 = vsub.s32 1, %v2503
        %v2505 = vrot.slane %v1813, %v2504
        %v2506 = vsel %vm1878, %v2463, %v2459
        %v2507 = vsel %vm1880, %v2467, %v2506
        %v2508 = vsel %vm1882, %v2505, %v2507
        %2509 = vrot.lane.b32.xlu0 %v2302, 120
        %v2510 = vpop.permute.xlu0 %2509
        %2511 = vrot.lane.b32.xlu0 %v2305, 120
        %v2512 = vpop.permute.xlu0 %2511
        %2513 = vrot.lane.b32.xlu0 %v2308, 120
        %v2514 = vpop.permute.xlu0 %2513
        %2515 = vrot.lane.b32.xlu0 %v2508, 120
        %v2516 = vpop.permute.xlu0 %2515
        %v2521 = vsel %vm305, %v1883, %v1974
        %v2522 = vsel %vm305, %v1886, %v1976
        %v2523 = vsel %vm305, %v1889, %v1978
        %v2524 = vsel %vm305, %v1892, %v1980
        %vm2525 = vcmask 130048
        %v2526 = vsel %vm2525, %v2521, %v2014
        %v2527 = vsel %vm2525, %v2522, %v2016
        %v2528 = vsel %vm2525, %v2523, %v2018
        %v2529 = vsel %vm2525, %v2524, %v2020
        %vm2530 = vcmask 195584
        %v2531 = vsel %vm2530, %v2526, %v2054
        %v2532 = vsel %vm2530, %v2527, %v2056
        %v2533 = vsel %vm2530, %v2528, %v2058
        %v2534 = vsel %vm2530, %v2529, %v2060
        %vm2535 = vcmask 261120
        %v2536 = vsel %vm2535, %v2531, %v2142
        %v2537 = vsel %vm2535, %v2532, %v2144
        %v2538 = vsel %vm2535, %v2533, %v2146
        %v2539 = vsel %vm2535, %v2534, %v2148
        %vm2540 = vcmask 326656
        %v2541 = vsel %vm2540, %v2536, %v2230
        %v2542 = vsel %vm2540, %v2537, %v2232
        %v2543 = vsel %vm2540, %v2538, %v2234
        %v2544 = vsel %vm2540, %v2539, %v2236
        %vm2545 = vcmask 392192
        %v2546 = vsel %vm2545, %v2541, %v2270
        %v2547 = vsel %vm2545, %v2542, %v2272
        %v2548 = vsel %vm2545, %v2543, %v2274
        %v2549 = vsel %vm2545, %v2544, %v2276
        %vm2550 = vcmask 457728
        %v2551 = vsel %vm2550, %v2546, %v2310
        %v2552 = vsel %vm2550, %v2547, %v2312
        %v2553 = vsel %vm2550, %v2548, %v2314
        %v2554 = vsel %vm2550, %v2549, %v2316
        %vm2555 = vcmask 523264
        %v2556 = vsel %vm2555, %v2551, %v2341
        %v2557 = vsel %vm2555, %v2552, %v2343
        %v2558 = vsel %vm2555, %v2553, %v2345
        %v2559 = vsel %vm2555, %v2554, %v2347
        %vm2560 = vcmask 588800
        %v2561 = vsel %vm2560, %v2556, %v2372
        %v2562 = vsel %vm2560, %v2557, %v2374
        %v2563 = vsel %vm2560, %v2558, %v2376
        %v2564 = vsel %vm2560, %v2559, %v2378
        %vm2565 = vcmask 654336
        %v2566 = vsel %vm2565, %v2561, %v2391
        %v2567 = vsel %vm2565, %v2562, %v2393
        %v2568 = vsel %vm2565, %v2563, %v2395
        %v2569 = vsel %vm2565, %v2564, %v2397
        %vm2570 = vcmask 719872
        %v2571 = vsel %vm2570, %v2566, %v2410
        %v2572 = vsel %vm2570, %v2567, %v2412
        %v2573 = vsel %vm2570, %v2568, %v2414
        %v2574 = vsel %vm2570, %v2569, %v2416
        %vm2575 = vcmask 785408
        %v2576 = vsel %vm2575, %v2571, %v2441
        %v2577 = vsel %vm2575, %v2572, %v2443
        %v2578 = vsel %vm2575, %v2573, %v2445
        %v2579 = vsel %vm2575, %v2574, %v2447
        %vm2580 = vcmask 850944
        %v2581 = vsel %vm2580, %v2576, %v2472
        %v2582 = vsel %vm2580, %v2577, %v2474
        %v2583 = vsel %vm2580, %v2578, %v2476
        %v2584 = vsel %vm2580, %v2579, %v2478
        %vm2585 = vcmask 916480
        %v2586 = vsel %vm2585, %v2581, %v2491
        %v2587 = vsel %vm2585, %v2582, %v2493
        %v2588 = vsel %vm2585, %v2583, %v2495
        %v2589 = vsel %vm2585, %v2584, %v2497
        %vm2590 = vcmask 982016
        %v2591 = vsel %vm2590, %v2586, %v2510
        %v2592 = vsel %vm2590, %v2587, %v2512
        %v2593 = vsel %vm2590, %v2588, %v2514
        %v2594 = vsel %vm2590, %v2589, %v2516
        %v2599 = vcombine.low %v2591, %v2592
        %v2600 = vcombine.low %v2593, %v2594
        %v2603 = vpack.c.bf16 %v2600, %v2599
        %v2604 = vld [vmem:[%s3] sm:$0xf]
        %v2605 = vld [vmem:[%s3 + $0x4] sm:$0xf]
        %v2606 = vld [vmem:[%s3 + $0x8] sm:$0xf]
        %v2607 = vld [vmem:[%s3 + $0xc] sm:$0xf]
        %v2608 = vld [vmem:[%s3 + $0x10] sm:$0xf]
        %v2609 = vld [vmem:[%s3 + $0x14] sm:$0xf]
        %v2610 = vld [vmem:[%s3 + $0x18] sm:$0xf]
        %v2611 = vld [vmem:[%s3 + $0x1c] sm:$0xf]
        %v2612 = vld [vmem:[%s3 + $0x20] sm:$0xf]
        %v2613 = vld [vmem:[%s3 + $0x24] sm:$0xf]
        %v2614 = vld [vmem:[%s3 + $0x28] sm:$0xf]
        %v2615 = vld [vmem:[%s3 + $0x2c] sm:$0xf]
        %v2616 = vld [vmem:[%s3 + $0x30] sm:$0xf]
        %v2617 = vld [vmem:[%s3 + $0x34] sm:$0xf]
        %v2618 = vld [vmem:[%s3 + $0x38] sm:$0xf]
        %v2619 = vld [vmem:[%s3 + $0x3c] sm:$0xf]
        %v2620 = vld [vmem:[%s4] sm:$0x1]
        %v2622 = vlaneseq
        %v2623 = vshrl.u32 %v2622, 7
        %v2624 = vsub.s32 0, %v2623
        %v2625 = vrot.slane %v2620, %v2624
        %v2643 = vunpack.c.l.b16 %v2604
        %v2644 = vunpack.c.l.b16 %v2605
        %v2645 = vunpack.c.l.b16 %v2606
        %v2646 = vunpack.c.l.b16 %v2607
        %v2647 = vunpack.c.l.b16 %v2608
        %v2648 = vunpack.c.l.b16 %v2609
        %v2649 = vunpack.c.l.b16 %v2610
        %v2650 = vunpack.c.l.b16 %v2611
        %v2651 = vunpack.c.l.b16 %v2612
        %v2652 = vunpack.c.l.b16 %v2613
        %v2653 = vunpack.c.l.b16 %v2614
        %v2654 = vunpack.c.l.b16 %v2615
        %v2655 = vunpack.c.l.b16 %v2616
        %v2656 = vunpack.c.l.b16 %v2617
        %v2657 = vunpack.c.l.b16 %v2618
        %v2658 = vunpack.c.l.b16 %v2619
        %v2659 = vpack.c.b16 %v2644, %v2643
        %v2660 = vpack.c.b16 %v2646, %v2645
        %v2661 = vpack.c.b16 %v2648, %v2647
        %v2662 = vpack.c.b16 %v2650, %v2649
        %v2663 = vpack.c.b16 %v2652, %v2651
        %v2664 = vpack.c.b16 %v2654, %v2653
        %v2665 = vpack.c.b16 %v2656, %v2655
        %v2666 = vpack.c.b16 %v2658, %v2657
        %2675 = vmatprep.subr.bf16.mxu0 0
        %2676 = vmatpush1.bf16.msra.mxu0 %v2666
        %2677 = vmatprep.subr.bf16.mxu0 0
        %2678 = vmatpush1.bf16.msra.mxu0 %v2665
        %2679 = vmatprep.subr.bf16.mxu0 0
        %2680 = vmatpush1.bf16.msra.mxu0 %v2664
        %2681 = vmatprep.subr.bf16.mxu0 0
        %2682 = vmatpush1.bf16.msra.mxu0 %v2663
        %2683 = vmatprep.subr.bf16.mxu0 0
        %2684 = vmatpush1.bf16.msra.mxu0 %v2662
        %2685 = vmatprep.subr.bf16.mxu0 0
        %2686 = vmatpush1.bf16.msra.mxu0 %v2661
        %2687 = vmatprep.subr.bf16.mxu0 0
        %2688 = vmatpush1.bf16.msra.mxu0 %v2660
        %2689 = vmatprep.subr.bf16.mxu0 0
        %2690 = vmatpush1.bf16.msra.mxu0 %v2659
        %2691 = vmatprep.subr.bf16.mxu0 0
        %2692 = vmatpush2.bf16.msra.mxu0 0
        %2693 = vmatprep.subr.bf16.mxu0 0
        %2694 = vmatpush2.bf16.msra.mxu0 0
        %2695 = vmatprep.subr.bf16.mxu0 0
        %2696 = vmatpush2.bf16.msra.mxu0 0
        %2697 = vmatprep.subr.bf16.mxu0 0
        %2698 = vmatpush2.bf16.msra.mxu0 0
        %2699 = vmatprep.subr.bf16.mxu0 0
        %2700 = vmatpush2.bf16.msra.mxu0 0
        %2701 = vmatprep.subr.bf16.mxu0 0
        %2702 = vmatpush2.bf16.msra.mxu0 0
        %2703 = vmatprep.subr.bf16.mxu0 0
        %2704 = vmatpush2.bf16.msra.mxu0 0
        %2705 = vmatprep.subr.bf16.mxu0 0
        %2706 = vmatpush2.bf16.msra.mxu0 0
        %2707 = vmatprep.mubr.bf16.mxu0 0
        %2708 = vmatmul.mubr.bf16.gmra.mxu0 %v2603
        %v2709 = vpop.f32.mrf.mxu0
        %v2710 = vadd.f32 %v2625, %v2709
        %v2711 = vpop.f32.mrf.mxu0
        %v2712 = vpop.f32.mrf.mxu0
        %v2713 = vadd.f32 %v2625, %v2712
        %v2714 = vpop.f32.mrf.mxu0
        %2715 = vdwg.mxu0
        %v2716 = vmul.f32 %v2710, 0.01
        %v2717 = vmul.f32 %v2713, 0.01
        %v2718 = vmax.f32 %v2710, %v2716
        %v2719 = vmax.f32 %v2713, %v2717
        %v2722 = vcombine.high %v2718, %v2718
        %v2723 = vcombine.high %v2719, %v2719
        %s2726 = scalar_lea.vmem [#allocation3], 8
        %vm2727 = vcmask 125952
        %2728 = vst.msk [vmem:[%s2726 + $0x1] sm:$0xf] %vm2727, %v2718
        %2729 = vst.msk [vmem:[%s2726 + $0x9] sm:$0xf] %vm2727, %v2722
        %2730 = vst.msk [vmem:[%s2726 + $0x11] sm:$0xf] %vm2727, %v2719
        %2731 = vst.msk [vmem:[%s2726 + $0x19] sm:$0xf] %vm2727, %v2723
        %v2732 = vld [vmem:[#allocation3] sm:$0x3f]
        %v2733 = vld [vmem:[#allocation3 + $0x8] sm:$0x3f]
        %v2734 = vld [vmem:[#allocation3 + $0x10] sm:$0x3f]
        %v2735 = vld [vmem:[#allocation3 + $0x18] sm:$0x3f]
        %v2736 = vld [vmem:[#allocation3 + $0x20] sm:$0x3f]
        %v2737 = vld [vmem:[#allocation3 + $0x28] sm:$0x3f]
        %v2744 = vcombine.high %v2732, %v2732
        %v2746 = vunpack.c.l.s4 1983009808
        %v2747 = vunpack.c.0.s8 %v2746
        %v2748 = vlaneseq
        %v2749 = vshrl.u32 %v2748, 7
        %v2750 = vsub.s32 %v2747, %v2749
        %v2751 = vrot.slane %v2732, %v2750
        %v2753 = vunpack.c.l.s4 1983009808
        %v2754 = vunpack.c.0.s8 %v2753
        %v2755 = vlaneseq
        %v2756 = vshrl.u32 %v2755, 7
        %v2757 = vsub.s32 %v2754, %v2756
        %v2758 = vrot.slane %v2744, %v2757
        %v2759 = vcombine.high %v2751, %v2751
        %v2760 = vcombine.high %v2733, %v2733
        %v2762 = vunpack.c.l.s4 1983009808
        %v2763 = vunpack.c.0.s8 %v2762
        %v2764 = vlaneseq
        %v2765 = vshrl.u32 %v2764, 7
        %v2766 = vsub.s32 %v2763, %v2765
        %v2767 = vrot.slane %v2733, %v2766
        %v2769 = vunpack.c.l.s4 1983009808
        %v2770 = vunpack.c.0.s8 %v2769
        %v2771 = vlaneseq
        %v2772 = vshrl.u32 %v2771, 7
        %v2773 = vsub.s32 %v2770, %v2772
        %v2774 = vrot.slane %v2760, %v2773
        %v2775 = vcombine.high %v2767, %v2767
        %v2776 = vcombine.high %v2734, %v2734
        %v2778 = vunpack.c.l.s4 1983009808
        %v2779 = vunpack.c.0.s8 %v2778
        %v2780 = vlaneseq
        %v2781 = vshrl.u32 %v2780, 7
        %v2782 = vsub.s32 %v2779, %v2781
        %v2783 = vrot.slane %v2734, %v2782
        %v2785 = vunpack.c.l.s4 1983009808
        %v2786 = vunpack.c.0.s8 %v2785
        %v2787 = vlaneseq
        %v2788 = vshrl.u32 %v2787, 7
        %v2789 = vsub.s32 %v2786, %v2788
        %v2790 = vrot.slane %v2776, %v2789
        %v2791 = vcombine.high %v2783, %v2783
        %v2792 = vcombine.high %v2735, %v2735
        %v2794 = vunpack.c.l.s4 1983009808
        %v2795 = vunpack.c.0.s8 %v2794
        %v2796 = vlaneseq
        %v2797 = vshrl.u32 %v2796, 7
        %v2798 = vsub.s32 %v2795, %v2797
        %v2799 = vrot.slane %v2735, %v2798
        %v2801 = vunpack.c.l.s4 1983009808
        %v2802 = vunpack.c.0.s8 %v2801
        %v2803 = vlaneseq
        %v2804 = vshrl.u32 %v2803, 7
        %v2805 = vsub.s32 %v2802, %v2804
        %v2806 = vrot.slane %v2792, %v2805
        %v2807 = vcombine.high %v2799, %v2799
        %v2808 = vcombine.high %v2736, %v2736
        %v2810 = vunpack.c.l.s4 1983009808
        %v2811 = vunpack.c.0.s8 %v2810
        %v2812 = vlaneseq
        %v2813 = vshrl.u32 %v2812, 7
        %v2814 = vsub.s32 %v2811, %v2813
        %v2815 = vrot.slane %v2736, %v2814
        %v2817 = vunpack.c.l.s4 1983009808
        %v2818 = vunpack.c.0.s8 %v2817
        %v2819 = vlaneseq
        %v2820 = vshrl.u32 %v2819, 7
        %v2821 = vsub.s32 %v2818, %v2820
        %v2822 = vrot.slane %v2808, %v2821
        %v2823 = vcombine.high %v2815, %v2815
        %v2824 = vcombine.high %v2737, %v2737
        %v2826 = vunpack.c.l.s4 1983009808
        %v2827 = vunpack.c.0.s8 %v2826
        %v2828 = vlaneseq
        %v2829 = vshrl.u32 %v2828, 7
        %v2830 = vsub.s32 %v2827, %v2829
        %v2831 = vrot.slane %v2737, %v2830
        %v2833 = vunpack.c.l.s4 1983009808
        %v2834 = vunpack.c.0.s8 %v2833
        %v2835 = vlaneseq
        %v2836 = vshrl.u32 %v2835, 7
        %v2837 = vsub.s32 %v2834, %v2836
        %v2838 = vrot.slane %v2824, %v2837
        %v2839 = vcombine.high %v2831, %v2831
        %v2840 = vlaneseq
        %v2841 = vshrl.u32 %v2840, 7
        %v2842 = vsub.s32 0, %v2841
        %v2843 = vrot.slane %v2751, %v2842
        %v2844 = vlaneseq
        %v2845 = vshrl.u32 %v2844, 7
        %v2846 = vsub.s32 0, %v2845
        %v2847 = vrot.slane %v2759, %v2846
        %v2848 = vlaneseq
        %v2849 = vshrl.u32 %v2848, 7
        %v2850 = vsub.s32 0, %v2849
        %v2851 = vrot.slane %v2783, %v2850
        %v2852 = vlaneseq
        %v2853 = vshrl.u32 %v2852, 7
        %v2854 = vsub.s32 0, %v2853
        %v2855 = vrot.slane %v2791, %v2854
        %v2856 = vsel %vm1878, %v2847, %v2843
        %v2857 = vsel %vm1878, %v2855, %v2851
        %v2860 = vlaneseq
        %v2861 = vshrl.u32 %v2860, 7
        %v2862 = vsub.s32 1, %v2861
        %v2863 = vrot.slane %v2751, %v2862
        %v2864 = vlaneseq
        %v2865 = vshrl.u32 %v2864, 7
        %v2866 = vsub.s32 1, %v2865
        %v2867 = vrot.slane %v2759, %v2866
        %v2868 = vlaneseq
        %v2869 = vshrl.u32 %v2868, 7
        %v2870 = vsub.s32 1, %v2869
        %v2871 = vrot.slane %v2783, %v2870
        %v2872 = vlaneseq
        %v2873 = vshrl.u32 %v2872, 7
        %v2874 = vsub.s32 1, %v2873
        %v2875 = vrot.slane %v2791, %v2874
        %v2876 = vsel %vm1878, %v2867, %v2863
        %v2877 = vsel %vm1878, %v2875, %v2871
        %2878 = vrot.lane.b32.xlu0 %v2876, 16
        %v2879 = vpop.permute.xlu0 %2878
        %2880 = vrot.lane.b32.xlu0 %v2877, 16
        %v2881 = vpop.permute.xlu0 %2880
        %v2884 = vlaneseq
        %v2885 = vshrl.u32 %v2884, 7
        %v2886 = vsub.s32 0, %v2885
        %v2887 = vrot.slane %v2758, %v2886
        %v2888 = vlaneseq
        %v2889 = vshrl.u32 %v2888, 7
        %v2890 = vsub.s32 0, %v2889
        %v2891 = vrot.slane %v2790, %v2890
        %v2892 = vsel %vm1878, %v2887, %v2847
        %v2893 = vsel %vm1878, %v2891, %v2855
        %2894 = vrot.lane.b32.xlu0 %v2892, 32
        %v2895 = vpop.permute.xlu0 %2894
        %2896 = vrot.lane.b32.xlu0 %v2893, 32
        %v2897 = vpop.permute.xlu0 %2896
        %v2900 = vlaneseq
        %v2901 = vshrl.u32 %v2900, 7
        %v2902 = vsub.s32 1, %v2901
        %v2903 = vrot.slane %v2758, %v2902
        %v2904 = vlaneseq
        %v2905 = vshrl.u32 %v2904, 7
        %v2906 = vsub.s32 1, %v2905
        %v2907 = vrot.slane %v2790, %v2906
        %v2908 = vsel %vm1878, %v2903, %v2867
        %v2909 = vsel %vm1878, %v2907, %v2875
        %2910 = vrot.lane.b32.xlu0 %v2908, 48
        %v2911 = vpop.permute.xlu0 %2910
        %2912 = vrot.lane.b32.xlu0 %v2909, 48
        %v2913 = vpop.permute.xlu0 %2912
        %v2916 = vlaneseq
        %v2917 = vshrl.u32 %v2916, 7
        %v2918 = vsub.s32 0, %v2917
        %v2919 = vrot.slane %v2767, %v2918
        %v2920 = vlaneseq
        %v2921 = vshrl.u32 %v2920, 7
        %v2922 = vsub.s32 0, %v2921
        %v2923 = vrot.slane %v2775, %v2922
        %v2924 = vlaneseq
        %v2925 = vshrl.u32 %v2924, 7
        %v2926 = vsub.s32 0, %v2925
        %v2927 = vrot.slane %v2799, %v2926
        %v2928 = vlaneseq
        %v2929 = vshrl.u32 %v2928, 7
        %v2930 = vsub.s32 0, %v2929
        %v2931 = vrot.slane %v2807, %v2930
        %v2932 = vsel %vm1878, %v2923, %v2919
        %v2933 = vsel %vm1878, %v2931, %v2927
        %2934 = vrot.lane.b32.xlu0 %v2932, 64
        %v2935 = vpop.permute.xlu0 %2934
        %2936 = vrot.lane.b32.xlu0 %v2933, 64
        %v2937 = vpop.permute.xlu0 %2936
        %v2940 = vlaneseq
        %v2941 = vshrl.u32 %v2940, 7
        %v2942 = vsub.s32 1, %v2941
        %v2943 = vrot.slane %v2767, %v2942
        %v2944 = vlaneseq
        %v2945 = vshrl.u32 %v2944, 7
        %v2946 = vsub.s32 1, %v2945
        %v2947 = vrot.slane %v2775, %v2946
        %v2948 = vlaneseq
        %v2949 = vshrl.u32 %v2948, 7
        %v2950 = vsub.s32 1, %v2949
        %v2951 = vrot.slane %v2799, %v2950
        %v2952 = vlaneseq
        %v2953 = vshrl.u32 %v2952, 7
        %v2954 = vsub.s32 1, %v2953
        %v2955 = vrot.slane %v2807, %v2954
        %v2956 = vsel %vm1878, %v2947, %v2943
        %v2957 = vsel %vm1878, %v2955, %v2951
        %2958 = vrot.lane.b32.xlu0 %v2956, 80
        %v2959 = vpop.permute.xlu0 %2958
        %2960 = vrot.lane.b32.xlu0 %v2957, 80
        %v2961 = vpop.permute.xlu0 %2960
        %v2964 = vlaneseq
        %v2965 = vshrl.u32 %v2964, 7
        %v2966 = vsub.s32 0, %v2965
        %v2967 = vrot.slane %v2774, %v2966
        %v2968 = vlaneseq
        %v2969 = vshrl.u32 %v2968, 7
        %v2970 = vsub.s32 0, %v2969
        %v2971 = vrot.slane %v2806, %v2970
        %v2972 = vsel %vm1878, %v2967, %v2923
        %v2973 = vsel %vm1878, %v2971, %v2931
        %2974 = vrot.lane.b32.xlu0 %v2972, 96
        %v2975 = vpop.permute.xlu0 %2974
        %2976 = vrot.lane.b32.xlu0 %v2973, 96
        %v2977 = vpop.permute.xlu0 %2976
        %v2980 = vlaneseq
        %v2981 = vshrl.u32 %v2980, 7
        %v2982 = vsub.s32 1, %v2981
        %v2983 = vrot.slane %v2774, %v2982
        %v2984 = vlaneseq
        %v2985 = vshrl.u32 %v2984, 7
        %v2986 = vsub.s32 1, %v2985
        %v2987 = vrot.slane %v2806, %v2986
        %v2988 = vsel %vm1878, %v2983, %v2947
        %v2989 = vsel %vm1878, %v2987, %v2955
        %2990 = vrot.lane.b32.xlu0 %v2988, 112
        %v2991 = vpop.permute.xlu0 %2990
        %2992 = vrot.lane.b32.xlu0 %v2989, 112
        %v2993 = vpop.permute.xlu0 %2992
        %v2996 = vlaneseq
        %v2997 = vshrl.u32 %v2996, 7
        %v2998 = vsub.s32 0, %v2997
        %v2999 = vrot.slane %v2815, %v2998
        %v3000 = vlaneseq
        %v3001 = vshrl.u32 %v3000, 7
        %v3002 = vsub.s32 0, %v3001
        %v3003 = vrot.slane %v2823, %v3002
        %v3004 = vsel %vm1878, %v3003, %v2999
        %v3006 = vlaneseq
        %v3007 = vshrl.u32 %v3006, 7
        %v3008 = vsub.s32 1, %v3007
        %v3009 = vrot.slane %v2815, %v3008
        %v3010 = vlaneseq
        %v3011 = vshrl.u32 %v3010, 7
        %v3012 = vsub.s32 1, %v3011
        %v3013 = vrot.slane %v2823, %v3012
        %v3014 = vsel %vm1878, %v3013, %v3009
        %3015 = vrot.lane.b32.xlu0 %v3014, 16
        %v3016 = vpop.permute.xlu0 %3015
        %v3018 = vlaneseq
        %v3019 = vshrl.u32 %v3018, 7
        %v3020 = vsub.s32 0, %v3019
        %v3021 = vrot.slane %v2822, %v3020
        %v3022 = vsel %vm1878, %v3021, %v3003
        %3023 = vrot.lane.b32.xlu0 %v3022, 32
        %v3024 = vpop.permute.xlu0 %3023
        %v3026 = vlaneseq
        %v3027 = vshrl.u32 %v3026, 7
        %v3028 = vsub.s32 1, %v3027
        %v3029 = vrot.slane %v2822, %v3028
        %v3030 = vsel %vm1878, %v3029, %v3013
        %3031 = vrot.lane.b32.xlu0 %v3030, 48
        %v3032 = vpop.permute.xlu0 %3031
        %v3034 = vlaneseq
        %v3035 = vshrl.u32 %v3034, 7
        %v3036 = vsub.s32 0, %v3035
        %v3037 = vrot.slane %v2831, %v3036
        %v3038 = vlaneseq
        %v3039 = vshrl.u32 %v3038, 7
        %v3040 = vsub.s32 0, %v3039
        %v3041 = vrot.slane %v2839, %v3040
        %v3042 = vsel %vm1878, %v3041, %v3037
        %3043 = vrot.lane.b32.xlu0 %v3042, 64
        %v3044 = vpop.permute.xlu0 %3043
        %v3046 = vlaneseq
        %v3047 = vshrl.u32 %v3046, 7
        %v3048 = vsub.s32 1, %v3047
        %v3049 = vrot.slane %v2831, %v3048
        %v3050 = vlaneseq
        %v3051 = vshrl.u32 %v3050, 7
        %v3052 = vsub.s32 1, %v3051
        %v3053 = vrot.slane %v2839, %v3052
        %v3054 = vsel %vm1878, %v3053, %v3049
        %3055 = vrot.lane.b32.xlu0 %v3054, 80
        %v3056 = vpop.permute.xlu0 %3055
        %v3058 = vlaneseq
        %v3059 = vshrl.u32 %v3058, 7
        %v3060 = vsub.s32 0, %v3059
        %v3061 = vrot.slane %v2838, %v3060
        %v3062 = vsel %vm1878, %v3061, %v3041
        %3063 = vrot.lane.b32.xlu0 %v3062, 96
        %v3064 = vpop.permute.xlu0 %3063
        %v3066 = vlaneseq
        %v3067 = vshrl.u32 %v3066, 7
        %v3068 = vsub.s32 1, %v3067
        %v3069 = vrot.slane %v2838, %v3068
        %v3070 = vsel %vm1878, %v3069, %v3053
        %3071 = vrot.lane.b32.xlu0 %v3070, 112
        %v3072 = vpop.permute.xlu0 %3071
        %v3074 = vsel %vm2525, %v2856, %v2879
        %v3075 = vsel %vm2525, %v2857, %v2881
        %v3076 = vsel %vm2535, %v3074, %v2895
        %v3077 = vsel %vm2535, %v3075, %v2897
        %v3078 = vsel %vm2545, %v3076, %v2911
        %v3079 = vsel %vm2545, %v3077, %v2913
        %v3080 = vsel %vm2555, %v3078, %v2935
        %v3081 = vsel %vm2555, %v3079, %v2937
        %v3082 = vsel %vm2565, %v3080, %v2959
        %v3083 = vsel %vm2565, %v3081, %v2961
        %v3084 = vsel %vm2575, %v3082, %v2975
        %v3085 = vsel %vm2575, %v3083, %v2977
        %v3086 = vsel %vm2585, %v3084, %v2991
        %v3087 = vsel %vm2585, %v3085, %v2993
        %v3088 = vsel %vm2525, %v3004, %v3016
        %v3089 = vsel %vm2535, %v3088, %v3024
        %v3090 = vsel %vm2545, %v3089, %v3032
        %v3091 = vsel %vm2555, %v3090, %v3044
        %v3092 = vsel %vm2565, %v3091, %v3056
        %v3093 = vsel %vm2575, %v3092, %v3064
        %v3094 = vsel %vm2585, %v3093, %v3072
        %v3098 = vcombine.low %v3086, %v3087
        %v3100 = vunpack.c.l.s4 1983009808
        %v3101 = vunpack.c.0.s8 %v3100
        %v3102 = vlaneseq
        %v3103 = vshrl.u32 %v3102, 7
        %v3104 = vsub.s32 %v3101, %v3103
        %v3105 = vrot.slane %v3098, %v3104
        %v3106 = vcombine.low %v3087, %v3094
        %v3108 = vunpack.c.l.s4 1983009808
        %v3109 = vunpack.c.0.s8 %v3108
        %v3110 = vlaneseq
        %v3111 = vshrl.u32 %v3110, 7
        %v3112 = vsub.s32 %v3109, %v3111
        %v3113 = vrot.slane %v3106, %v3112
        %v3114 = vcombine.low %v3105, %v3113
        %v3116 = vunpack.c.l.s4 1983009808
        %v3117 = vunpack.c.0.s8 %v3116
        %v3118 = vlaneseq
        %v3119 = vshrl.u32 %v3118, 7
        %v3120 = vsub.s32 %v3117, %v3119
        %v3121 = vrot.slane %v3114, %v3120
        %v3122 = vcombine.high %v3121, %v3121
        %v3125 = vpack.c.bf16 %v3121, %v3121
        %v3126 = vpack.c.bf16 %v3122, %v3122
        %v3127 = vld [vmem:[%s5] sm:$0xf]
        %v3128 = vld [vmem:[%s5 + $0x4] sm:$0xf]
        %v3129 = vld [vmem:[%s5 + $0x8] sm:$0xf]
        %v3130 = vld [vmem:[%s5 + $0xc] sm:$0xf]
        %v3131 = vld [vmem:[%s5 + $0x10] sm:$0xf]
        %v3132 = vld [vmem:[%s5 + $0x14] sm:$0xf]
        %v3133 = vld [vmem:[%s5 + $0x18] sm:$0xf]
        %v3134 = vld [vmem:[%s5 + $0x1c] sm:$0xf]
        %v3135 = vld [vmem:[%s5 + $0x20] sm:$0xf]
        %v3136 = vld [vmem:[%s5 + $0x24] sm:$0xf]
        %v3137 = vld [vmem:[%s5 + $0x28] sm:$0xf]
        %v3138 = vld [vmem:[%s5 + $0x2c] sm:$0xf]
        %v3139 = vld [vmem:[%s5 + $0x30] sm:$0xf]
        %v3140 = vld [vmem:[%s5 + $0x34] sm:$0xf]
        %v3141 = vld [vmem:[%s5 + $0x38] sm:$0xf]
        %v3142 = vld [vmem:[%s5 + $0x3c] sm:$0xf]
        %v3143 = vld [vmem:[%s5 + $0x40] sm:$0xf]
        %v3144 = vld [vmem:[%s5 + $0x44] sm:$0xf]
        %v3145 = vld [vmem:[%s5 + $0x48] sm:$0xf]
        %v3146 = vld [vmem:[%s5 + $0x4c] sm:$0xf]
        %v3147 = vld [vmem:[%s5 + $0x50] sm:$0xf]
        %v3148 = vld [vmem:[%s5 + $0x54] sm:$0xf]
        %v3149 = vld [vmem:[%s5 + $0x58] sm:$0xf]
        %v3150 = vld [vmem:[%s5 + $0x5c] sm:$0xf]
        %v3151 = vld [vmem:[%s5 + $0x60] sm:$0xf]
        %v3152 = vld [vmem:[%s5 + $0x64] sm:$0xf]
        %v3153 = vld [vmem:[%s5 + $0x68] sm:$0xf]
        %v3154 = vld [vmem:[%s5 + $0x6c] sm:$0xf]
        %v3155 = vld [vmem:[%s5 + $0x70] sm:$0xf]
        %v3156 = vld [vmem:[%s5 + $0x74] sm:$0xf]
        %v3157 = vld [vmem:[%s5 + $0x78] sm:$0xf]
        %v3158 = vld [vmem:[%s5 + $0x7c] sm:$0xf]
        %v3159 = vld [vmem:[%s6] sm:$0x1]
        %v3161 = vlaneseq
        %v3162 = vshrl.u32 %v3161, 7
        %v3163 = vsub.s32 0, %v3162
        %v3164 = vrot.slane %v3159, %v3163
        %v3198 = vunpack.c.l.b16 %v3127
        %v3199 = vunpack.c.l.b16 %v3128
        %v3200 = vunpack.c.l.b16 %v3129
        %v3201 = vunpack.c.l.b16 %v3130
        %v3202 = vunpack.c.l.b16 %v3131
        %v3203 = vunpack.c.l.b16 %v3132
        %v3204 = vunpack.c.l.b16 %v3133
        %v3205 = vunpack.c.l.b16 %v3134
        %v3206 = vunpack.c.l.b16 %v3135
        %v3207 = vunpack.c.l.b16 %v3136
        %v3208 = vunpack.c.l.b16 %v3137
        %v3209 = vunpack.c.l.b16 %v3138
        %v3210 = vunpack.c.l.b16 %v3139
        %v3211 = vunpack.c.l.b16 %v3140
        %v3212 = vunpack.c.l.b16 %v3141
        %v3213 = vunpack.c.l.b16 %v3142
        %v3214 = vunpack.c.l.b16 %v3143
        %v3215 = vunpack.c.l.b16 %v3144
        %v3216 = vunpack.c.l.b16 %v3145
        %v3217 = vunpack.c.l.b16 %v3146
        %v3218 = vunpack.c.l.b16 %v3147
        %v3219 = vunpack.c.l.b16 %v3148
        %v3220 = vunpack.c.l.b16 %v3149
        %v3221 = vunpack.c.l.b16 %v3150
        %v3222 = vunpack.c.l.b16 %v3151
        %v3223 = vunpack.c.l.b16 %v3152
        %v3224 = vunpack.c.l.b16 %v3153
        %v3225 = vunpack.c.l.b16 %v3154
        %v3226 = vunpack.c.l.b16 %v3155
        %v3227 = vunpack.c.l.b16 %v3156
        %v3228 = vunpack.c.l.b16 %v3157
        %v3229 = vunpack.c.l.b16 %v3158
        %v3230 = vpack.c.b16 %v3199, %v3198
        %v3231 = vpack.c.b16 %v3201, %v3200
        %v3232 = vpack.c.b16 %v3203, %v3202
        %v3233 = vpack.c.b16 %v3205, %v3204
        %v3234 = vpack.c.b16 %v3207, %v3206
        %v3235 = vpack.c.b16 %v3209, %v3208
        %v3236 = vpack.c.b16 %v3211, %v3210
        %v3237 = vpack.c.b16 %v3213, %v3212
        %v3238 = vpack.c.b16 %v3215, %v3214
        %v3239 = vpack.c.b16 %v3217, %v3216
        %v3240 = vpack.c.b16 %v3219, %v3218
        %v3241 = vpack.c.b16 %v3221, %v3220
        %v3242 = vpack.c.b16 %v3223, %v3222
        %v3243 = vpack.c.b16 %v3225, %v3224
        %v3244 = vpack.c.b16 %v3227, %v3226
        %v3245 = vpack.c.b16 %v3229, %v3228
        %3262 = vmatprep.subr.bf16.mxu0 0
        %3263 = vmatpush1.bf16.msra.mxu0 %v3237
        %3264 = vmatprep.subr.bf16.mxu0 0
        %3265 = vmatpush1.bf16.msra.mxu0 %v3236
        %3266 = vmatprep.subr.bf16.mxu0 0
        %3267 = vmatpush1.bf16.msra.mxu0 %v3235
        %3268 = vmatprep.subr.bf16.mxu0 0
        %3269 = vmatpush1.bf16.msra.mxu0 %v3234
        %3270 = vmatprep.subr.bf16.mxu0 0
        %3271 = vmatpush1.bf16.msra.mxu0 %v3233
        %3272 = vmatprep.subr.bf16.mxu0 0
        %3273 = vmatpush1.bf16.msra.mxu0 %v3232
        %3274 = vmatprep.subr.bf16.mxu0 0
        %3275 = vmatpush1.bf16.msra.mxu0 %v3231
        %3276 = vmatprep.subr.bf16.mxu0 0
        %3277 = vmatpush1.bf16.msra.mxu0 %v3230
        %3278 = vmatprep.subr.bf16.mxu0 0
        %3279 = vmatpush2.bf16.msra.mxu0 %v3245
        %3280 = vmatprep.subr.bf16.mxu0 0
        %3281 = vmatpush2.bf16.msra.mxu0 %v3244
        %3282 = vmatprep.subr.bf16.mxu0 0
        %3283 = vmatpush2.bf16.msra.mxu0 %v3243
        %3284 = vmatprep.subr.bf16.mxu0 0
        %3285 = vmatpush2.bf16.msra.mxu0 %v3242
        %3286 = vmatprep.subr.bf16.mxu0 0
        %3287 = vmatpush2.bf16.msra.mxu0 %v3241
        %3288 = vmatprep.subr.bf16.mxu0 0
        %3289 = vmatpush2.bf16.msra.mxu0 %v3240
        %3290 = vmatprep.subr.bf16.mxu0 0
        %3291 = vmatpush2.bf16.msra.mxu0 %v3239
        %3292 = vmatprep.subr.bf16.mxu0 0
        %3293 = vmatpush2.bf16.msra.mxu0 %v3238
        %3294 = vmatprep.mubr.bf16.mxu0 %v3126
        %3295 = vmatmul.mubr.bf16.gmra.mxu0 %v3125
        %v3296 = vpop.f32.mrf.mxu0
        %v3297 = vadd.f32 %v3164, %v3296
        %v3298 = vpop.f32.mrf.mxu0
        %v3299 = vpop.f32.mrf.mxu0
        %v3300 = vpop.f32.mrf.mxu0
        %3301 = vdwg.mxu0
        %v3302 = vmul.f32 %v3297, 0.01
        %v3303 = vmax.f32 %v3297, %v3302
        %v3306 = vunpack.c.l.s4 1983009808
        %v3307 = vunpack.c.0.s8 %v3306
        %v3308 = vlaneseq
        %v3309 = vshrl.u32 %v3308, 7
        %v3310 = vsub.s32 %v3307, %v3309
        %v3311 = vrot.slane %v3303, %v3310
        %v3312 = vcombine.high %v3311, %v3311
        %s3315 = scalar_lea.vmem [#allocation4], 4
        %vm3316 = vcmask 254976
        %3317 = vst.msk [vmem:[%s3315 + $0x1] sm:$0x3] %vm3316, %v3311
        %3318 = vst.msk [vmem:[%s3315 + $0x5] sm:$0x3] %vm3316, %v3312
        %v3319 = vld [vmem:[#allocation4] sm:$0xf]
        %v3320 = vld [vmem:[#allocation4 + $0x4] sm:$0xf]
        %v3321 = vld [vmem:[#allocation4 + $0x8] sm:$0xf]
        %v3322 = vld [vmem:[#allocation4 + $0xc] sm:$0xf]
        %v3323 = vld [vmem:[%s7] sm:$0xff]
        %v3324 = vld [vmem:[%s7 + $0x8] sm:$0x1]
        %v3325 = vlaneseq
        %v3326 = vshrl.u32 %v3325, 7
        %v3327 = vsub.s32 0, %v3326
        %v3328 = vrot.slane %v3323, %v3327
        %v3329 = vmul.f32 %v3319, %v3328
        %v3330 = vmul.f32 %v3320, %v3328
        %v3331 = vadd.f32 %v3329, 0.0
        %v3332 = vadd.f32 %v3330, 0.0
        %v3333 = vlaneseq
        %v3334 = vshrl.u32 %v3333, 7
        %v3335 = vsub.s32 1, %v3334
        %v3336 = vrot.slane %v3323, %v3335
        %v3337 = vmul.f32 %v3319, %v3336
        %v3338 = vmul.f32 %v3320, %v3336
        %v3341 = vrot.slane %v3337, 1
        %v3342 = vrot.slane %v3338, 1
        %v3345 = vadd.f32 %v3331, %v3341
        %v3346 = vadd.f32 %v3332, %v3342
        %v3347 = vlaneseq
        %v3348 = vshrl.u32 %v3347, 7
        %v3349 = vsub.s32 2, %v3348
        %v3350 = vrot.slane %v3323, %v3349
        %v3351 = vmul.f32 %v3319, %v3350
        %v3352 = vmul.f32 %v3320, %v3350
        %v3355 = vrot.slane %v3351, 2
        %v3356 = vrot.slane %v3352, 2
        %v3359 = vadd.f32 %v3345, %v3355
        %v3360 = vadd.f32 %v3346, %v3356
        %v3361 = vlaneseq
        %v3362 = vshrl.u32 %v3361, 7
        %v3363 = vsub.s32 3, %v3362
        %v3364 = vrot.slane %v3323, %v3363
        %v3365 = vmul.f32 %v3320, %v3364
        %v3366 = vmul.f32 %v3321, %v3364
        %v3367 = vadd.f32 %v3359, %v3365
        %v3368 = vadd.f32 %v3360, %v3366
        %v3369 = vlaneseq
        %v3370 = vshrl.u32 %v3369, 7
        %v3371 = vsub.s32 4, %v3370
        %v3372 = vrot.slane %v3323, %v3371
        %v3373 = vmul.f32 %v3320, %v3372
        %v3374 = vmul.f32 %v3321, %v3372
        %v3377 = vrot.slane %v3373, 1
        %v3378 = vrot.slane %v3374, 1
        %v3381 = vadd.f32 %v3367, %v3377
        %v3382 = vadd.f32 %v3368, %v3378
        %v3383 = vlaneseq
        %v3384 = vshrl.u32 %v3383, 7
        %v3385 = vsub.s32 5, %v3384
        %v3386 = vrot.slane %v3323, %v3385
        %v3387 = vmul.f32 %v3320, %v3386
        %v3388 = vmul.f32 %v3321, %v3386
        %v3391 = vrot.slane %v3387, 2
        %v3392 = vrot.slane %v3388, 2
        %v3395 = vadd.f32 %v3381, %v3391
        %v3396 = vadd.f32 %v3382, %v3392
        %v3397 = vlaneseq
        %v3398 = vshrl.u32 %v3397, 7
        %v3399 = vsub.s32 6, %v3398
        %v3400 = vrot.slane %v3323, %v3399
        %v3401 = vmul.f32 %v3321, %v3400
        %v3402 = vmul.f32 %v3322, %v3400
        %v3403 = vadd.f32 %v3395, %v3401
        %v3404 = vadd.f32 %v3396, %v3402
        %v3405 = vlaneseq
        %v3406 = vshrl.u32 %v3405, 7
        %v3407 = vsub.s32 7, %v3406
        %v3408 = vrot.slane %v3323, %v3407
        %v3409 = vmul.f32 %v3321, %v3408
        %v3410 = vmul.f32 %v3322, %v3408
        %v3413 = vrot.slane %v3409, 1
        %v3414 = vrot.slane %v3410, 1
        %v3417 = vadd.f32 %v3403, %v3413
        %v3418 = vadd.f32 %v3404, %v3414
        %v3419 = vlaneseq
        %v3420 = vshrl.u32 %v3419, 7
        %v3421 = vsub.s32 0, %v3420
        %v3422 = vrot.slane %v3324, %v3421
        %v3423 = vmul.f32 %v3321, %v3422
        %v3424 = vmul.f32 %v3322, %v3422
        %v3427 = vrot.slane %v3423, 2
        %v3428 = vrot.slane %v3424, 2
        %v3431 = vadd.f32 %v3417, %v3427
        %v3432 = vadd.f32 %v3418, %v3428
        %v3433 = vsel %vm3316, %v3431, 0.0
        %3434 = vadd.xlane.f32.xlu0 %v3433
        %v3435 = vpop.xlane.xlu0 %3434
        %v3436 = vsel %vm3316, %v3432, 0.0
        %3437 = vadd.xlane.f32.xlu0 %v3436
        %v3438 = vpop.xlane.xlu0 %3437
        %v3441 = vlaneseq
        %v3442 = vand.u32 %v3441, 127
        %v3443 = vlaneseq
        %v3444 = vshrl.u32 %v3443, 7
        %v3445 = vsub.s32 %v3442, %v3444
        %v3446 = vrot.slane %v3435, %v3445
        %v3447 = vlaneseq
        %v3448 = vshrl.u32 %v3447, 7
        %v3449 = vsub.s32 %v3442, %v3448
        %v3450 = vrot.slane %v3438, %v3449
        %v3451 = vsel %vm1878, %v3450, %v3446
        %vm3453 = vcmask 9216
        %3454 = vst.msk [vmem:[%s298] sm:$0x3] %vm3453, %v3451
        %s3455 = sand.u32 %s203, 1
        %s3456 = scalar_lea.sflag [#allocation6], %s3455
        %s3457 = sand.u32 %s203, 1
        %s3458 = smul.addr %s3457, 2
        %s3459 = scalar_lea.vmem [#allocation5], %s3458
        // Predicated region
        $region53: #{discriminator_forward.1} parent=51 // pred_check
          %p3460 = pneg %p213
        $region54: #{discriminator_forward.1} parent=51 // pred_check_branch
          %3462 = sbr.rel (%p3460) target = $region56
        $region55: #{discriminator_forward.1} parent=51 // pred_region
          %s3464 = ssub.s32 32, 32
          %3465 = vsyncadd %s3456, %s3464
          %s3466 = smul.addr %s22, 32
          %s3467 = scalar_lea.hbm %s8, %s3466
          %s3469 = sshll.u32 %s3459, 4
          %s3470 = int_to_ptr.vmem [resolvable:$true] %s3469
          %3472 = dma.vmem_to_hbm [thread:$0]  %s3470, 32, %s3467, %s3456
        $region56: #{discriminator_forward.1} parent=51 // pred_fallthru
          _
      $region52: #{discriminator_forward.1} parent=5 // pred_fallthru
        _
      %p3473 = scmp.le.s32.totalorder 2, %s17
      // Predicated region
      $region57: #{discriminator_forward.1} parent=5 // pred_check
        %p3474 = pneg %p3473
      $region58: #{discriminator_forward.1} parent=5 // pred_check_branch
        %3476 = sbr.rel (%p3474) target = $region60
      $region59: #{discriminator_forward.1} parent=5 // pred_region
        %s3477 = ssub.s32 %s17, 2
        // Predicated region
        $region61: #{discriminator_forward.1} parent=59 // pred_check
          %p3478 = pneg %p219
        $region62: #{discriminator_forward.1} parent=59 // pred_check_branch
          %3480 = sbr.rel (%p3478) target = $region64
        $region63: #{discriminator_forward.1} parent=59 // pred_region
          %s3481 = sand.u32 %s204, 1
          %s3482 = scalar_lea.sflag [#allocation6], %s3481
          %s3483 = sand.u32 %s204, 1
          %s3484 = smul.addr %s3483, 2
          %s3485 = scalar_lea.vmem [#allocation5], %s3484
          %3486 = dma.done %s3482, 32
        $region64: #{discriminator_forward.1} parent=59 // pred_fallthru
          _
      $region60: #{discriminator_forward.1} parent=5 // pred_fallthru
        _
    $region6: #{discriminator_forward.1} parent=1 // loop_footer
      %s21 = sadd.s32 1, %s17
    $region7: #{discriminator_forward.1} parent=1 // loop_footer_branch
      %16 = sbr.rel target = $region3
    $region8: #{discriminator_forward.1} parent=1 // loop_exit
      _
    %3487 = vsyncpa [#allocation6], 1
    %s3488 = scalar_lea.sflag [#allocation6], 1
    %3489 = vsyncpa %s3488, 1

</llo_original>
